<compile_context>
chip_gen: v5e
topology: v5e:2x2
jax: 0.10.0
libtpu: 0.0.40
codegen_flags: <defaults>
</compile_context>

<pallas_src>
import jax
import jax.numpy as jnp
from jax.experimental import pallas as pl
from jax.experimental.pallas import tpu as pltpu

_BN_EPS = 1e-5
_CP = 128          # lane-dense channel padding (multiple of 128 lanes)


# ----------------------------- fused BasicBlock kernel -----------------------------

def _make_block_kernel(stride, equal, H, W, Ho, Wo, Hp, Wp, P):
    """Fused BasicBlock kernel specialised for one layer's static config.

    Inputs per grid step (one image): P phase blocks of the spatially padded,
    channel-padded input, folded BN params, tap-major conv weights (bf16), and
    (when in_planes != out_planes) the 1x1 shortcut weight.
    """

    def tap(dh, dw):
        # (phase index, row offset, col offset) for kernel tap (dh, dw).
        return (dh % stride) * stride + (dw % stride), dh // stride, dw // stride

    def kernel(x_ref, sc1_ref, sh1_ref, w1_ref, sc2_ref, sh2_ref, w2_ref, *rest):
        if equal:
            out_ref, a_ref, h1p_ref = rest
        else:
            ws_ref, out_ref, a_ref, h1p_ref = rest

        # ---- BN1 + ReLU prologue (halo masked), staged once in VMEM --------
        sc1 = sc1_ref[...]                       # (1, CP)
        sh1 = sh1_ref[...]
        for p in range(P):
            pr, pc = p // stride, p % stride
            xb = x_ref[p]                        # (Hp, Wp, CP) f32
            ii = jax.lax.broadcasted_iota(jnp.int32, (Hp, Wp, _CP), 0)
            jj = jax.lax.broadcasted_iota(jnp.int32, (Hp, Wp, _CP), 1)
            r = stride * ii + pr                 # row in the spatially padded frame
            c = stride * jj + pc
            valid = (r >= 1) & (r <= H) & (c >= 1) & (c <= W)
            a = jnp.maximum(xb * sc1 + sh1, 0.0)
            a_ref[p] = jnp.where(valid, a, 0.0)  # zero the conv halo

        # ---- conv1: 9-tap MXU accumulation + fused BN2+ReLU epilogue -------
        acc = jnp.zeros((Ho * Wo, _CP), jnp.float32)
        for dh in range(3):
            for dw in range(3):
                pidx, ro, co = tap(dh, dw)
                patch = a_ref[pidx, ro:ro + Ho, co:co + Wo, :]
                patch = patch.reshape(Ho * Wo, _CP).astype(jnp.bfloat16)
                acc = acc + jnp.dot(patch, w1_ref[dh * 3 + dw],
                                    preferred_element_type=jnp.float32)
        h1 = jnp.maximum(acc * sc2_ref[...] + sh2_ref[...], 0.0)

        # ---- stage h1 spatially zero-padded in VMEM for conv2 --------------
        h1p_ref[...] = jnp.zeros(h1p_ref.shape, h1p_ref.dtype)
        h1p_ref[1:Ho + 1, 1:Wo + 1, :] = h1.reshape(Ho, Wo, _CP)

        # ---- conv2: 9-tap MXU accumulation + fused residual-add epilogue ---
        acc2 = jnp.zeros((Ho * Wo, _CP), jnp.float32)
        for dh in range(3):
            for dw in range(3):
                patch = h1p_ref[dh:dh + Ho, dw:dw + Wo, :]
                patch = patch.reshape(Ho * Wo, _CP).astype(jnp.bfloat16)
                acc2 = acc2 + jnp.dot(patch, w2_ref[dh * 3 + dw],
                                      preferred_element_type=jnp.float32)
        if equal:
            # identity residual: raw (un-normalised) interior of the input
            res = x_ref[0, 1:1 + Ho, 1:1 + Wo, :].reshape(Ho * Wo, _CP)
        else:
            # 1x1 shortcut on the activated input == centre tap of `a`
            pidx, ro, co = tap(1, 1)
            a_c = a_ref[pidx, ro:ro + Ho, co:co + Wo, :]
            a_c = a_c.reshape(Ho * Wo, _CP).astype(jnp.bfloat16)
            res = jnp.dot(a_c, ws_ref[...], preferred_element_type=jnp.float32)
        out = (acc2 + res).reshape(Ho, Wo, _CP)

        # ---- store spatially padded output (zero halo) so the next layer
        #      reads it directly -----------------------------------------------
        out_ref[...] = jnp.zeros(out_ref.shape, out_ref.dtype)
        out_ref[0, 1:Ho + 1, 1:Wo + 1, :] = out

    return kernel


def basic_block_forward(x_pad, p):
    """One BasicBlock layer.

    x_pad: (N, H+2, W+2, _CP) f32, spatially zero-padded + channel-padded.
    Returns (N, Ho+2, Wo+2, _CP) f32, spatially zero-padded (ready for the
    next layer; halo values are exact zeros).
    """
    stride, equal = p["stride"], p["equal"]
    assert stride in (1, 2)
    assert not (equal and stride != 1), "identity residual requires stride 1"
    N, Hp2, Wp2, CP = x_pad.shape
    H, W = Hp2 - 2, Wp2 - 2
    Ho = (H - 1) // stride + 1
    Wo = (W - 1) // stride + 1

    if stride == 1:
        xin = x_pad                                       # (N*1, Hp, Wp, CP)
        P, Hp, Wp = 1, H + 2, W + 2
    else:
        # 2x2 phase split so all in-kernel tap reads are unit-stride slices.
        P, Hp, Wp = 4, Ho + 1, Wo + 1
        xe = jnp.pad(x_pad, ((0, 0), (0, 2 * Hp - Hp2), (0, 2 * Wp - Wp2), (0, 0)))
        phases = [xe[:, pr::2, pc::2, :] for pr in range(2) for pc in range(2)]
        xin = jnp.stack(phases, axis=1).reshape(N * P, Hp, Wp, CP)

    in_specs = [
        pl.BlockSpec((P, Hp, Wp, CP), lambda n: (n, 0, 0, 0)),      # x phases
        pl.BlockSpec((1, CP), lambda n: (0, 0)),                     # bn1 scale
        pl.BlockSpec((1, CP), lambda n: (0, 0)),                     # bn1 shift
        pl.BlockSpec((9, CP, CP), lambda n: (0, 0, 0)),              # w1 taps
        pl.BlockSpec((1, CP), lambda n: (0, 0)),                     # bn2 scale
        pl.BlockSpec((1, CP), lambda n: (0, 0)),                     # bn2 shift
        pl.BlockSpec((9, CP, CP), lambda n: (0, 0, 0)),              # w2 taps
    ]
    args = [xin, p["sc1"], p["sh1"], p["w1"], p["sc2"], p["sh2"], p["w2"]]
    if not equal:
        in_specs.append(pl.BlockSpec((CP, CP), lambda n: (0, 0)))    # shortcut w
        args.append(p["ws"])

    kernel = _make_block_kernel(stride, equal, H, W, Ho, Wo, Hp, Wp, P)
    return pl.pallas_call(
        kernel,
        out_shape=jax.ShapeDtypeStruct((N, Ho + 2, Wo + 2, CP), jnp.float32),
        grid=(N,),
        in_specs=in_specs,
        out_specs=pl.BlockSpec((1, Ho + 2, Wo + 2, CP), lambda n: (n, 0, 0, 0)),
        scratch_shapes=[pltpu.VMEM((P, Hp, Wp, CP), jnp.float32),       # a (post BN1+ReLU)
                        pltpu.VMEM((Ho + 2, Wo + 2, CP), jnp.float32)], # padded h1
        compiler_params=pltpu.CompilerParams(
            dimension_semantics=("parallel",)),
    )(*args)


def network_block_forward(x_nchw, layers, out_planes):
    """NetworkBlock forward: NCHW in, NCHW out (PyTorch semantics, eval mode)."""
    n, cin, h, w = x_nchw.shape
    x = jnp.transpose(x_nchw, (0, 2, 3, 1)).astype(jnp.float32)   # NHWC
    # one-time boundary glue: spatial halo + channel padding to 128 lanes
    x = jnp.pad(x, ((0, 0), (1, 1), (1, 1), (0, _CP - cin)))
    for p in layers:
        x = basic_block_forward(x, p)
    out = x[:, 1:-1, 1:-1, :out_planes]                            # single final crop
    return jnp.transpose(out, (0, 3, 1, 2))                        # back to NCHW


# ----------------------------- parameter preparation -----------------------------

def prep_basic_block(raw):
    """Fold eval-mode BN into scale/shift, pad channels to 128, bf16 weights."""
    cin = raw["g1"].shape[0]
    cout = raw["g2"].shape[0]
    assert cin <= _CP and cout <= _CP

    def fold_bn(g, b, m, v, c):
        sc = g * jax.lax.rsqrt(v + _BN_EPS)
        sh = b - m * sc
        pad = (0, _CP - c)
        return (jnp.pad(sc, pad).reshape(1, _CP).astype(jnp.float32),
                jnp.pad(sh, pad).reshape(1, _CP).astype(jnp.float32))

    def prep_w3(w):   # (cout, cin, 3, 3) -> (9, _CP, _CP) bf16, taps outer
        co, ci = w.shape[0], w.shape[1]
        wm = jnp.transpose(w, (2, 3, 1, 0)).reshape(9, ci, co)
        wm = jnp.pad(wm, ((0, 0), (0, _CP - ci), (0, _CP - co)))
        return wm.astype(jnp.bfloat16)

    sc1, sh1 = fold_bn(raw["g1"], raw["b1"], raw["m1"], raw["v1"], cin)
    sc2, sh2 = fold_bn(raw["g2"], raw["b2"], raw["m2"], raw["v2"], cout)
    p = {"stride": raw["stride"], "equal": raw["equal"],
         "sc1": sc1, "sh1": sh1, "sc2": sc2, "sh2": sh2,
         "w1": prep_w3(raw["w1"]), "w2": prep_w3(raw["w2"])}
    if not raw["equal"]:
        ws = raw["ws"].reshape(cout, cin).T                      # (cin, cout)
        p["ws"] = jnp.pad(ws, ((0, _CP - cin), (0, _CP - cout))).astype(jnp.bfloat16)
    return p


# ----------------------------- deterministic raw param init -----------------------------

def init_basic_block(key, cin, cout, stride):
    ks = jax.random.split(key, 11)
    equal = (cin == cout)   # exact PyTorch semantics: only compares planes
    raw = {
        "stride": stride, "equal": equal,
        "g1": 1.0 + 0.1 * jax.random.normal(ks[0], (cin,), jnp.float32),
        "b1": 0.1 * jax.random.normal(ks[1], (cin,), jnp.float32),
        "m1": 0.1 * jax.random.normal(ks[2], (cin,), jnp.float32),
        "v1": 0.5 + jnp.abs(jax.random.normal(ks[3], (cin,), jnp.float32)),
        "w1": 0.1 * jax.random.normal(ks[4], (cout, cin, 3, 3), jnp.float32),
        "g2": 1.0 + 0.1 * jax.random.normal(ks[5], (cout,), jnp.float32),
        "b2": 0.1 * jax.random.normal(ks[6], (cout,), jnp.float32),
        "m2": 0.1 * jax.random.normal(ks[7], (cout,), jnp.float32),
        "v2": 0.5 + jnp.abs(jax.random.normal(ks[8], (cout,), jnp.float32)),
        "w2": 0.1 * jax.random.normal(ks[9], (cout, cout, 3, 3), jnp.float32),
    }
    if not equal:
        raw["ws"] = 0.1 * jax.random.normal(ks[10], (cout, cin, 1, 1), jnp.float32)
    return raw


def init_network_block(key, nb_layers, in_planes, out_planes, stride):
    keys = jax.random.split(key, nb_layers)
    layers = []
    for i in range(nb_layers):
        cin = in_planes if i == 0 else out_planes
        s = stride if i == 0 else 1
        layers.append(init_basic_block(keys[i], cin, out_planes, s))
    return layers


# ----------------------------- plain-JAX reference -----------------------------

def _ref_conv(x, w, stride, pad):
    # bf16 operands + f32 accumulation, matching the kernel's MXU precision.
    return jax.lax.conv_general_dilated(
        x.astype(jnp.bfloat16),
        jnp.transpose(w, (2, 3, 1, 0)).astype(jnp.bfloat16),
        (stride, stride), [(pad, pad), (pad, pad)],
        dimension_numbers=("NHWC", "HWIO", "NHWC"),
        preferred_element_type=jnp.float32)


def ref_network_block(x_nchw, raw_layers):
    x = jnp.transpose(x_nchw, (0, 2, 3, 1)).astype(jnp.float32)
    for r in raw_layers:
        sc1 = r["g1"] * jax.lax.rsqrt(r["v1"] + _BN_EPS)
        sh1 = r["b1"] - r["m1"] * sc1
        sc2 = r["g2"] * jax.lax.rsqrt(r["v2"] + _BN_EPS)
        sh2 = r["b2"] - r["m2"] * sc2
        a = jnp.maximum(x * sc1 + sh1, 0.0)
        h = _ref_conv(a, r["w1"], r["stride"], 1)
        h = jnp.maximum(h * sc2 + sh2, 0.0)
        h = _ref_conv(h, r["w2"], 1, 1)
        res = x if r["equal"] else _ref_conv(a, r["ws"], r["stride"], 0)
        x = res + h
    return jnp.transpose(x, (0, 3, 1, 2))


# ----------------------------- main -----------------------------

if __name__ == "__main__":
    key = jax.random.PRNGKey(0)
    k_x, k_p = jax.random.split(key)

    # NetworkBlock(nb_layers=2, in_planes=4, out_planes=8, block=BasicBlock,
    #              stride=2, dropRate=0.0)
    nb_layers, in_planes, out_planes, stride = 2, 4, 8, 2
    raw_layers = init_network_block(k_p, nb_layers, in_planes, out_planes, stride)
    layers = [prep_basic_block(r) for r in raw_layers]

    # PyTorch-style NCHW input: [batch=2, channels=4, H=16, W=16]
    x = jax.random.normal(k_x, (2, 4, 16, 16), jnp.float32)

    out = jax.block_until_ready(network_block_forward(x, layers, out_planes))
    ref = jax.block_until_ready(ref_network_block(x, raw_layers))

    assert out.shape == ref.shape == (2, 8, 8, 8), out.shape
    max_err = float(jnp.max(jnp.abs(out - ref)))
    assert jnp.allclose(out, ref, atol=2e-3, rtol=2e-3), max_err

    print("KERNEL_OK")
</pallas_src>

<mosaic_0001>
module attributes {stable_mosaic.version = 11 : i64} {
  func.func @kernel(%arg0: i32, %arg1: memref<4x9x9x128xf32, #tpu.memory_space<vmem>>, %arg2: memref<1x128xf32, #tpu.memory_space<vmem>>, %arg3: memref<1x128xf32, #tpu.memory_space<vmem>>, %arg4: memref<9x128x128xbf16, #tpu.memory_space<vmem>>, %arg5: memref<1x128xf32, #tpu.memory_space<vmem>>, %arg6: memref<1x128xf32, #tpu.memory_space<vmem>>, %arg7: memref<9x128x128xbf16, #tpu.memory_space<vmem>>, %arg8: memref<128x128xbf16, #tpu.memory_space<vmem>>, %arg9: memref<1x10x10x128xf32, #tpu.memory_space<vmem>>, %arg10: memref<4x9x9x128xf32, #tpu.memory_space<vmem>>, %arg11: memref<10x10x128xf32, #tpu.memory_space<vmem>>) attributes {dimension_semantics = [#tpu.dimension_semantics<parallel>], iteration_bounds = array<i64: 2>, scalar_prefetch = 0 : i64, scratch_operands = 2 : i64, tpu.core_type = #tpu.core_type<tc>, window_params = [{transform_indices = @transform_0, window_bounds = array<i64: 4, 9, 9, 128>}, {pipeline_mode = #tpu.pipeline_mode<synchronous>, transform_indices = @transform_1, window_bounds = array<i64: 1, 128>}, {pipeline_mode = #tpu.pipeline_mode<synchronous>, transform_indices = @transform_2, window_bounds = array<i64: 1, 128>}, {pipeline_mode = #tpu.pipeline_mode<synchronous>, transform_indices = @transform_3, window_bounds = array<i64: 9, 128, 128>}, {pipeline_mode = #tpu.pipeline_mode<synchronous>, transform_indices = @transform_4, window_bounds = array<i64: 1, 128>}, {pipeline_mode = #tpu.pipeline_mode<synchronous>, transform_indices = @transform_5, window_bounds = array<i64: 1, 128>}, {pipeline_mode = #tpu.pipeline_mode<synchronous>, transform_indices = @transform_6, window_bounds = array<i64: 9, 128, 128>}, {pipeline_mode = #tpu.pipeline_mode<synchronous>, transform_indices = @transform_7, window_bounds = array<i64: 128, 128>}, {transform_indices = @transform_8, window_bounds = array<i64: 1, 10, 10, 128>}]} {
    %c0 = arith.constant 0 : index
    %c0_0 = arith.constant 0 : index
    %0 = vector.load %arg2[%c0, %c0_0] : memref<1x128xf32, #tpu.memory_space<vmem>>, vector<1x128xf32>
    %c0_1 = arith.constant 0 : index
    %c0_2 = arith.constant 0 : index
    %1 = vector.load %arg3[%c0_1, %c0_2] : memref<1x128xf32, #tpu.memory_space<vmem>>, vector<1x128xf32>
    %c0_3 = arith.constant 0 : index
    %c0_4 = arith.constant 0 : index
    %c0_5 = arith.constant 0 : index
    %c0_6 = arith.constant 0 : index
    %2 = vector.load %arg1[%c0_3, %c0_4, %c0_5, %c0_6] : memref<4x9x9x128xf32, #tpu.memory_space<vmem>>, vector<1x9x9x128xf32>
    %3 = vector.shape_cast %2 : vector<1x9x9x128xf32> to vector<9x9x128xf32>
    %4 = tpu.iota {dimensions = array<i32: 0>} : vector<9x9x128xi32>
    %5 = tpu.iota {dimensions = array<i32: 1>} : vector<9x9x128xi32>
    %c2_i32 = arith.constant 2 : i32
    %6 = vector.broadcast %c2_i32 : i32 to vector<9x9x128xi32>
    %7 = arith.muli %6, %4 : vector<9x9x128xi32>
    %c0_i32 = arith.constant 0 : i32
    %8 = vector.broadcast %c0_i32 : i32 to vector<9x9x128xi32>
    %9 = arith.addi %7, %8 : vector<9x9x128xi32>
    %c2_i32_7 = arith.constant 2 : i32
    %10 = vector.broadcast %c2_i32_7 : i32 to vector<9x9x128xi32>
    %11 = arith.muli %10, %5 : vector<9x9x128xi32>
    %c0_i32_8 = arith.constant 0 : i32
    %12 = vector.broadcast %c0_i32_8 : i32 to vector<9x9x128xi32>
    %13 = arith.addi %11, %12 : vector<9x9x128xi32>
    %c1_i32 = arith.constant 1 : i32
    %14 = vector.broadcast %c1_i32 : i32 to vector<9x9x128xi32>
    %15 = arith.cmpi sge, %9, %14 : vector<9x9x128xi32>
    %c16_i32 = arith.constant 16 : i32
    %16 = vector.broadcast %c16_i32 : i32 to vector<9x9x128xi32>
    %17 = arith.cmpi sle, %9, %16 : vector<9x9x128xi32>
    %18 = arith.andi %15, %17 : vector<9x9x128xi1>
    %c1_i32_9 = arith.constant 1 : i32
    %19 = vector.broadcast %c1_i32_9 : i32 to vector<9x9x128xi32>
    %20 = arith.cmpi sge, %13, %19 : vector<9x9x128xi32>
    %21 = arith.andi %18, %20 : vector<9x9x128xi1>
    %c16_i32_10 = arith.constant 16 : i32
    %22 = vector.broadcast %c16_i32_10 : i32 to vector<9x9x128xi32>
    %23 = arith.cmpi sle, %13, %22 : vector<9x9x128xi32>
    %24 = arith.andi %21, %23 : vector<9x9x128xi1>
    %25 = vector.shape_cast %0 : vector<1x128xf32> to vector<1x1x128xf32>
    %26 = vector.broadcast %25 : vector<1x1x128xf32> to vector<9x9x128xf32>
    %27 = arith.mulf %3, %26 : vector<9x9x128xf32>
    %28 = vector.shape_cast %1 : vector<1x128xf32> to vector<1x1x128xf32>
    %29 = vector.broadcast %28 : vector<1x1x128xf32> to vector<9x9x128xf32>
    %30 = arith.addf %27, %29 : vector<9x9x128xf32>
    %cst = arith.constant 0.000000e+00 : f32
    %31 = vector.broadcast %cst : f32 to vector<9x9x128xf32>
    %32 = arith.maximumf %30, %31 : vector<9x9x128xf32>
    %cst_11 = arith.constant 0.000000e+00 : f32
    %33 = vector.broadcast %cst_11 : f32 to vector<9x9x128xf32>
    %34 = arith.select %24, %32, %33 : vector<9x9x128xi1>, vector<9x9x128xf32>
    %c0_12 = arith.constant 0 : index
    %c0_13 = arith.constant 0 : index
    %c0_14 = arith.constant 0 : index
    %c0_15 = arith.constant 0 : index
    %35 = vector.load %arg10[%c0_12, %c0_13, %c0_14, %c0_15] : memref<4x9x9x128xf32, #tpu.memory_space<vmem>>, vector<1x9x9x128xf32>
    %36 = vector.shape_cast %35 : vector<1x9x9x128xf32> to vector<9x9x128xf32>
    %37 = vector.shape_cast %34 : vector<9x9x128xf32> to vector<1x9x9x128xf32>
    tpu.vector_store %arg10[%c0_12, %c0_13, %c0_14, %c0_15], %37 {strides = array<i32>} : memref<4x9x9x128xf32, #tpu.memory_space<vmem>>, vector<1x9x9x128xf32>,
    %c1 = arith.constant 1 : index
    %c0_16 = arith.constant 0 : index
    %c0_17 = arith.constant 0 : index
    %c0_18 = arith.constant 0 : index
    %38 = vector.load %arg1[%c1, %c0_16, %c0_17, %c0_18] : memref<4x9x9x128xf32, #tpu.memory_space<vmem>>, vector<1x9x9x128xf32>
    %39 = vector.shape_cast %38 : vector<1x9x9x128xf32> to vector<9x9x128xf32>
    %40 = tpu.iota {dimensions = array<i32: 0>} : vector<9x9x128xi32>
    %41 = tpu.iota {dimensions = array<i32: 1>} : vector<9x9x128xi32>
    %c2_i32_19 = arith.constant 2 : i32
    %42 = vector.broadcast %c2_i32_19 : i32 to vector<9x9x128xi32>
    %43 = arith.muli %42, %40 : vector<9x9x128xi32>
    %c0_i32_20 = arith.constant 0 : i32
    %44 = vector.broadcast %c0_i32_20 : i32 to vector<9x9x128xi32>
    %45 = arith.addi %43, %44 : vector<9x9x128xi32>
    %c2_i32_21 = arith.constant 2 : i32
    %46 = vector.broadcast %c2_i32_21 : i32 to vector<9x9x128xi32>
    %47 = arith.muli %46, %41 : vector<9x9x128xi32>
    %c1_i32_22 = arith.constant 1 : i32
    %48 = vector.broadcast %c1_i32_22 : i32 to vector<9x9x128xi32>
    %49 = arith.addi %47, %48 : vector<9x9x128xi32>
    %c1_i32_23 = arith.constant 1 : i32
    %50 = vector.broadcast %c1_i32_23 : i32 to vector<9x9x128xi32>
    %51 = arith.cmpi sge, %45, %50 : vector<9x9x128xi32>
    %c16_i32_24 = arith.constant 16 : i32
    %52 = vector.broadcast %c16_i32_24 : i32 to vector<9x9x128xi32>
    %53 = arith.cmpi sle, %45, %52 : vector<9x9x128xi32>
    %54 = arith.andi %51, %53 : vector<9x9x128xi1>
    %c1_i32_25 = arith.constant 1 : i32
    %55 = vector.broadcast %c1_i32_25 : i32 to vector<9x9x128xi32>
    %56 = arith.cmpi sge, %49, %55 : vector<9x9x128xi32>
    %57 = arith.andi %54, %56 : vector<9x9x128xi1>
    %c16_i32_26 = arith.constant 16 : i32
    %58 = vector.broadcast %c16_i32_26 : i32 to vector<9x9x128xi32>
    %59 = arith.cmpi sle, %49, %58 : vector<9x9x128xi32>
    %60 = arith.andi %57, %59 : vector<9x9x128xi1>
    %61 = vector.shape_cast %0 : vector<1x128xf32> to vector<1x1x128xf32>
    %62 = vector.broadcast %61 : vector<1x1x128xf32> to vector<9x9x128xf32>
    %63 = arith.mulf %39, %62 : vector<9x9x128xf32>
    %64 = vector.shape_cast %1 : vector<1x128xf32> to vector<1x1x128xf32>
    %65 = vector.broadcast %64 : vector<1x1x128xf32> to vector<9x9x128xf32>
    %66 = arith.addf %63, %65 : vector<9x9x128xf32>
    %cst_27 = arith.constant 0.000000e+00 : f32
    %67 = vector.broadcast %cst_27 : f32 to vector<9x9x128xf32>
    %68 = arith.maximumf %66, %67 : vector<9x9x128xf32>
    %cst_28 = arith.constant 0.000000e+00 : f32
    %69 = vector.broadcast %cst_28 : f32 to vector<9x9x128xf32>
    %70 = arith.select %60, %68, %69 : vector<9x9x128xi1>, vector<9x9x128xf32>
    %c1_29 = arith.constant 1 : index
    %c0_30 = arith.constant 0 : index
    %c0_31 = arith.constant 0 : index
    %c0_32 = arith.constant 0 : index
    %71 = vector.load %arg10[%c1_29, %c0_30, %c0_31, %c0_32] : memref<4x9x9x128xf32, #tpu.memory_space<vmem>>, vector<1x9x9x128xf32>
    %72 = vector.shape_cast %71 : vector<1x9x9x128xf32> to vector<9x9x128xf32>
    %73 = vector.shape_cast %70 : vector<9x9x128xf32> to vector<1x9x9x128xf32>
    tpu.vector_store %arg10[%c1_29, %c0_30, %c0_31, %c0_32], %73 {strides = array<i32>} : memref<4x9x9x128xf32, #tpu.memory_space<vmem>>, vector<1x9x9x128xf32>,
    %c2 = arith.constant 2 : index
    %c0_33 = arith.constant 0 : index
    %c0_34 = arith.constant 0 : index
    %c0_35 = arith.constant 0 : index
    %74 = vector.load %arg1[%c2, %c0_33, %c0_34, %c0_35] : memref<4x9x9x128xf32, #tpu.memory_space<vmem>>, vector<1x9x9x128xf32>
    %75 = vector.shape_cast %74 : vector<1x9x9x128xf32> to vector<9x9x128xf32>
    %76 = tpu.iota {dimensions = array<i32: 0>} : vector<9x9x128xi32>
    %77 = tpu.iota {dimensions = array<i32: 1>} : vector<9x9x128xi32>
    %c2_i32_36 = arith.constant 2 : i32
    %78 = vector.broadcast %c2_i32_36 : i32 to vector<9x9x128xi32>
    %79 = arith.muli %78, %76 : vector<9x9x128xi32>
    %c1_i32_37 = arith.constant 1 : i32
    %80 = vector.broadcast %c1_i32_37 : i32 to vector<9x9x128xi32>
    %81 = arith.addi %79, %80 : vector<9x9x128xi32>
    %c2_i32_38 = arith.constant 2 : i32
    %82 = vector.broadcast %c2_i32_38 : i32 to vector<9x9x128xi32>
    %83 = arith.muli %82, %77 : vector<9x9x128xi32>
    %c0_i32_39 = arith.constant 0 : i32
    %84 = vector.broadcast %c0_i32_39 : i32 to vector<9x9x128xi32>
    %85 = arith.addi %83, %84 : vector<9x9x128xi32>
    %c1_i32_40 = arith.constant 1 : i32
    %86 = vector.broadcast %c1_i32_40 : i32 to vector<9x9x128xi32>
    %87 = arith.cmpi sge, %81, %86 : vector<9x9x128xi32>
    %c16_i32_41 = arith.constant 16 : i32
    %88 = vector.broadcast %c16_i32_41 : i32 to vector<9x9x128xi32>
    %89 = arith.cmpi sle, %81, %88 : vector<9x9x128xi32>
    %90 = arith.andi %87, %89 : vector<9x9x128xi1>
    %c1_i32_42 = arith.constant 1 : i32
    %91 = vector.broadcast %c1_i32_42 : i32 to vector<9x9x128xi32>
    %92 = arith.cmpi sge, %85, %91 : vector<9x9x128xi32>
    %93 = arith.andi %90, %92 : vector<9x9x128xi1>
    %c16_i32_43 = arith.constant 16 : i32
    %94 = vector.broadcast %c16_i32_43 : i32 to vector<9x9x128xi32>
    %95 = arith.cmpi sle, %85, %94 : vector<9x9x128xi32>
    %96 = arith.andi %93, %95 : vector<9x9x128xi1>
    %97 = vector.shape_cast %0 : vector<1x128xf32> to vector<1x1x128xf32>
    %98 = vector.broadcast %97 : vector<1x1x128xf32> to vector<9x9x128xf32>
    %99 = arith.mulf %75, %98 : vector<9x9x128xf32>
    %100 = vector.shape_cast %1 : vector<1x128xf32> to vector<1x1x128xf32>
    %101 = vector.broadcast %100 : vector<1x1x128xf32> to vector<9x9x128xf32>
    %102 = arith.addf %99, %101 : vector<9x9x128xf32>
    %cst_44 = arith.constant 0.000000e+00 : f32
    %103 = vector.broadcast %cst_44 : f32 to vector<9x9x128xf32>
    %104 = arith.maximumf %102, %103 : vector<9x9x128xf32>
    %cst_45 = arith.constant 0.000000e+00 : f32
    %105 = vector.broadcast %cst_45 : f32 to vector<9x9x128xf32>
    %106 = arith.select %96, %104, %105 : vector<9x9x128xi1>, vector<9x9x128xf32>
    %c2_46 = arith.constant 2 : index
    %c0_47 = arith.constant 0 : index
    %c0_48 = arith.constant 0 : index
    %c0_49 = arith.constant 0 : index
    %107 = vector.load %arg10[%c2_46, %c0_47, %c0_48, %c0_49] : memref<4x9x9x128xf32, #tpu.memory_space<vmem>>, vector<1x9x9x128xf32>
    %108 = vector.shape_cast %107 : vector<1x9x9x128xf32> to vector<9x9x128xf32>
    %109 = vector.shape_cast %106 : vector<9x9x128xf32> to vector<1x9x9x128xf32>
    tpu.vector_store %arg10[%c2_46, %c0_47, %c0_48, %c0_49], %109 {strides = array<i32>} : memref<4x9x9x128xf32, #tpu.memory_space<vmem>>, vector<1x9x9x128xf32>,
    %c3 = arith.constant 3 : index
    %c0_50 = arith.constant 0 : index
    %c0_51 = arith.constant 0 : index
    %c0_52 = arith.constant 0 : index
    %110 = vector.load %arg1[%c3, %c0_50, %c0_51, %c0_52] : memref<4x9x9x128xf32, #tpu.memory_space<vmem>>, vector<1x9x9x128xf32>
    %111 = vector.shape_cast %110 : vector<1x9x9x128xf32> to vector<9x9x128xf32>
    %112 = tpu.iota {dimensions = array<i32: 0>} : vector<9x9x128xi32>
    %113 = tpu.iota {dimensions = array<i32: 1>} : vector<9x9x128xi32>
    %c2_i32_53 = arith.constant 2 : i32
    %114 = vector.broadcast %c2_i32_53 : i32 to vector<9x9x128xi32>
    %115 = arith.muli %114, %112 : vector<9x9x128xi32>
    %c1_i32_54 = arith.constant 1 : i32
    %116 = vector.broadcast %c1_i32_54 : i32 to vector<9x9x128xi32>
    %117 = arith.addi %115, %116 : vector<9x9x128xi32>
    %c2_i32_55 = arith.constant 2 : i32
    %118 = vector.broadcast %c2_i32_55 : i32 to vector<9x9x128xi32>
    %119 = arith.muli %118, %113 : vector<9x9x128xi32>
    %c1_i32_56 = arith.constant 1 : i32
    %120 = vector.broadcast %c1_i32_56 : i32 to vector<9x9x128xi32>
    %121 = arith.addi %119, %120 : vector<9x9x128xi32>
    %c1_i32_57 = arith.constant 1 : i32
    %122 = vector.broadcast %c1_i32_57 : i32 to vector<9x9x128xi32>
    %123 = arith.cmpi sge, %117, %122 : vector<9x9x128xi32>
    %c16_i32_58 = arith.constant 16 : i32
    %124 = vector.broadcast %c16_i32_58 : i32 to vector<9x9x128xi32>
    %125 = arith.cmpi sle, %117, %124 : vector<9x9x128xi32>
    %126 = arith.andi %123, %125 : vector<9x9x128xi1>
    %c1_i32_59 = arith.constant 1 : i32
    %127 = vector.broadcast %c1_i32_59 : i32 to vector<9x9x128xi32>
    %128 = arith.cmpi sge, %121, %127 : vector<9x9x128xi32>
    %129 = arith.andi %126, %128 : vector<9x9x128xi1>
    %c16_i32_60 = arith.constant 16 : i32
    %130 = vector.broadcast %c16_i32_60 : i32 to vector<9x9x128xi32>
    %131 = arith.cmpi sle, %121, %130 : vector<9x9x128xi32>
    %132 = arith.andi %129, %131 : vector<9x9x128xi1>
    %133 = vector.shape_cast %0 : vector<1x128xf32> to vector<1x1x128xf32>
    %134 = vector.broadcast %133 : vector<1x1x128xf32> to vector<9x9x128xf32>
    %135 = arith.mulf %111, %134 : vector<9x9x128xf32>
    %136 = vector.shape_cast %1 : vector<1x128xf32> to vector<1x1x128xf32>
    %137 = vector.broadcast %136 : vector<1x1x128xf32> to vector<9x9x128xf32>
    %138 = arith.addf %135, %137 : vector<9x9x128xf32>
    %cst_61 = arith.constant 0.000000e+00 : f32
    %139 = vector.broadcast %cst_61 : f32 to vector<9x9x128xf32>
    %140 = arith.maximumf %138, %139 : vector<9x9x128xf32>
    %cst_62 = arith.constant 0.000000e+00 : f32
    %141 = vector.broadcast %cst_62 : f32 to vector<9x9x128xf32>
    %142 = arith.select %132, %140, %141 : vector<9x9x128xi1>, vector<9x9x128xf32>
    %c3_63 = arith.constant 3 : index
    %c0_64 = arith.constant 0 : index
    %c0_65 = arith.constant 0 : index
    %c0_66 = arith.constant 0 : index
    %143 = vector.load %arg10[%c3_63, %c0_64, %c0_65, %c0_66] : memref<4x9x9x128xf32, #tpu.memory_space<vmem>>, vector<1x9x9x128xf32>
    %144 = vector.shape_cast %143 : vector<1x9x9x128xf32> to vector<9x9x128xf32>
    %145 = vector.shape_cast %142 : vector<9x9x128xf32> to vector<1x9x9x128xf32>
    tpu.vector_store %arg10[%c3_63, %c0_64, %c0_65, %c0_66], %145 {strides = array<i32>} : memref<4x9x9x128xf32, #tpu.memory_space<vmem>>, vector<1x9x9x128xf32>,
    %cst_67 = arith.constant 0.000000e+00 : f32
    %146 = vector.broadcast %cst_67 : f32 to vector<64x128xf32>
    %c0_68 = arith.constant 0 : index
    %c0_69 = arith.constant 0 : index
    %c0_70 = arith.constant 0 : index
    %c0_71 = arith.constant 0 : index
    %147 = vector.load %arg10[%c0_68, %c0_69, %c0_70, %c0_71] : memref<4x9x9x128xf32, #tpu.memory_space<vmem>>, vector<1x8x8x128xf32>
    %148 = vector.shape_cast %147 : vector<1x8x8x128xf32> to vector<8x8x128xf32>
    %149 = vector.shape_cast %148 : vector<8x8x128xf32> to vector<64x128xf32>
    %150 = arith.truncf %149 : vector<64x128xf32> to vector<64x128xbf16>
    %c0_72 = arith.constant 0 : index
    %c0_73 = arith.constant 0 : index
    %c0_74 = arith.constant 0 : index
    %151 = vector.load %arg4[%c0_72, %c0_73, %c0_74] : memref<9x128x128xbf16, #tpu.memory_space<vmem>>, vector<1x128x128xbf16>
    %152 = vector.shape_cast %151 : vector<1x128x128xbf16> to vector<128x128xbf16>
    %cst_75 = arith.constant dense<0.000000e+00> : vector<64x128xf32>
    %153 = tpu.matmul %150, %152, %cst_75 {dimension_numbers = #tpu.dot_dimension_numbers<[1], [0], [0], [1], [0, 0, 1, 1], [], []>} : vector<64x128xbf16>, vector<128x128xbf16>, vector<64x128xf32> -> vector<64x128xf32>
    %154 = arith.addf %146, %153 : vector<64x128xf32>
    %c1_76 = arith.constant 1 : index
    %c0_77 = arith.constant 0 : index
    %c0_78 = arith.constant 0 : index
    %c0_79 = arith.constant 0 : index
    %155 = vector.load %arg10[%c1_76, %c0_77, %c0_78, %c0_79] : memref<4x9x9x128xf32, #tpu.memory_space<vmem>>, vector<1x8x8x128xf32>
    %156 = vector.shape_cast %155 : vector<1x8x8x128xf32> to vector<8x8x128xf32>
    %157 = vector.shape_cast %156 : vector<8x8x128xf32> to vector<64x128xf32>
    %158 = arith.truncf %157 : vector<64x128xf32> to vector<64x128xbf16>
    %c1_80 = arith.constant 1 : index
    %c0_81 = arith.constant 0 : index
    %c0_82 = arith.constant 0 : index
    %159 = vector.load %arg4[%c1_80, %c0_81, %c0_82] : memref<9x128x128xbf16, #tpu.memory_space<vmem>>, vector<1x128x128xbf16>
    %160 = vector.shape_cast %159 : vector<1x128x128xbf16> to vector<128x128xbf16>
    %cst_83 = arith.constant dense<0.000000e+00> : vector<64x128xf32>
    %161 = tpu.matmul %158, %160, %cst_83 {dimension_numbers = #tpu.dot_dimension_numbers<[1], [0], [0], [1], [0, 0, 1, 1], [], []>} : vector<64x128xbf16>, vector<128x128xbf16>, vector<64x128xf32> -> vector<64x128xf32>
    %162 = arith.addf %154, %161 : vector<64x128xf32>
    %c0_84 = arith.constant 0 : index
    %c0_85 = arith.constant 0 : index
    %c1_86 = arith.constant 1 : index
    %c0_87 = arith.constant 0 : index
    %163 = vector.load %arg10[%c0_84, %c0_85, %c1_86, %c0_87] : memref<4x9x9x128xf32, #tpu.memory_space<vmem>>, vector<1x8x8x128xf32>
    %164 = vector.shape_cast %163 : vector<1x8x8x128xf32> to vector<8x8x128xf32>
    %165 = vector.shape_cast %164 : vector<8x8x128xf32> to vector<64x128xf32>
    %166 = arith.truncf %165 : vector<64x128xf32> to vector<64x128xbf16>
    %c2_88 = arith.constant 2 : index
    %c0_89 = arith.constant 0 : index
    %c0_90 = arith.constant 0 : index
    %167 = vector.load %arg4[%c2_88, %c0_89, %c0_90] : memref<9x128x128xbf16, #tpu.memory_space<vmem>>, vector<1x128x128xbf16>
    %168 = vector.shape_cast %167 : vector<1x128x128xbf16> to vector<128x128xbf16>
    %cst_91 = arith.constant dense<0.000000e+00> : vector<64x128xf32>
    %169 = tpu.matmul %166, %168, %cst_91 {dimension_numbers = #tpu.dot_dimension_numbers<[1], [0], [0], [1], [0, 0, 1, 1], [], []>} : vector<64x128xbf16>, vector<128x128xbf16>, vector<64x128xf32> -> vector<64x128xf32>
    %170 = arith.addf %162, %169 : vector<64x128xf32>
    %c2_92 = arith.constant 2 : index
    %c0_93 = arith.constant 0 : index
    %c0_94 = arith.constant 0 : index
    %c0_95 = arith.constant 0 : index
    %171 = vector.load %arg10[%c2_92, %c0_93, %c0_94, %c0_95] : memref<4x9x9x128xf32, #tpu.memory_space<vmem>>, vector<1x8x8x128xf32>
    %172 = vector.shape_cast %171 : vector<1x8x8x128xf32> to vector<8x8x128xf32>
    %173 = vector.shape_cast %172 : vector<8x8x128xf32> to vector<64x128xf32>
    %174 = arith.truncf %173 : vector<64x128xf32> to vector<64x128xbf16>
    %c3_96 = arith.constant 3 : index
    %c0_97 = arith.constant 0 : index
    %c0_98 = arith.constant 0 : index
    %175 = vector.load %arg4[%c3_96, %c0_97, %c0_98] : memref<9x128x128xbf16, #tpu.memory_space<vmem>>, vector<1x128x128xbf16>
    %176 = vector.shape_cast %175 : vector<1x128x128xbf16> to vector<128x128xbf16>
    %cst_99 = arith.constant dense<0.000000e+00> : vector<64x128xf32>
    %177 = tpu.matmul %174, %176, %cst_99 {dimension_numbers = #tpu.dot_dimension_numbers<[1], [0], [0], [1], [0, 0, 1, 1], [], []>} : vector<64x128xbf16>, vector<128x128xbf16>, vector<64x128xf32> -> vector<64x128xf32>
    %178 = arith.addf %170, %177 : vector<64x128xf32>
    %c3_100 = arith.constant 3 : index
    %c0_101 = arith.constant 0 : index
    %c0_102 = arith.constant 0 : index
    %c0_103 = arith.constant 0 : index
    %179 = vector.load %arg10[%c3_100, %c0_101, %c0_102, %c0_103] : memref<4x9x9x128xf32, #tpu.memory_space<vmem>>, vector<1x8x8x128xf32>
    %180 = vector.shape_cast %179 : vector<1x8x8x128xf32> to vector<8x8x128xf32>
    %181 = vector.shape_cast %180 : vector<8x8x128xf32> to vector<64x128xf32>
    %182 = arith.truncf %181 : vector<64x128xf32> to vector<64x128xbf16>
    %c4 = arith.constant 4 : index
    %c0_104 = arith.constant 0 : index
    %c0_105 = arith.constant 0 : index
    %183 = vector.load %arg4[%c4, %c0_104, %c0_105] : memref<9x128x128xbf16, #tpu.memory_space<vmem>>, vector<1x128x128xbf16>
    %184 = vector.shape_cast %183 : vector<1x128x128xbf16> to vector<128x128xbf16>
    %cst_106 = arith.constant dense<0.000000e+00> : vector<64x128xf32>
    %185 = tpu.matmul %182, %184, %cst_106 {dimension_numbers = #tpu.dot_dimension_numbers<[1], [0], [0], [1], [0, 0, 1, 1], [], []>} : vector<64x128xbf16>, vector<128x128xbf16>, vector<64x128xf32> -> vector<64x128xf32>
    %186 = arith.addf %178, %185 : vector<64x128xf32>
    %c2_107 = arith.constant 2 : index
    %c0_108 = arith.constant 0 : index
    %c1_109 = arith.constant 1 : index
    %c0_110 = arith.constant 0 : index
    %187 = vector.load %arg10[%c2_107, %c0_108, %c1_109, %c0_110] : memref<4x9x9x128xf32, #tpu.memory_space<vmem>>, vector<1x8x8x128xf32>
    %188 = vector.shape_cast %187 : vector<1x8x8x128xf32> to vector<8x8x128xf32>
    %189 = vector.shape_cast %188 : vector<8x8x128xf32> to vector<64x128xf32>
    %190 = arith.truncf %189 : vector<64x128xf32> to vector<64x128xbf16>
    %c5 = arith.constant 5 : index
    %c0_111 = arith.constant 0 : index
    %c0_112 = arith.constant 0 : index
    %191 = vector.load %arg4[%c5, %c0_111, %c0_112] : memref<9x128x128xbf16, #tpu.memory_space<vmem>>, vector<1x128x128xbf16>
    %192 = vector.shape_cast %191 : vector<1x128x128xbf16> to vector<128x128xbf16>
    %cst_113 = arith.constant dense<0.000000e+00> : vector<64x128xf32>
    %193 = tpu.matmul %190, %192, %cst_113 {dimension_numbers = #tpu.dot_dimension_numbers<[1], [0], [0], [1], [0, 0, 1, 1], [], []>} : vector<64x128xbf16>, vector<128x128xbf16>, vector<64x128xf32> -> vector<64x128xf32>
    %194 = arith.addf %186, %193 : vector<64x128xf32>
    %c0_114 = arith.constant 0 : index
    %c1_115 = arith.constant 1 : index
    %c0_116 = arith.constant 0 : index
    %c0_117 = arith.constant 0 : index
    %195 = vector.load %arg10[%c0_114, %c1_115, %c0_116, %c0_117] : memref<4x9x9x128xf32, #tpu.memory_space<vmem>>, vector<1x8x8x128xf32>
    %196 = vector.shape_cast %195 : vector<1x8x8x128xf32> to vector<8x8x128xf32>
    %197 = vector.shape_cast %196 : vector<8x8x128xf32> to vector<64x128xf32>
    %198 = arith.truncf %197 : vector<64x128xf32> to vector<64x128xbf16>
    %c6 = arith.constant 6 : index
    %c0_118 = arith.constant 0 : index
    %c0_119 = arith.constant 0 : index
    %199 = vector.load %arg4[%c6, %c0_118, %c0_119] : memref<9x128x128xbf16, #tpu.memory_space<vmem>>, vector<1x128x128xbf16>
    %200 = vector.shape_cast %199 : vector<1x128x128xbf16> to vector<128x128xbf16>
    %cst_120 = arith.constant dense<0.000000e+00> : vector<64x128xf32>
    %201 = tpu.matmul %198, %200, %cst_120 {dimension_numbers = #tpu.dot_dimension_numbers<[1], [0], [0], [1], [0, 0, 1, 1], [], []>} : vector<64x128xbf16>, vector<128x128xbf16>, vector<64x128xf32> -> vector<64x128xf32>
    %202 = arith.addf %194, %201 : vector<64x128xf32>
    %c1_121 = arith.constant 1 : index
    %c1_122 = arith.constant 1 : index
    %c0_123 = arith.constant 0 : index
    %c0_124 = arith.constant 0 : index
    %203 = vector.load %arg10[%c1_121, %c1_122, %c0_123, %c0_124] : memref<4x9x9x128xf32, #tpu.memory_space<vmem>>, vector<1x8x8x128xf32>
    %204 = vector.shape_cast %203 : vector<1x8x8x128xf32> to vector<8x8x128xf32>
    %205 = vector.shape_cast %204 : vector<8x8x128xf32> to vector<64x128xf32>
    %206 = arith.truncf %205 : vector<64x128xf32> to vector<64x128xbf16>
    %c7 = arith.constant 7 : index
    %c0_125 = arith.constant 0 : index
    %c0_126 = arith.constant 0 : index
    %207 = vector.load %arg4[%c7, %c0_125, %c0_126] : memref<9x128x128xbf16, #tpu.memory_space<vmem>>, vector<1x128x128xbf16>
    %208 = vector.shape_cast %207 : vector<1x128x128xbf16> to vector<128x128xbf16>
    %cst_127 = arith.constant dense<0.000000e+00> : vector<64x128xf32>
    %209 = tpu.matmul %206, %208, %cst_127 {dimension_numbers = #tpu.dot_dimension_numbers<[1], [0], [0], [1], [0, 0, 1, 1], [], []>} : vector<64x128xbf16>, vector<128x128xbf16>, vector<64x128xf32> -> vector<64x128xf32>
    %210 = arith.addf %202, %209 : vector<64x128xf32>
    %c0_128 = arith.constant 0 : index
    %c1_129 = arith.constant 1 : index
    %c1_130 = arith.constant 1 : index
    %c0_131 = arith.constant 0 : index
    %211 = vector.load %arg10[%c0_128, %c1_129, %c1_130, %c0_131] : memref<4x9x9x128xf32, #tpu.memory_space<vmem>>, vector<1x8x8x128xf32>
    %212 = vector.shape_cast %211 : vector<1x8x8x128xf32> to vector<8x8x128xf32>
    %213 = vector.shape_cast %212 : vector<8x8x128xf32> to vector<64x128xf32>
    %214 = arith.truncf %213 : vector<64x128xf32> to vector<64x128xbf16>
    %c8 = arith.constant 8 : index
    %c0_132 = arith.constant 0 : index
    %c0_133 = arith.constant 0 : index
    %215 = vector.load %arg4[%c8, %c0_132, %c0_133] : memref<9x128x128xbf16, #tpu.memory_space<vmem>>, vector<1x128x128xbf16>
    %216 = vector.shape_cast %215 : vector<1x128x128xbf16> to vector<128x128xbf16>
    %cst_134 = arith.constant dense<0.000000e+00> : vector<64x128xf32>
    %217 = tpu.matmul %214, %216, %cst_134 {dimension_numbers = #tpu.dot_dimension_numbers<[1], [0], [0], [1], [0, 0, 1, 1], [], []>} : vector<64x128xbf16>, vector<128x128xbf16>, vector<64x128xf32> -> vector<64x128xf32>
    %218 = arith.addf %210, %217 : vector<64x128xf32>
    %c0_135 = arith.constant 0 : index
    %c0_136 = arith.constant 0 : index
    %219 = vector.load %arg5[%c0_135, %c0_136] : memref<1x128xf32, #tpu.memory_space<vmem>>, vector<1x128xf32>
    %220 = vector.broadcast %219 : vector<1x128xf32> to vector<64x128xf32>
    %221 = arith.mulf %218, %220 : vector<64x128xf32>
    %c0_137 = arith.constant 0 : index
    %c0_138 = arith.constant 0 : index
    %222 = vector.load %arg6[%c0_137, %c0_138] : memref<1x128xf32, #tpu.memory_space<vmem>>, vector<1x128xf32>
    %223 = vector.broadcast %222 : vector<1x128xf32> to vector<64x128xf32>
    %224 = arith.addf %221, %223 : vector<64x128xf32>
    %cst_139 = arith.constant 0.000000e+00 : f32
    %225 = vector.broadcast %cst_139 : f32 to vector<64x128xf32>
    %226 = arith.maximumf %224, %225 : vector<64x128xf32>
    %cst_140 = arith.constant 0.000000e+00 : f32
    %227 = vector.broadcast %cst_140 : f32 to vector<10x10x128xf32>
    %c0_141 = arith.constant 0 : index
    %c0_142 = arith.constant 0 : index
    %c0_143 = arith.constant 0 : index
    %228 = vector.load %arg11[%c0_141, %c0_142, %c0_143] : memref<10x10x128xf32, #tpu.memory_space<vmem>>, vector<10x10x128xf32>
    tpu.vector_store %arg11[%c0_141, %c0_142, %c0_143], %227 {strides = array<i32>} : memref<10x10x128xf32, #tpu.memory_space<vmem>>, vector<10x10x128xf32>,
    %229 = vector.shape_cast %226 : vector<64x128xf32> to vector<8x8x128xf32>
    %c1_144 = arith.constant 1 : index
    %c1_145 = arith.constant 1 : index
    %c0_146 = arith.constant 0 : index
    %230 = vector.load %arg11[%c1_144, %c1_145, %c0_146] : memref<10x10x128xf32, #tpu.memory_space<vmem>>, vector<8x8x128xf32>
    tpu.vector_store %arg11[%c1_144, %c1_145, %c0_146], %229 {strides = array<i32>} : memref<10x10x128xf32, #tpu.memory_space<vmem>>, vector<8x8x128xf32>,
    %cst_147 = arith.constant 0.000000e+00 : f32
    %231 = vector.broadcast %cst_147 : f32 to vector<64x128xf32>
    %c0_148 = arith.constant 0 : index
    %c0_149 = arith.constant 0 : index
    %c0_150 = arith.constant 0 : index
    %232 = vector.load %arg11[%c0_148, %c0_149, %c0_150] : memref<10x10x128xf32, #tpu.memory_space<vmem>>, vector<8x8x128xf32>
    %233 = vector.shape_cast %232 : vector<8x8x128xf32> to vector<64x128xf32>
    %234 = arith.truncf %233 : vector<64x128xf32> to vector<64x128xbf16>
    %c0_151 = arith.constant 0 : index
    %c0_152 = arith.constant 0 : index
    %c0_153 = arith.constant 0 : index
    %235 = vector.load %arg7[%c0_151, %c0_152, %c0_153] : memref<9x128x128xbf16, #tpu.memory_space<vmem>>, vector<1x128x128xbf16>
    %236 = vector.shape_cast %235 : vector<1x128x128xbf16> to vector<128x128xbf16>
    %cst_154 = arith.constant dense<0.000000e+00> : vector<64x128xf32>
    %237 = tpu.matmul %234, %236, %cst_154 {dimension_numbers = #tpu.dot_dimension_numbers<[1], [0], [0], [1], [0, 0, 1, 1], [], []>} : vector<64x128xbf16>, vector<128x128xbf16>, vector<64x128xf32> -> vector<64x128xf32>
    %238 = arith.addf %231, %237 : vector<64x128xf32>
    %c0_155 = arith.constant 0 : index
    %c1_156 = arith.constant 1 : index
    %c0_157 = arith.constant 0 : index
    %239 = vector.load %arg11[%c0_155, %c1_156, %c0_157] : memref<10x10x128xf32, #tpu.memory_space<vmem>>, vector<8x8x128xf32>
    %240 = vector.shape_cast %239 : vector<8x8x128xf32> to vector<64x128xf32>
    %241 = arith.truncf %240 : vector<64x128xf32> to vector<64x128xbf16>
    %c1_158 = arith.constant 1 : index
    %c0_159 = arith.constant 0 : index
    %c0_160 = arith.constant 0 : index
    %242 = vector.load %arg7[%c1_158, %c0_159, %c0_160] : memref<9x128x128xbf16, #tpu.memory_space<vmem>>, vector<1x128x128xbf16>
    %243 = vector.shape_cast %242 : vector<1x128x128xbf16> to vector<128x128xbf16>
    %cst_161 = arith.constant dense<0.000000e+00> : vector<64x128xf32>
    %244 = tpu.matmul %241, %243, %cst_161 {dimension_numbers = #tpu.dot_dimension_numbers<[1], [0], [0], [1], [0, 0, 1, 1], [], []>} : vector<64x128xbf16>, vector<128x128xbf16>, vector<64x128xf32> -> vector<64x128xf32>
    %245 = arith.addf %238, %244 : vector<64x128xf32>
    %c0_162 = arith.constant 0 : index
    %c2_163 = arith.constant 2 : index
    %c0_164 = arith.constant 0 : index
    %246 = vector.load %arg11[%c0_162, %c2_163, %c0_164] : memref<10x10x128xf32, #tpu.memory_space<vmem>>, vector<8x8x128xf32>
    %247 = vector.shape_cast %246 : vector<8x8x128xf32> to vector<64x128xf32>
    %248 = arith.truncf %247 : vector<64x128xf32> to vector<64x128xbf16>
    %c2_165 = arith.constant 2 : index
    %c0_166 = arith.constant 0 : index
    %c0_167 = arith.constant 0 : index
    %249 = vector.load %arg7[%c2_165, %c0_166, %c0_167] : memref<9x128x128xbf16, #tpu.memory_space<vmem>>, vector<1x128x128xbf16>
    %250 = vector.shape_cast %249 : vector<1x128x128xbf16> to vector<128x128xbf16>
    %cst_168 = arith.constant dense<0.000000e+00> : vector<64x128xf32>
    %251 = tpu.matmul %248, %250, %cst_168 {dimension_numbers = #tpu.dot_dimension_numbers<[1], [0], [0], [1], [0, 0, 1, 1], [], []>} : vector<64x128xbf16>, vector<128x128xbf16>, vector<64x128xf32> -> vector<64x128xf32>
    %252 = arith.addf %245, %251 : vector<64x128xf32>
    %c1_169 = arith.constant 1 : index
    %c0_170 = arith.constant 0 : index
    %c0_171 = arith.constant 0 : index
    %253 = vector.load %arg11[%c1_169, %c0_170, %c0_171] : memref<10x10x128xf32, #tpu.memory_space<vmem>>, vector<8x8x128xf32>
    %254 = vector.shape_cast %253 : vector<8x8x128xf32> to vector<64x128xf32>
    %255 = arith.truncf %254 : vector<64x128xf32> to vector<64x128xbf16>
    %c3_172 = arith.constant 3 : index
    %c0_173 = arith.constant 0 : index
    %c0_174 = arith.constant 0 : index
    %256 = vector.load %arg7[%c3_172, %c0_173, %c0_174] : memref<9x128x128xbf16, #tpu.memory_space<vmem>>, vector<1x128x128xbf16>
    %257 = vector.shape_cast %256 : vector<1x128x128xbf16> to vector<128x128xbf16>
    %cst_175 = arith.constant dense<0.000000e+00> : vector<64x128xf32>
    %258 = tpu.matmul %255, %257, %cst_175 {dimension_numbers = #tpu.dot_dimension_numbers<[1], [0], [0], [1], [0, 0, 1, 1], [], []>} : vector<64x128xbf16>, vector<128x128xbf16>, vector<64x128xf32> -> vector<64x128xf32>
    %259 = arith.addf %252, %258 : vector<64x128xf32>
    %c1_176 = arith.constant 1 : index
    %c1_177 = arith.constant 1 : index
    %c0_178 = arith.constant 0 : index
    %260 = vector.load %arg11[%c1_176, %c1_177, %c0_178] : memref<10x10x128xf32, #tpu.memory_space<vmem>>, vector<8x8x128xf32>
    %261 = vector.shape_cast %260 : vector<8x8x128xf32> to vector<64x128xf32>
    %262 = arith.truncf %261 : vector<64x128xf32> to vector<64x128xbf16>
    %c4_179 = arith.constant 4 : index
    %c0_180 = arith.constant 0 : index
    %c0_181 = arith.constant 0 : index
    %263 = vector.load %arg7[%c4_179, %c0_180, %c0_181] : memref<9x128x128xbf16, #tpu.memory_space<vmem>>, vector<1x128x128xbf16>
    %264 = vector.shape_cast %263 : vector<1x128x128xbf16> to vector<128x128xbf16>
    %cst_182 = arith.constant dense<0.000000e+00> : vector<64x128xf32>
    %265 = tpu.matmul %262, %264, %cst_182 {dimension_numbers = #tpu.dot_dimension_numbers<[1], [0], [0], [1], [0, 0, 1, 1], [], []>} : vector<64x128xbf16>, vector<128x128xbf16>, vector<64x128xf32> -> vector<64x128xf32>
    %266 = arith.addf %259, %265 : vector<64x128xf32>
    %c1_183 = arith.constant 1 : index
    %c2_184 = arith.constant 2 : index
    %c0_185 = arith.constant 0 : index
    %267 = vector.load %arg11[%c1_183, %c2_184, %c0_185] : memref<10x10x128xf32, #tpu.memory_space<vmem>>, vector<8x8x128xf32>
    %268 = vector.shape_cast %267 : vector<8x8x128xf32> to vector<64x128xf32>
    %269 = arith.truncf %268 : vector<64x128xf32> to vector<64x128xbf16>
    %c5_186 = arith.constant 5 : index
    %c0_187 = arith.constant 0 : index
    %c0_188 = arith.constant 0 : index
    %270 = vector.load %arg7[%c5_186, %c0_187, %c0_188] : memref<9x128x128xbf16, #tpu.memory_space<vmem>>, vector<1x128x128xbf16>
    %271 = vector.shape_cast %270 : vector<1x128x128xbf16> to vector<128x128xbf16>
    %cst_189 = arith.constant dense<0.000000e+00> : vector<64x128xf32>
    %272 = tpu.matmul %269, %271, %cst_189 {dimension_numbers = #tpu.dot_dimension_numbers<[1], [0], [0], [1], [0, 0, 1, 1], [], []>} : vector<64x128xbf16>, vector<128x128xbf16>, vector<64x128xf32> -> vector<64x128xf32>
    %273 = arith.addf %266, %272 : vector<64x128xf32>
    %c2_190 = arith.constant 2 : index
    %c0_191 = arith.constant 0 : index
    %c0_192 = arith.constant 0 : index
    %274 = vector.load %arg11[%c2_190, %c0_191, %c0_192] : memref<10x10x128xf32, #tpu.memory_space<vmem>>, vector<8x8x128xf32>
    %275 = vector.shape_cast %274 : vector<8x8x128xf32> to vector<64x128xf32>
    %276 = arith.truncf %275 : vector<64x128xf32> to vector<64x128xbf16>
    %c6_193 = arith.constant 6 : index
    %c0_194 = arith.constant 0 : index
    %c0_195 = arith.constant 0 : index
    %277 = vector.load %arg7[%c6_193, %c0_194, %c0_195] : memref<9x128x128xbf16, #tpu.memory_space<vmem>>, vector<1x128x128xbf16>
    %278 = vector.shape_cast %277 : vector<1x128x128xbf16> to vector<128x128xbf16>
    %cst_196 = arith.constant dense<0.000000e+00> : vector<64x128xf32>
    %279 = tpu.matmul %276, %278, %cst_196 {dimension_numbers = #tpu.dot_dimension_numbers<[1], [0], [0], [1], [0, 0, 1, 1], [], []>} : vector<64x128xbf16>, vector<128x128xbf16>, vector<64x128xf32> -> vector<64x128xf32>
    %280 = arith.addf %273, %279 : vector<64x128xf32>
    %c2_197 = arith.constant 2 : index
    %c1_198 = arith.constant 1 : index
    %c0_199 = arith.constant 0 : index
    %281 = vector.load %arg11[%c2_197, %c1_198, %c0_199] : memref<10x10x128xf32, #tpu.memory_space<vmem>>, vector<8x8x128xf32>
    %282 = vector.shape_cast %281 : vector<8x8x128xf32> to vector<64x128xf32>
    %283 = arith.truncf %282 : vector<64x128xf32> to vector<64x128xbf16>
    %c7_200 = arith.constant 7 : index
    %c0_201 = arith.constant 0 : index
    %c0_202 = arith.constant 0 : index
    %284 = vector.load %arg7[%c7_200, %c0_201, %c0_202] : memref<9x128x128xbf16, #tpu.memory_space<vmem>>, vector<1x128x128xbf16>
    %285 = vector.shape_cast %284 : vector<1x128x128xbf16> to vector<128x128xbf16>
    %cst_203 = arith.constant dense<0.000000e+00> : vector<64x128xf32>
    %286 = tpu.matmul %283, %285, %cst_203 {dimension_numbers = #tpu.dot_dimension_numbers<[1], [0], [0], [1], [0, 0, 1, 1], [], []>} : vector<64x128xbf16>, vector<128x128xbf16>, vector<64x128xf32> -> vector<64x128xf32>
    %287 = arith.addf %280, %286 : vector<64x128xf32>
    %c2_204 = arith.constant 2 : index
    %c2_205 = arith.constant 2 : index
    %c0_206 = arith.constant 0 : index
    %288 = vector.load %arg11[%c2_204, %c2_205, %c0_206] : memref<10x10x128xf32, #tpu.memory_space<vmem>>, vector<8x8x128xf32>
    %289 = vector.shape_cast %288 : vector<8x8x128xf32> to vector<64x128xf32>
    %290 = arith.truncf %289 : vector<64x128xf32> to vector<64x128xbf16>
    %c8_207 = arith.constant 8 : index
    %c0_208 = arith.constant 0 : index
    %c0_209 = arith.constant 0 : index
    %291 = vector.load %arg7[%c8_207, %c0_208, %c0_209] : memref<9x128x128xbf16, #tpu.memory_space<vmem>>, vector<1x128x128xbf16>
    %292 = vector.shape_cast %291 : vector<1x128x128xbf16> to vector<128x128xbf16>
    %cst_210 = arith.constant dense<0.000000e+00> : vector<64x128xf32>
    %293 = tpu.matmul %290, %292, %cst_210 {dimension_numbers = #tpu.dot_dimension_numbers<[1], [0], [0], [1], [0, 0, 1, 1], [], []>} : vector<64x128xbf16>, vector<128x128xbf16>, vector<64x128xf32> -> vector<64x128xf32>
    %294 = arith.addf %287, %293 : vector<64x128xf32>
    %c3_211 = arith.constant 3 : index
    %c0_212 = arith.constant 0 : index
    %c0_213 = arith.constant 0 : index
    %c0_214 = arith.constant 0 : index
    %295 = vector.load %arg10[%c3_211, %c0_212, %c0_213, %c0_214] : memref<4x9x9x128xf32, #tpu.memory_space<vmem>>, vector<1x8x8x128xf32>
    %296 = vector.shape_cast %295 : vector<1x8x8x128xf32> to vector<8x8x128xf32>
    %297 = vector.shape_cast %296 : vector<8x8x128xf32> to vector<64x128xf32>
    %298 = arith.truncf %297 : vector<64x128xf32> to vector<64x128xbf16>
    %c0_215 = arith.constant 0 : index
    %c0_216 = arith.constant 0 : index
    %299 = vector.load %arg8[%c0_215, %c0_216] : memref<128x128xbf16, #tpu.memory_space<vmem>>, vector<128x128xbf16>
    %cst_217 = arith.constant dense<0.000000e+00> : vector<64x128xf32>
    %300 = tpu.matmul %298, %299, %cst_217 {dimension_numbers = #tpu.dot_dimension_numbers<[1], [0], [0], [1], [0, 0, 1, 1], [], []>} : vector<64x128xbf16>, vector<128x128xbf16>, vector<64x128xf32> -> vector<64x128xf32>
    %301 = arith.addf %294, %300 : vector<64x128xf32>
    %302 = vector.shape_cast %301 : vector<64x128xf32> to vector<8x8x128xf32>
    %cst_218 = arith.constant 0.000000e+00 : f32
    %303 = vector.broadcast %cst_218 : f32 to vector<1x10x10x128xf32>
    %c0_219 = arith.constant 0 : index
    %c0_220 = arith.constant 0 : index
    %c0_221 = arith.constant 0 : index
    %c0_222 = arith.constant 0 : index
    %304 = vector.load %arg9[%c0_219, %c0_220, %c0_221, %c0_222] : memref<1x10x10x128xf32, #tpu.memory_space<vmem>>, vector<1x10x10x128xf32>
    tpu.vector_store %arg9[%c0_219, %c0_220, %c0_221, %c0_222], %303 {strides = array<i32>} : memref<1x10x10x128xf32, #tpu.memory_space<vmem>>, vector<1x10x10x128xf32>,
    %c0_223 = arith.constant 0 : index
    %c1_224 = arith.constant 1 : index
    %c1_225 = arith.constant 1 : index
    %c0_226 = arith.constant 0 : index
    %305 = vector.load %arg9[%c0_223, %c1_224, %c1_225, %c0_226] : memref<1x10x10x128xf32, #tpu.memory_space<vmem>>, vector<1x8x8x128xf32>
    %306 = vector.shape_cast %305 : vector<1x8x8x128xf32> to vector<8x8x128xf32>
    %307 = vector.shape_cast %302 : vector<8x8x128xf32> to vector<1x8x8x128xf32>
    tpu.vector_store %arg9[%c0_223, %c1_224, %c1_225, %c0_226], %307 {strides = array<i32>} : memref<1x10x10x128xf32, #tpu.memory_space<vmem>>, vector<1x8x8x128xf32>,
    return
  }
  func.func @transform_0(%arg0: i32) -> (i32, i32, i32, i32) {
    %c0_i32 = arith.constant 0 : i32
    %c0_i32_0 = arith.constant 0 : i32
    %c0_i32_1 = arith.constant 0 : i32
    %c0_i32_2 = arith.constant 0 : i32
    return %arg0, %c0_i32, %c0_i32_0, %c0_i32_1 : i32, i32, i32, i32
  }
  func.func @transform_1(%arg0: i32) -> (i32, i32) {
    %c0_i32 = arith.constant 0 : i32
    %c0_i32_0 = arith.constant 0 : i32
    %c0_i32_1 = arith.constant 0 : i32
    return %c0_i32, %c0_i32_0 : i32, i32
  }
  func.func @transform_2(%arg0: i32) -> (i32, i32) {
    %c0_i32 = arith.constant 0 : i32
    %c0_i32_0 = arith.constant 0 : i32
    %c0_i32_1 = arith.constant 0 : i32
    return %c0_i32, %c0_i32_0 : i32, i32
  }
  func.func @transform_3(%arg0: i32) -> (i32, i32, i32) {
    %c0_i32 = arith.constant 0 : i32
    %c0_i32_0 = arith.constant 0 : i32
    %c0_i32_1 = arith.constant 0 : i32
    %c0_i32_2 = arith.constant 0 : i32
    return %c0_i32, %c0_i32_0, %c0_i32_1 : i32, i32, i32
  }
  func.func @transform_4(%arg0: i32) -> (i32, i32) {
    %c0_i32 = arith.constant 0 : i32
    %c0_i32_0 = arith.constant 0 : i32
    %c0_i32_1 = arith.constant 0 : i32
    return %c0_i32, %c0_i32_0 : i32, i32
  }
  func.func @transform_5(%arg0: i32) -> (i32, i32) {
    %c0_i32 = arith.constant 0 : i32
    %c0_i32_0 = arith.constant 0 : i32
    %c0_i32_1 = arith.constant 0 : i32
    return %c0_i32, %c0_i32_0 : i32, i32
  }
  func.func @transform_6(%arg0: i32) -> (i32, i32, i32) {
    %c0_i32 = arith.constant 0 : i32
    %c0_i32_0 = arith.constant 0 : i32
    %c0_i32_1 = arith.constant 0 : i32
    %c0_i32_2 = arith.constant 0 : i32
    return %c0_i32, %c0_i32_0, %c0_i32_1 : i32, i32, i32
  }
  func.func @transform_7(%arg0: i32) -> (i32, i32) {
    %c0_i32 = arith.constant 0 : i32
    %c0_i32_0 = arith.constant 0 : i32
    %c0_i32_1 = arith.constant 0 : i32
    return %c0_i32, %c0_i32_0 : i32, i32
  }
  func.func @transform_8(%arg0: i32) -> (i32, i32, i32, i32) {
    %c0_i32 = arith.constant 0 : i32
    %c0_i32_0 = arith.constant 0 : i32
    %c0_i32_1 = arith.constant 0 : i32
    %c0_i32_2 = arith.constant 0 : i32
    return %arg0, %c0_i32, %c0_i32_0, %c0_i32_1 : i32, i32, i32, i32
  }
}

</mosaic_0001>

<llo_original>
// kernel: tpu_custom_call.1
$region0: #{tpu_custom_call.1}
  #allocation0 [shape = 'u32[]', space=smem, size = 0x4, offset = 0x4, fixed_abs, tag = 'smem constant byte address 0x4 - core index']
  #allocation1 [shape = 'u32[72,128]{1,0:T(1,128)}', space=vmem, size = 0x9000, scoped, tag = 'internal scratch']
  #allocation2 [shape = 'f32[4,9,9,128]{3,2,1,0:T(8,128)}', space=vmem, size = 0x48000, scoped, tag = 'scratch operand']
  #allocation3 [shape = 'f32[10,10,128]{2,1,0:T(8,128)}', space=vmem, size = 0x14000, scoped, tag = 'scratch operand']
  %s0 = inlined_call_operand.vmem [shape: f32[8,9,9,128], index: 0, kind: input, shape index: {}]
  %s1 = inlined_call_operand.vmem [shape: f32[1,128], index: 1, kind: input, shape index: {}]
  %s2 = inlined_call_operand.vmem [shape: f32[1,128], index: 2, kind: input, shape index: {}]
  %s3 = inlined_call_operand.vmem [shape: bf16[9,128,128], index: 3, kind: input, shape index: {}]
  %s4 = inlined_call_operand.vmem [shape: f32[1,128], index: 4, kind: input, shape index: {}]
  %s5 = inlined_call_operand.vmem [shape: f32[1,128], index: 5, kind: input, shape index: {}]
  %s6 = inlined_call_operand.vmem [shape: bf16[9,128,128], index: 6, kind: input, shape index: {}]
  %s7 = inlined_call_operand.vmem [shape: bf16[128,128], index: 7, kind: input, shape index: {}]
  %s8 = inlined_call_operand.vmem [shape: f32[2,10,10,128], index: 8, kind: output, shape index: {}]
  %s9 = sld [smem:[#allocation0]]
  $region65: #{tpu_custom_call.1} parent=0
    _
  %s11 = ssub.s32 1, %s9
  %s12 = scalar_select 0, %s11, %s9
  loop: start=0, step=1, limit=4
  $region2: #{tpu_custom_call.1} parent=0 // loop_pre_header
    _
  $region3: #{tpu_custom_call.1} parent=0 // loop_header
    %s14 = sphi 0, %s18
    %p15 = scmp.ge.s32.totalorder %s14, 4
    %s24 = sphi 0, %s26
    %s27 = sphi 0, %s24
    %s28 = sphi 0, %s27
    %s44 = sphi 0, %s28
    %s48 = sphi 0, %s48
    %s50 = sphi 0, %s48
    %s51 = sphi 0, %s50
    %s65 = sphi 0, %s51
    %s69 = sphi 0, %s69
    %s71 = sphi 0, %s69
    %s72 = sphi 0, %s71
    %s86 = sphi 0, %s72
    %s90 = sphi 0, %s90
    %s92 = sphi 0, %s90
    %s93 = sphi 0, %s92
    %s107 = sphi 0, %s93
    %s111 = sphi 0, %s111
    %s113 = sphi 0, %s111
    %s114 = sphi 0, %s113
    %s128 = sphi 0, %s114
    %s132 = sphi 0, %s132
    %s134 = sphi 0, %s132
    %s135 = sphi 0, %s134
    %s149 = sphi 0, %s135
    %s153 = sphi 0, %s153
    %s155 = sphi 0, %s153
    %s156 = sphi 0, %s155
    %s170 = sphi 0, %s156
    %s174 = sphi 0, %s174
    %s176 = sphi 0, %s174
    %s177 = sphi 0, %s176
    %s191 = sphi 0, %s177
    %s197 = sphi 0, %s199
    %s200 = sphi 0, %s197
    %s201 = sphi 0, %s200
    %s217 = sphi 0, %s201
  $region4: #{tpu_custom_call.1} parent=0 // loop_header_branch
    %17 = sbr.rel (%p15) target = $region8
  $region5: #{tpu_custom_call.1} parent=0 // loop_body
    %s19 = ssub.s32 %s14, 1
    %s20 = ssub.s32 %s14, 2
    %s21 = sadd.s32 %s14, 1
    %s22 = ssub.s32 %s14, %s21
    %p23 = scmp.eq.s32.totalorder %s22, 0
    %s25 = sadd.s32 %s24, 1
    %s26 = scalar_select %p23, %s24, %s25
    %p29 = pneg %p23
    %p30 = scmp.eq.s32.totalorder %s14, 1
    %p31 = por %p29, %p30
    %p32 = scmp.ne.s32.totalorder %s24, %s27
    %p33 = scmp.eq.s32.totalorder %s14, 0
    %p34 = por %p32, %p33
    %p35 = scmp.ne.s32.totalorder %s24, %s27
    %p36 = scmp.eq.s32.totalorder %s19, 1
    %p37 = por %p35, %p36
    %p38 = scmp.ne.s32.totalorder %s27, %s28
    %p39 = scmp.eq.s32.totalorder %s19, 0
    %p40 = por %p38, %p39
    %p41 = scmp.ne.s32.totalorder %s27, %s28
    %p42 = scmp.eq.s32.totalorder %s20, 1
    %p43 = por %p41, %p42
    %p45 = scmp.ne.s32.totalorder %s28, %s44
    %p46 = scmp.eq.s32.totalorder %s20, 0
    %p47 = por %p45, %p46
    %s49 = sadd.s32 %s48, 1
    %p52 = scmp.eq.s32.totalorder %s14, 1
    %p53 = scmp.ne.s32.totalorder %s48, %s50
    %p54 = scmp.eq.s32.totalorder %s14, 0
    %p55 = por %p53, %p54
    %p56 = scmp.ne.s32.totalorder %s48, %s50
    %p57 = scmp.eq.s32.totalorder %s19, 1
    %p58 = por %p56, %p57
    %p59 = scmp.ne.s32.totalorder %s50, %s51
    %p60 = scmp.eq.s32.totalorder %s19, 0
    %p61 = por %p59, %p60
    %p62 = scmp.ne.s32.totalorder %s50, %s51
    %p63 = scmp.eq.s32.totalorder %s20, 1
    %p64 = por %p62, %p63
    %p66 = scmp.ne.s32.totalorder %s51, %s65
    %p67 = scmp.eq.s32.totalorder %s20, 0
    %p68 = por %p66, %p67
    %s70 = sadd.s32 %s69, 1
    %p73 = scmp.eq.s32.totalorder %s14, 1
    %p74 = scmp.ne.s32.totalorder %s69, %s71
    %p75 = scmp.eq.s32.totalorder %s14, 0
    %p76 = por %p74, %p75
    %p77 = scmp.ne.s32.totalorder %s69, %s71
    %p78 = scmp.eq.s32.totalorder %s19, 1
    %p79 = por %p77, %p78
    %p80 = scmp.ne.s32.totalorder %s71, %s72
    %p81 = scmp.eq.s32.totalorder %s19, 0
    %p82 = por %p80, %p81
    %p83 = scmp.ne.s32.totalorder %s71, %s72
    %p84 = scmp.eq.s32.totalorder %s20, 1
    %p85 = por %p83, %p84
    %p87 = scmp.ne.s32.totalorder %s72, %s86
    %p88 = scmp.eq.s32.totalorder %s20, 0
    %p89 = por %p87, %p88
    %s91 = sadd.s32 %s90, 1
    %p94 = scmp.eq.s32.totalorder %s14, 1
    %p95 = scmp.ne.s32.totalorder %s90, %s92
    %p96 = scmp.eq.s32.totalorder %s14, 0
    %p97 = por %p95, %p96
    %p98 = scmp.ne.s32.totalorder %s90, %s92
    %p99 = scmp.eq.s32.totalorder %s19, 1
    %p100 = por %p98, %p99
    %p101 = scmp.ne.s32.totalorder %s92, %s93
    %p102 = scmp.eq.s32.totalorder %s19, 0
    %p103 = por %p101, %p102
    %p104 = scmp.ne.s32.totalorder %s92, %s93
    %p105 = scmp.eq.s32.totalorder %s20, 1
    %p106 = por %p104, %p105
    %p108 = scmp.ne.s32.totalorder %s93, %s107
    %p109 = scmp.eq.s32.totalorder %s20, 0
    %p110 = por %p108, %p109
    %s112 = sadd.s32 %s111, 1
    %p115 = scmp.eq.s32.totalorder %s14, 1
    %p116 = scmp.ne.s32.totalorder %s111, %s113
    %p117 = scmp.eq.s32.totalorder %s14, 0
    %p118 = por %p116, %p117
    %p119 = scmp.ne.s32.totalorder %s111, %s113
    %p120 = scmp.eq.s32.totalorder %s19, 1
    %p121 = por %p119, %p120
    %p122 = scmp.ne.s32.totalorder %s113, %s114
    %p123 = scmp.eq.s32.totalorder %s19, 0
    %p124 = por %p122, %p123
    %p125 = scmp.ne.s32.totalorder %s113, %s114
    %p126 = scmp.eq.s32.totalorder %s20, 1
    %p127 = por %p125, %p126
    %p129 = scmp.ne.s32.totalorder %s114, %s128
    %p130 = scmp.eq.s32.totalorder %s20, 0
    %p131 = por %p129, %p130
    %s133 = sadd.s32 %s132, 1
    %p136 = scmp.eq.s32.totalorder %s14, 1
    %p137 = scmp.ne.s32.totalorder %s132, %s134
    %p138 = scmp.eq.s32.totalorder %s14, 0
    %p139 = por %p137, %p138
    %p140 = scmp.ne.s32.totalorder %s132, %s134
    %p141 = scmp.eq.s32.totalorder %s19, 1
    %p142 = por %p140, %p141
    %p143 = scmp.ne.s32.totalorder %s134, %s135
    %p144 = scmp.eq.s32.totalorder %s19, 0
    %p145 = por %p143, %p144
    %p146 = scmp.ne.s32.totalorder %s134, %s135
    %p147 = scmp.eq.s32.totalorder %s20, 1
    %p148 = por %p146, %p147
    %p150 = scmp.ne.s32.totalorder %s135, %s149
    %p151 = scmp.eq.s32.totalorder %s20, 0
    %p152 = por %p150, %p151
    %s154 = sadd.s32 %s153, 1
    %p157 = scmp.eq.s32.totalorder %s14, 1
    %p158 = scmp.ne.s32.totalorder %s153, %s155
    %p159 = scmp.eq.s32.totalorder %s14, 0
    %p160 = por %p158, %p159
    %p161 = scmp.ne.s32.totalorder %s153, %s155
    %p162 = scmp.eq.s32.totalorder %s19, 1
    %p163 = por %p161, %p162
    %p164 = scmp.ne.s32.totalorder %s155, %s156
    %p165 = scmp.eq.s32.totalorder %s19, 0
    %p166 = por %p164, %p165
    %p167 = scmp.ne.s32.totalorder %s155, %s156
    %p168 = scmp.eq.s32.totalorder %s20, 1
    %p169 = por %p167, %p168
    %p171 = scmp.ne.s32.totalorder %s156, %s170
    %p172 = scmp.eq.s32.totalorder %s20, 0
    %p173 = por %p171, %p172
    %s175 = sadd.s32 %s174, 1
    %p178 = scmp.eq.s32.totalorder %s14, 1
    %p179 = scmp.ne.s32.totalorder %s174, %s176
    %p180 = scmp.eq.s32.totalorder %s14, 0
    %p181 = por %p179, %p180
    %p182 = scmp.ne.s32.totalorder %s174, %s176
    %p183 = scmp.eq.s32.totalorder %s19, 1
    %p184 = por %p182, %p183
    %p185 = scmp.ne.s32.totalorder %s176, %s177
    %p186 = scmp.eq.s32.totalorder %s19, 0
    %p187 = por %p185, %p186
    %p188 = scmp.ne.s32.totalorder %s176, %s177
    %p189 = scmp.eq.s32.totalorder %s20, 1
    %p190 = por %p188, %p189
    %p192 = scmp.ne.s32.totalorder %s177, %s191
    %p193 = scmp.eq.s32.totalorder %s20, 0
    %p194 = por %p192, %p193
    %s195 = ssub.s32 %s14, %s21
    %p196 = scmp.eq.s32.totalorder %s195, 0
    %s198 = sadd.s32 %s197, 1
    %s199 = scalar_select %p196, %s197, %s198
    %p202 = pneg %p196
    %p203 = scmp.eq.s32.totalorder %s14, 1
    %p204 = por %p202, %p203
    %p205 = scmp.ne.s32.totalorder %s197, %s200
    %p206 = scmp.eq.s32.totalorder %s14, 0
    %p207 = por %p205, %p206
    %p208 = scmp.ne.s32.totalorder %s197, %s200
    %p209 = scmp.eq.s32.totalorder %s19, 1
    %p210 = por %p208, %p209
    %p211 = scmp.ne.s32.totalorder %s200, %s201
    %p212 = scmp.eq.s32.totalorder %s19, 0
    %p213 = por %p211, %p212
    %p214 = scmp.ne.s32.totalorder %s200, %s201
    %p215 = scmp.eq.s32.totalorder %s20, 1
    %p216 = por %p214, %p215
    %p218 = scmp.ne.s32.totalorder %s201, %s217
    %p219 = scmp.eq.s32.totalorder %s20, 0
    %p220 = por %p218, %p219
    %p221 = scmp.le.s32.totalorder 1, %s14
    %p222 = scmp.lt.s32.totalorder %s14, 3
    %p223 = pnand %p221, %p222
    %p224 = pneg %p223
    // Predicated region
    $region9: #{tpu_custom_call.1} parent=5 // pred_check
      _
    $region10: #{tpu_custom_call.1} parent=5 // pred_check_branch
      %226 = sbr.rel (%p223) target = $region12
    $region11: #{tpu_custom_call.1} parent=5 // pred_region
      %s227 = ssub.s32 %s14, 1
      // Predicated region
      $region13: #{tpu_custom_call.1} parent=11 // pred_check
        %p228 = pneg %p61
      $region14: #{tpu_custom_call.1} parent=11 // pred_check_branch
        %230 = sbr.rel (%p228) target = $region16
      $region15: #{tpu_custom_call.1} parent=11 // pred_region
        _
      $region16: #{tpu_custom_call.1} parent=11 // pred_fallthru
        _
      // Predicated region
      $region17: #{tpu_custom_call.1} parent=11 // pred_check
        %p231 = pneg %p82
      $region18: #{tpu_custom_call.1} parent=11 // pred_check_branch
        %233 = sbr.rel (%p231) target = $region20
      $region19: #{tpu_custom_call.1} parent=11 // pred_region
        _
      $region20: #{tpu_custom_call.1} parent=11 // pred_fallthru
        _
      // Predicated region
      $region21: #{tpu_custom_call.1} parent=11 // pred_check
        %p234 = pneg %p103
      $region22: #{tpu_custom_call.1} parent=11 // pred_check_branch
        %236 = sbr.rel (%p234) target = $region24
      $region23: #{tpu_custom_call.1} parent=11 // pred_region
        _
      $region24: #{tpu_custom_call.1} parent=11 // pred_fallthru
        _
      // Predicated region
      $region25: #{tpu_custom_call.1} parent=11 // pred_check
        %p237 = pneg %p124
      $region26: #{tpu_custom_call.1} parent=11 // pred_check_branch
        %239 = sbr.rel (%p237) target = $region28
      $region27: #{tpu_custom_call.1} parent=11 // pred_region
        _
      $region28: #{tpu_custom_call.1} parent=11 // pred_fallthru
        _
      // Predicated region
      $region29: #{tpu_custom_call.1} parent=11 // pred_check
        %p240 = pneg %p145
      $region30: #{tpu_custom_call.1} parent=11 // pred_check_branch
        %242 = sbr.rel (%p240) target = $region32
      $region31: #{tpu_custom_call.1} parent=11 // pred_region
        _
      $region32: #{tpu_custom_call.1} parent=11 // pred_fallthru
        _
      // Predicated region
      $region33: #{tpu_custom_call.1} parent=11 // pred_check
        %p243 = pneg %p166
      $region34: #{tpu_custom_call.1} parent=11 // pred_check_branch
        %245 = sbr.rel (%p243) target = $region36
      $region35: #{tpu_custom_call.1} parent=11 // pred_region
        _
      $region36: #{tpu_custom_call.1} parent=11 // pred_fallthru
        _
      // Predicated region
      $region37: #{tpu_custom_call.1} parent=11 // pred_check
        %p246 = pneg %p187
      $region38: #{tpu_custom_call.1} parent=11 // pred_check_branch
        %248 = sbr.rel (%p246) target = $region40
      $region39: #{tpu_custom_call.1} parent=11 // pred_region
        _
      $region40: #{tpu_custom_call.1} parent=11 // pred_fallthru
        _
    $region12: #{tpu_custom_call.1} parent=5 // pred_fallthru
      _
    %p249 = scmp.lt.s32.totalorder %s14, 2
    // Predicated region
    $region41: #{tpu_custom_call.1} parent=5 // pred_check
      %p250 = pneg %p249
    $region42: #{tpu_custom_call.1} parent=5 // pred_check_branch
      %252 = sbr.rel (%p250) target = $region44
    $region43: #{tpu_custom_call.1} parent=5 // pred_region
      // Predicated region
      $region45: #{tpu_custom_call.1} parent=43 // pred_check
        %p253 = pneg %p34
      $region46: #{tpu_custom_call.1} parent=43 // pred_check_branch
        %255 = sbr.rel (%p253) target = $region48
      $region47: #{tpu_custom_call.1} parent=43 // pred_region
        %s256 = smul.u32 4, %s14
        %p257 = scmp.lt.s32.totalorder %s256, 7
        %s258 = scalar_select %p257, %s256, 7
        %s259 = smul.addr %s258, 18
        %s260 = smul.addr %s259, 8
        %s261 = scalar_lea.vmem %s0, %s260
        %s262 = smul.u32 4, %s14
      $region48: #{tpu_custom_call.1} parent=43 // pred_fallthru
        _
    $region44: #{tpu_custom_call.1} parent=5 // pred_fallthru
      _
    %p263 = scmp.le.s32.totalorder 1, %s14
    %p264 = scmp.lt.s32.totalorder %s14, 3
    %p265 = pnand %p263, %p264
    %p266 = pneg %p265
    // Predicated region
    $region49: #{tpu_custom_call.1} parent=5 // pred_check
      _
    $region50: #{tpu_custom_call.1} parent=5 // pred_check_branch
      %268 = sbr.rel (%p265) target = $region52
    $region51: #{tpu_custom_call.1} parent=5 // pred_region
      %s269 = ssub.s32 %s14, 1
      %s270 = smul.u32 4, %s19
      %p271 = scmp.lt.s32.totalorder %s270, 7
      %s272 = scalar_select %p271, %s270, 7
      %s273 = smul.addr %s272, 18
      %s274 = smul.addr %s273, 8
      %s275 = scalar_lea.vmem %s0, %s274
      %p276 = pneg %p40
      %p277 = pneg %p37
      %p278 = pneg %p61
      %p279 = pneg %p58
      %p280 = pneg %p82
      %p281 = pneg %p79
      %p282 = pneg %p103
      %p283 = pneg %p100
      %p284 = pneg %p124
      %p285 = pneg %p121
      %p286 = pneg %p145
      %p287 = pneg %p142
      %p288 = pneg %p166
      %p289 = pneg %p163
      %p290 = pneg %p187
      %p291 = pneg %p184
      %p292 = pneg %p213
      %p293 = pneg %p210
      %p294 = scmp.lt.s32.totalorder %s19, 1
      %s295 = scalar_select %p294, %s19, 1
      %s296 = smul.addr %s295, 20
      %s297 = smul.addr %s296, 8
      %s298 = scalar_lea.vmem %s8, %s297
      %s299 = smul.u32 4, %s19
      %p300 = scmp.lt.s32.totalorder %s299, 7
      %s301 = scalar_select %p300, %s299, 7
      %s302 = smul.addr %s301, 18
      %s303 = smul.addr %s302, 8
      %s304 = scalar_lea.vmem %s0, %s303
      %s305 = smul.u32 4, %s19
      %p306 = scmp.lt.s32.totalorder %s19, 1
      %s307 = scalar_select %p306, %s19, 1
      %s308 = smul.addr %s307, 20
      %s309 = smul.addr %s308, 8
      %s310 = scalar_lea.vmem %s8, %s309
      %v311 = vld [vmem:[%s1] sm:$0x1]
      %v312 = vld [vmem:[%s2] sm:$0x1]
      %v313 = vld [vmem:[%s304] sm:$0xff]
      %v314 = vld [vmem:[%s304 + $0x8] sm:$0x1]
      %v315 = vld [vmem:[%s304 + $0x10] sm:$0xff]
      %v316 = vld [vmem:[%s304 + $0x18] sm:$0x1]
      %v317 = vld [vmem:[%s304 + $0x20] sm:$0xff]
      %v318 = vld [vmem:[%s304 + $0x28] sm:$0x1]
      %v319 = vld [vmem:[%s304 + $0x30] sm:$0xff]
      %v320 = vld [vmem:[%s304 + $0x38] sm:$0x1]
      %v321 = vld [vmem:[%s304 + $0x40] sm:$0xff]
      %v322 = vld [vmem:[%s304 + $0x48] sm:$0x1]
      %v323 = vld [vmem:[%s304 + $0x50] sm:$0xff]
      %v324 = vld [vmem:[%s304 + $0x58] sm:$0x1]
      %v325 = vld [vmem:[%s304 + $0x60] sm:$0xff]
      %v326 = vld [vmem:[%s304 + $0x68] sm:$0x1]
      %v327 = vld [vmem:[%s304 + $0x70] sm:$0xff]
      %v328 = vld [vmem:[%s304 + $0x78] sm:$0x1]
      %v329 = vld [vmem:[%s304 + $0x80] sm:$0xff]
      %v330 = vld [vmem:[%s304 + $0x88] sm:$0x1]
      %v331 = vlaneseq
      %v332 = vshrl.u32 %v331, 7
      %v333 = vadd.s32 %v332, 8
      %v334 = vmul.u32 %v332, 2
      %v335 = vmul.u32 %v333, 2
      %vm336 = vcmp.ge.s32.totalorder %v334, 1
      %vm337 = vcmp.ge.s32.totalorder %v335, 1
      %vm338 = vmand 0, %vm336
      %vm339 = vmand 0, %vm337
      %vm340 = vmand 1, %vm336
      %vm341 = vmand 1, %vm337
      %vm342 = vcmp.le.s32.totalorder %v334, 16
      %vm343 = vcmp.le.s32.totalorder %v335, 16
      %vm344 = vmand %vm338, %vm342
      %vm345 = vmand %vm339, %vm343
      %vm346 = vmand %vm340, %vm342
      %vm347 = vmand %vm341, %vm343
      %v349 = vperm.slane %v311, 0
      %v351 = vmul.f32 %v313, %v349
      %v352 = vmul.f32 %v314, %v349
      %v353 = vmul.f32 %v315, %v349
      %v354 = vmul.f32 %v316, %v349
      %v355 = vmul.f32 %v317, %v349
      %v356 = vmul.f32 %v318, %v349
      %v357 = vmul.f32 %v319, %v349
      %v358 = vmul.f32 %v320, %v349
      %v359 = vmul.f32 %v321, %v349
      %v360 = vmul.f32 %v322, %v349
      %v361 = vmul.f32 %v323, %v349
      %v362 = vmul.f32 %v324, %v349
      %v363 = vmul.f32 %v325, %v349
      %v364 = vmul.f32 %v326, %v349
      %v365 = vmul.f32 %v327, %v349
      %v366 = vmul.f32 %v328, %v349
      %v367 = vmul.f32 %v329, %v349
      %v368 = vmul.f32 %v330, %v349
      %v370 = vperm.slane %v312, 0
      %v372 = vadd.f32 %v351, %v370
      %v373 = vadd.f32 %v352, %v370
      %v374 = vadd.f32 %v353, %v370
      %v375 = vadd.f32 %v354, %v370
      %v376 = vadd.f32 %v355, %v370
      %v377 = vadd.f32 %v356, %v370
      %v378 = vadd.f32 %v357, %v370
      %v379 = vadd.f32 %v358, %v370
      %v380 = vadd.f32 %v359, %v370
      %v381 = vadd.f32 %v360, %v370
      %v382 = vadd.f32 %v361, %v370
      %v383 = vadd.f32 %v362, %v370
      %v384 = vadd.f32 %v363, %v370
      %v385 = vadd.f32 %v364, %v370
      %v386 = vadd.f32 %v365, %v370
      %v387 = vadd.f32 %v366, %v370
      %v388 = vadd.f32 %v367, %v370
      %v389 = vadd.f32 %v368, %v370
      %v390 = vmax.f32 %v372, 0.0
      %v391 = vmax.f32 %v373, 0.0
      %v392 = vmax.f32 %v374, 0.0
      %v393 = vmax.f32 %v375, 0.0
      %v394 = vmax.f32 %v376, 0.0
      %v395 = vmax.f32 %v377, 0.0
      %v396 = vmax.f32 %v378, 0.0
      %v397 = vmax.f32 %v379, 0.0
      %v398 = vmax.f32 %v380, 0.0
      %v399 = vmax.f32 %v381, 0.0
      %v400 = vmax.f32 %v382, 0.0
      %v401 = vmax.f32 %v383, 0.0
      %v402 = vmax.f32 %v384, 0.0
      %v403 = vmax.f32 %v385, 0.0
      %v404 = vmax.f32 %v386, 0.0
      %v405 = vmax.f32 %v387, 0.0
      %v406 = vmax.f32 %v388, 0.0
      %v407 = vmax.f32 %v389, 0.0
      %v408 = vsel %vm344, %v390, 0.0
      %v409 = vsel %vm345, %v391, 0.0
      %v410 = vsel %vm346, %v392, 0.0
      %v411 = vsel %vm347, %v393, 0.0
      %v412 = vsel %vm346, %v394, 0.0
      %v413 = vsel %vm347, %v395, 0.0
      %v414 = vsel %vm346, %v396, 0.0
      %v415 = vsel %vm347, %v397, 0.0
      %v416 = vsel %vm346, %v398, 0.0
      %v417 = vsel %vm347, %v399, 0.0
      %v418 = vsel %vm346, %v400, 0.0
      %v419 = vsel %vm347, %v401, 0.0
      %v420 = vsel %vm346, %v402, 0.0
      %v421 = vsel %vm347, %v403, 0.0
      %v422 = vsel %vm346, %v404, 0.0
      %v423 = vsel %vm347, %v405, 0.0
      %v424 = vsel %vm346, %v406, 0.0
      %v425 = vsel %vm347, %v407, 0.0
      %426 = vst [vmem:[#allocation2] sm:$0xff] %v408
      %427 = vst [vmem:[#allocation2 + $0x8] sm:$0x1] %v409
      %428 = vst [vmem:[#allocation2 + $0x10] sm:$0xff] %v410
      %429 = vst [vmem:[#allocation2 + $0x18] sm:$0x1] %v411
      %430 = vst [vmem:[#allocation2 + $0x20] sm:$0xff] %v412
      %431 = vst [vmem:[#allocation2 + $0x28] sm:$0x1] %v413
      %432 = vst [vmem:[#allocation2 + $0x30] sm:$0xff] %v414
      %433 = vst [vmem:[#allocation2 + $0x38] sm:$0x1] %v415
      %434 = vst [vmem:[#allocation2 + $0x40] sm:$0xff] %v416
      %435 = vst [vmem:[#allocation2 + $0x48] sm:$0x1] %v417
      %436 = vst [vmem:[#allocation2 + $0x50] sm:$0xff] %v418
      %437 = vst [vmem:[#allocation2 + $0x58] sm:$0x1] %v419
      %438 = vst [vmem:[#allocation2 + $0x60] sm:$0xff] %v420
      %439 = vst [vmem:[#allocation2 + $0x68] sm:$0x1] %v421
      %440 = vst [vmem:[#allocation2 + $0x70] sm:$0xff] %v422
      %441 = vst [vmem:[#allocation2 + $0x78] sm:$0x1] %v423
      %442 = vst [vmem:[#allocation2 + $0x80] sm:$0xff] %v424
      %443 = vst [vmem:[#allocation2 + $0x88] sm:$0x1] %v425
      %s444 = scalar_lea.vmem %s304, 144
      %v445 = vld [vmem:[%s444] sm:$0xff]
      %v446 = vld [vmem:[%s444 + $0x8] sm:$0x1]
      %v447 = vld [vmem:[%s444 + $0x10] sm:$0xff]
      %v448 = vld [vmem:[%s444 + $0x18] sm:$0x1]
      %v449 = vld [vmem:[%s444 + $0x20] sm:$0xff]
      %v450 = vld [vmem:[%s444 + $0x28] sm:$0x1]
      %v451 = vld [vmem:[%s444 + $0x30] sm:$0xff]
      %v452 = vld [vmem:[%s444 + $0x38] sm:$0x1]
      %v453 = vld [vmem:[%s444 + $0x40] sm:$0xff]
      %v454 = vld [vmem:[%s444 + $0x48] sm:$0x1]
      %v455 = vld [vmem:[%s444 + $0x50] sm:$0xff]
      %v456 = vld [vmem:[%s444 + $0x58] sm:$0x1]
      %v457 = vld [vmem:[%s444 + $0x60] sm:$0xff]
      %v458 = vld [vmem:[%s444 + $0x68] sm:$0x1]
      %v459 = vld [vmem:[%s444 + $0x70] sm:$0xff]
      %v460 = vld [vmem:[%s444 + $0x78] sm:$0x1]
      %v461 = vld [vmem:[%s444 + $0x80] sm:$0xff]
      %v462 = vld [vmem:[%s444 + $0x88] sm:$0x1]
      %v463 = vadd.s32 %v334, 1
      %v464 = vadd.s32 %v335, 1
      %vm465 = vcmp.ge.s32.totalorder %v463, 1
      %vm466 = vcmp.ge.s32.totalorder %v464, 1
      %vm467 = vmand 0, %vm465
      %vm468 = vmand 0, %vm466
      %vm469 = vmand 1, %vm465
      %vm470 = vmand 1, %vm466
      %vm471 = vcmp.le.s32.totalorder %v463, 16
      %vm472 = vcmp.le.s32.totalorder %v464, 16
      %vm473 = vmand %vm467, %vm471
      %vm474 = vmand %vm468, %vm472
      %vm475 = vmand %vm469, %vm471
      %vm476 = vmand %vm470, %vm472
      %v477 = vmul.f32 %v445, %v349
      %v478 = vmul.f32 %v446, %v349
      %v479 = vmul.f32 %v447, %v349
      %v480 = vmul.f32 %v448, %v349
      %v481 = vmul.f32 %v449, %v349
      %v482 = vmul.f32 %v450, %v349
      %v483 = vmul.f32 %v451, %v349
      %v484 = vmul.f32 %v452, %v349
      %v485 = vmul.f32 %v453, %v349
      %v486 = vmul.f32 %v454, %v349
      %v487 = vmul.f32 %v455, %v349
      %v488 = vmul.f32 %v456, %v349
      %v489 = vmul.f32 %v457, %v349
      %v490 = vmul.f32 %v458, %v349
      %v491 = vmul.f32 %v459, %v349
      %v492 = vmul.f32 %v460, %v349
      %v493 = vmul.f32 %v461, %v349
      %v494 = vmul.f32 %v462, %v349
      %v495 = vadd.f32 %v477, %v370
      %v496 = vadd.f32 %v478, %v370
      %v497 = vadd.f32 %v479, %v370
      %v498 = vadd.f32 %v480, %v370
      %v499 = vadd.f32 %v481, %v370
      %v500 = vadd.f32 %v482, %v370
      %v501 = vadd.f32 %v483, %v370
      %v502 = vadd.f32 %v484, %v370
      %v503 = vadd.f32 %v485, %v370
      %v504 = vadd.f32 %v486, %v370
      %v505 = vadd.f32 %v487, %v370
      %v506 = vadd.f32 %v488, %v370
      %v507 = vadd.f32 %v489, %v370
      %v508 = vadd.f32 %v490, %v370
      %v509 = vadd.f32 %v491, %v370
      %v510 = vadd.f32 %v492, %v370
      %v511 = vadd.f32 %v493, %v370
      %v512 = vadd.f32 %v494, %v370
      %v513 = vmax.f32 %v495, 0.0
      %v514 = vmax.f32 %v496, 0.0
      %v515 = vmax.f32 %v497, 0.0
      %v516 = vmax.f32 %v498, 0.0
      %v517 = vmax.f32 %v499, 0.0
      %v518 = vmax.f32 %v500, 0.0
      %v519 = vmax.f32 %v501, 0.0
      %v520 = vmax.f32 %v502, 0.0
      %v521 = vmax.f32 %v503, 0.0
      %v522 = vmax.f32 %v504, 0.0
      %v523 = vmax.f32 %v505, 0.0
      %v524 = vmax.f32 %v506, 0.0
      %v525 = vmax.f32 %v507, 0.0
      %v526 = vmax.f32 %v508, 0.0
      %v527 = vmax.f32 %v509, 0.0
      %v528 = vmax.f32 %v510, 0.0
      %v529 = vmax.f32 %v511, 0.0
      %v530 = vmax.f32 %v512, 0.0
      %v531 = vsel %vm473, %v513, 0.0
      %v532 = vsel %vm474, %v514, 0.0
      %v533 = vsel %vm475, %v515, 0.0
      %v534 = vsel %vm476, %v516, 0.0
      %v535 = vsel %vm475, %v517, 0.0
      %v536 = vsel %vm476, %v518, 0.0
      %v537 = vsel %vm475, %v519, 0.0
      %v538 = vsel %vm476, %v520, 0.0
      %v539 = vsel %vm475, %v521, 0.0
      %v540 = vsel %vm476, %v522, 0.0
      %v541 = vsel %vm475, %v523, 0.0
      %v542 = vsel %vm476, %v524, 0.0
      %v543 = vsel %vm475, %v525, 0.0
      %v544 = vsel %vm476, %v526, 0.0
      %v545 = vsel %vm475, %v527, 0.0
      %v546 = vsel %vm476, %v528, 0.0
      %v547 = vsel %vm475, %v529, 0.0
      %v548 = vsel %vm476, %v530, 0.0
      %s549 = scalar_lea.vmem [#allocation2], 144
      %550 = vst [vmem:[%s549] sm:$0xff] %v531
      %551 = vst [vmem:[%s549 + $0x8] sm:$0x1] %v532
      %552 = vst [vmem:[%s549 + $0x10] sm:$0xff] %v533
      %553 = vst [vmem:[%s549 + $0x18] sm:$0x1] %v534
      %554 = vst [vmem:[%s549 + $0x20] sm:$0xff] %v535
      %555 = vst [vmem:[%s549 + $0x28] sm:$0x1] %v536
      %556 = vst [vmem:[%s549 + $0x30] sm:$0xff] %v537
      %557 = vst [vmem:[%s549 + $0x38] sm:$0x1] %v538
      %558 = vst [vmem:[%s549 + $0x40] sm:$0xff] %v539
      %559 = vst [vmem:[%s549 + $0x48] sm:$0x1] %v540
      %560 = vst [vmem:[%s549 + $0x50] sm:$0xff] %v541
      %561 = vst [vmem:[%s549 + $0x58] sm:$0x1] %v542
      %562 = vst [vmem:[%s549 + $0x60] sm:$0xff] %v543
      %563 = vst [vmem:[%s549 + $0x68] sm:$0x1] %v544
      %564 = vst [vmem:[%s549 + $0x70] sm:$0xff] %v545
      %565 = vst [vmem:[%s549 + $0x78] sm:$0x1] %v546
      %566 = vst [vmem:[%s549 + $0x80] sm:$0xff] %v547
      %567 = vst [vmem:[%s549 + $0x88] sm:$0x1] %v548
      %s568 = scalar_lea.vmem %s304, 288
      %v569 = vld [vmem:[%s568] sm:$0xff]
      %v570 = vld [vmem:[%s568 + $0x8] sm:$0x1]
      %v571 = vld [vmem:[%s568 + $0x10] sm:$0xff]
      %v572 = vld [vmem:[%s568 + $0x18] sm:$0x1]
      %v573 = vld [vmem:[%s568 + $0x20] sm:$0xff]
      %v574 = vld [vmem:[%s568 + $0x28] sm:$0x1]
      %v575 = vld [vmem:[%s568 + $0x30] sm:$0xff]
      %v576 = vld [vmem:[%s568 + $0x38] sm:$0x1]
      %v577 = vld [vmem:[%s568 + $0x40] sm:$0xff]
      %v578 = vld [vmem:[%s568 + $0x48] sm:$0x1]
      %v579 = vld [vmem:[%s568 + $0x50] sm:$0xff]
      %v580 = vld [vmem:[%s568 + $0x58] sm:$0x1]
      %v581 = vld [vmem:[%s568 + $0x60] sm:$0xff]
      %v582 = vld [vmem:[%s568 + $0x68] sm:$0x1]
      %v583 = vld [vmem:[%s568 + $0x70] sm:$0xff]
      %v584 = vld [vmem:[%s568 + $0x78] sm:$0x1]
      %v585 = vld [vmem:[%s568 + $0x80] sm:$0xff]
      %v586 = vld [vmem:[%s568 + $0x88] sm:$0x1]
      %v587 = vmul.f32 %v569, %v349
      %v588 = vmul.f32 %v570, %v349
      %v589 = vmul.f32 %v571, %v349
      %v590 = vmul.f32 %v572, %v349
      %v591 = vmul.f32 %v573, %v349
      %v592 = vmul.f32 %v574, %v349
      %v593 = vmul.f32 %v575, %v349
      %v594 = vmul.f32 %v576, %v349
      %v595 = vmul.f32 %v577, %v349
      %v596 = vmul.f32 %v578, %v349
      %v597 = vmul.f32 %v579, %v349
      %v598 = vmul.f32 %v580, %v349
      %v599 = vmul.f32 %v581, %v349
      %v600 = vmul.f32 %v582, %v349
      %v601 = vmul.f32 %v583, %v349
      %v602 = vmul.f32 %v584, %v349
      %v603 = vmul.f32 %v585, %v349
      %v604 = vmul.f32 %v586, %v349
      %v605 = vadd.f32 %v587, %v370
      %v606 = vadd.f32 %v588, %v370
      %v607 = vadd.f32 %v589, %v370
      %v608 = vadd.f32 %v590, %v370
      %v609 = vadd.f32 %v591, %v370
      %v610 = vadd.f32 %v592, %v370
      %v611 = vadd.f32 %v593, %v370
      %v612 = vadd.f32 %v594, %v370
      %v613 = vadd.f32 %v595, %v370
      %v614 = vadd.f32 %v596, %v370
      %v615 = vadd.f32 %v597, %v370
      %v616 = vadd.f32 %v598, %v370
      %v617 = vadd.f32 %v599, %v370
      %v618 = vadd.f32 %v600, %v370
      %v619 = vadd.f32 %v601, %v370
      %v620 = vadd.f32 %v602, %v370
      %v621 = vadd.f32 %v603, %v370
      %v622 = vadd.f32 %v604, %v370
      %v623 = vmax.f32 %v605, 0.0
      %v624 = vmax.f32 %v606, 0.0
      %v625 = vmax.f32 %v607, 0.0
      %v626 = vmax.f32 %v608, 0.0
      %v627 = vmax.f32 %v609, 0.0
      %v628 = vmax.f32 %v610, 0.0
      %v629 = vmax.f32 %v611, 0.0
      %v630 = vmax.f32 %v612, 0.0
      %v631 = vmax.f32 %v613, 0.0
      %v632 = vmax.f32 %v614, 0.0
      %v633 = vmax.f32 %v615, 0.0
      %v634 = vmax.f32 %v616, 0.0
      %v635 = vmax.f32 %v617, 0.0
      %v636 = vmax.f32 %v618, 0.0
      %v637 = vmax.f32 %v619, 0.0
      %v638 = vmax.f32 %v620, 0.0
      %v639 = vmax.f32 %v621, 0.0
      %v640 = vmax.f32 %v622, 0.0
      %v641 = vsel %vm346, %v623, 0.0
      %v642 = vsel %vm347, %v624, 0.0
      %v643 = vsel %vm346, %v625, 0.0
      %v644 = vsel %vm347, %v626, 0.0
      %v645 = vsel %vm346, %v627, 0.0
      %v646 = vsel %vm347, %v628, 0.0
      %v647 = vsel %vm346, %v629, 0.0
      %v648 = vsel %vm347, %v630, 0.0
      %v649 = vsel %vm346, %v631, 0.0
      %v650 = vsel %vm347, %v632, 0.0
      %v651 = vsel %vm346, %v633, 0.0
      %v652 = vsel %vm347, %v634, 0.0
      %v653 = vsel %vm346, %v635, 0.0
      %v654 = vsel %vm347, %v636, 0.0
      %v655 = vsel %vm346, %v637, 0.0
      %v656 = vsel %vm347, %v638, 0.0
      %v657 = vsel %vm344, %v639, 0.0
      %v658 = vsel %vm345, %v640, 0.0
      %s659 = scalar_lea.vmem [#allocation2], 288
      %660 = vst [vmem:[%s659] sm:$0xff] %v641
      %661 = vst [vmem:[%s659 + $0x8] sm:$0x1] %v642
      %662 = vst [vmem:[%s659 + $0x10] sm:$0xff] %v643
      %663 = vst [vmem:[%s659 + $0x18] sm:$0x1] %v644
      %664 = vst [vmem:[%s659 + $0x20] sm:$0xff] %v645
      %665 = vst [vmem:[%s659 + $0x28] sm:$0x1] %v646
      %666 = vst [vmem:[%s659 + $0x30] sm:$0xff] %v647
      %667 = vst [vmem:[%s659 + $0x38] sm:$0x1] %v648
      %668 = vst [vmem:[%s659 + $0x40] sm:$0xff] %v649
      %669 = vst [vmem:[%s659 + $0x48] sm:$0x1] %v650
      %670 = vst [vmem:[%s659 + $0x50] sm:$0xff] %v651
      %671 = vst [vmem:[%s659 + $0x58] sm:$0x1] %v652
      %672 = vst [vmem:[%s659 + $0x60] sm:$0xff] %v653
      %673 = vst [vmem:[%s659 + $0x68] sm:$0x1] %v654
      %674 = vst [vmem:[%s659 + $0x70] sm:$0xff] %v655
      %675 = vst [vmem:[%s659 + $0x78] sm:$0x1] %v656
      %676 = vst [vmem:[%s659 + $0x80] sm:$0xff] %v657
      %677 = vst [vmem:[%s659 + $0x88] sm:$0x1] %v658
      %s678 = scalar_lea.vmem %s304, 432
      %v679 = vld [vmem:[%s678] sm:$0xff]
      %v680 = vld [vmem:[%s678 + $0x8] sm:$0x1]
      %v681 = vld [vmem:[%s678 + $0x10] sm:$0xff]
      %v682 = vld [vmem:[%s678 + $0x18] sm:$0x1]
      %v683 = vld [vmem:[%s678 + $0x20] sm:$0xff]
      %v684 = vld [vmem:[%s678 + $0x28] sm:$0x1]
      %v685 = vld [vmem:[%s678 + $0x30] sm:$0xff]
      %v686 = vld [vmem:[%s678 + $0x38] sm:$0x1]
      %v687 = vld [vmem:[%s678 + $0x40] sm:$0xff]
      %v688 = vld [vmem:[%s678 + $0x48] sm:$0x1]
      %v689 = vld [vmem:[%s678 + $0x50] sm:$0xff]
      %v690 = vld [vmem:[%s678 + $0x58] sm:$0x1]
      %v691 = vld [vmem:[%s678 + $0x60] sm:$0xff]
      %v692 = vld [vmem:[%s678 + $0x68] sm:$0x1]
      %v693 = vld [vmem:[%s678 + $0x70] sm:$0xff]
      %v694 = vld [vmem:[%s678 + $0x78] sm:$0x1]
      %v695 = vld [vmem:[%s678 + $0x80] sm:$0xff]
      %v696 = vld [vmem:[%s678 + $0x88] sm:$0x1]
      %v697 = vmul.f32 %v679, %v349
      %v698 = vmul.f32 %v680, %v349
      %v699 = vmul.f32 %v681, %v349
      %v700 = vmul.f32 %v682, %v349
      %v701 = vmul.f32 %v683, %v349
      %v702 = vmul.f32 %v684, %v349
      %v703 = vmul.f32 %v685, %v349
      %v704 = vmul.f32 %v686, %v349
      %v705 = vmul.f32 %v687, %v349
      %v706 = vmul.f32 %v688, %v349
      %v707 = vmul.f32 %v689, %v349
      %v708 = vmul.f32 %v690, %v349
      %v709 = vmul.f32 %v691, %v349
      %v710 = vmul.f32 %v692, %v349
      %v711 = vmul.f32 %v693, %v349
      %v712 = vmul.f32 %v694, %v349
      %v713 = vmul.f32 %v695, %v349
      %v714 = vmul.f32 %v696, %v349
      %v715 = vadd.f32 %v697, %v370
      %v716 = vadd.f32 %v698, %v370
      %v717 = vadd.f32 %v699, %v370
      %v718 = vadd.f32 %v700, %v370
      %v719 = vadd.f32 %v701, %v370
      %v720 = vadd.f32 %v702, %v370
      %v721 = vadd.f32 %v703, %v370
      %v722 = vadd.f32 %v704, %v370
      %v723 = vadd.f32 %v705, %v370
      %v724 = vadd.f32 %v706, %v370
      %v725 = vadd.f32 %v707, %v370
      %v726 = vadd.f32 %v708, %v370
      %v727 = vadd.f32 %v709, %v370
      %v728 = vadd.f32 %v710, %v370
      %v729 = vadd.f32 %v711, %v370
      %v730 = vadd.f32 %v712, %v370
      %v731 = vadd.f32 %v713, %v370
      %v732 = vadd.f32 %v714, %v370
      %v733 = vmax.f32 %v715, 0.0
      %v734 = vmax.f32 %v716, 0.0
      %v735 = vmax.f32 %v717, 0.0
      %v736 = vmax.f32 %v718, 0.0
      %v737 = vmax.f32 %v719, 0.0
      %v738 = vmax.f32 %v720, 0.0
      %v739 = vmax.f32 %v721, 0.0
      %v740 = vmax.f32 %v722, 0.0
      %v741 = vmax.f32 %v723, 0.0
      %v742 = vmax.f32 %v724, 0.0
      %v743 = vmax.f32 %v725, 0.0
      %v744 = vmax.f32 %v726, 0.0
      %v745 = vmax.f32 %v727, 0.0
      %v746 = vmax.f32 %v728, 0.0
      %v747 = vmax.f32 %v729, 0.0
      %v748 = vmax.f32 %v730, 0.0
      %v749 = vmax.f32 %v731, 0.0
      %v750 = vmax.f32 %v732, 0.0
      %v751 = vsel %vm475, %v733, 0.0
      %v752 = vsel %vm476, %v734, 0.0
      %v753 = vsel %vm475, %v735, 0.0
      %v754 = vsel %vm476, %v736, 0.0
      %v755 = vsel %vm475, %v737, 0.0
      %v756 = vsel %vm476, %v738, 0.0
      %v757 = vsel %vm475, %v739, 0.0
      %v758 = vsel %vm476, %v740, 0.0
      %v759 = vsel %vm475, %v741, 0.0
      %v760 = vsel %vm476, %v742, 0.0
      %v761 = vsel %vm475, %v743, 0.0
      %v762 = vsel %vm476, %v744, 0.0
      %v763 = vsel %vm475, %v745, 0.0
      %v764 = vsel %vm476, %v746, 0.0
      %v765 = vsel %vm475, %v747, 0.0
      %v766 = vsel %vm476, %v748, 0.0
      %v767 = vsel %vm473, %v749, 0.0
      %v768 = vsel %vm474, %v750, 0.0
      %s769 = scalar_lea.vmem [#allocation2], 432
      %770 = vst [vmem:[%s769] sm:$0xff] %v751
      %771 = vst [vmem:[%s769 + $0x8] sm:$0x1] %v752
      %772 = vst [vmem:[%s769 + $0x10] sm:$0xff] %v753
      %773 = vst [vmem:[%s769 + $0x18] sm:$0x1] %v754
      %774 = vst [vmem:[%s769 + $0x20] sm:$0xff] %v755
      %775 = vst [vmem:[%s769 + $0x28] sm:$0x1] %v756
      %776 = vst [vmem:[%s769 + $0x30] sm:$0xff] %v757
      %777 = vst [vmem:[%s769 + $0x38] sm:$0x1] %v758
      %778 = vst [vmem:[%s769 + $0x40] sm:$0xff] %v759
      %779 = vst [vmem:[%s769 + $0x48] sm:$0x1] %v760
      %780 = vst [vmem:[%s769 + $0x50] sm:$0xff] %v761
      %781 = vst [vmem:[%s769 + $0x58] sm:$0x1] %v762
      %782 = vst [vmem:[%s769 + $0x60] sm:$0xff] %v763
      %783 = vst [vmem:[%s769 + $0x68] sm:$0x1] %v764
      %784 = vst [vmem:[%s769 + $0x70] sm:$0xff] %v765
      %785 = vst [vmem:[%s769 + $0x78] sm:$0x1] %v766
      %786 = vst [vmem:[%s769 + $0x80] sm:$0xff] %v767
      %787 = vst [vmem:[%s769 + $0x88] sm:$0x1] %v768
      %v788 = vld [vmem:[#allocation2] sm:$0xff]
      %v789 = vld [vmem:[#allocation2 + $0x10] sm:$0xff]
      %v790 = vld [vmem:[#allocation2 + $0x20] sm:$0xff]
      %v791 = vld [vmem:[#allocation2 + $0x30] sm:$0xff]
      %v792 = vld [vmem:[#allocation2 + $0x40] sm:$0xff]
      %v793 = vld [vmem:[#allocation2 + $0x50] sm:$0xff]
      %v794 = vld [vmem:[#allocation2 + $0x60] sm:$0xff]
      %v795 = vld [vmem:[#allocation2 + $0x70] sm:$0xff]
      %v796 = vpack.c.bf16 %v789, %v788
      %v797 = vpack.c.bf16 %v791, %v790
      %v798 = vpack.c.bf16 %v793, %v792
      %v799 = vpack.c.bf16 %v795, %v794
      %v800 = vld [vmem:[%s3] sm:$0xf]
      %v801 = vld [vmem:[%s3 + $0x4] sm:$0xf]
      %v802 = vld [vmem:[%s3 + $0x8] sm:$0xf]
      %v803 = vld [vmem:[%s3 + $0xc] sm:$0xf]
      %v804 = vld [vmem:[%s3 + $0x10] sm:$0xf]
      %v805 = vld [vmem:[%s3 + $0x14] sm:$0xf]
      %v806 = vld [vmem:[%s3 + $0x18] sm:$0xf]
      %v807 = vld [vmem:[%s3 + $0x1c] sm:$0xf]
      %v808 = vld [vmem:[%s3 + $0x20] sm:$0xf]
      %v809 = vld [vmem:[%s3 + $0x24] sm:$0xf]
      %v810 = vld [vmem:[%s3 + $0x28] sm:$0xf]
      %v811 = vld [vmem:[%s3 + $0x2c] sm:$0xf]
      %v812 = vld [vmem:[%s3 + $0x30] sm:$0xf]
      %v813 = vld [vmem:[%s3 + $0x34] sm:$0xf]
      %v814 = vld [vmem:[%s3 + $0x38] sm:$0xf]
      %v815 = vld [vmem:[%s3 + $0x3c] sm:$0xf]
      %v816 = vld [vmem:[%s549] sm:$0xff]
      %v817 = vld [vmem:[%s549 + $0x10] sm:$0xff]
      %v818 = vld [vmem:[%s549 + $0x20] sm:$0xff]
      %v819 = vld [vmem:[%s549 + $0x30] sm:$0xff]
      %v820 = vld [vmem:[%s549 + $0x40] sm:$0xff]
      %v821 = vld [vmem:[%s549 + $0x50] sm:$0xff]
      %v822 = vld [vmem:[%s549 + $0x60] sm:$0xff]
      %v823 = vld [vmem:[%s549 + $0x70] sm:$0xff]
      %v824 = vpack.c.bf16 %v817, %v816
      %v825 = vpack.c.bf16 %v819, %v818
      %v826 = vpack.c.bf16 %v821, %v820
      %v827 = vpack.c.bf16 %v823, %v822
      %s828 = scalar_lea.vmem %s3, 64
      %v829 = vld [vmem:[%s828] sm:$0xf]
      %v830 = vld [vmem:[%s828 + $0x4] sm:$0xf]
      %v831 = vld [vmem:[%s828 + $0x8] sm:$0xf]
      %v832 = vld [vmem:[%s828 + $0xc] sm:$0xf]
      %v833 = vld [vmem:[%s828 + $0x10] sm:$0xf]
      %v834 = vld [vmem:[%s828 + $0x14] sm:$0xf]
      %v835 = vld [vmem:[%s828 + $0x18] sm:$0xf]
      %v836 = vld [vmem:[%s828 + $0x1c] sm:$0xf]
      %v837 = vld [vmem:[%s828 + $0x20] sm:$0xf]
      %v838 = vld [vmem:[%s828 + $0x24] sm:$0xf]
      %v839 = vld [vmem:[%s828 + $0x28] sm:$0xf]
      %v840 = vld [vmem:[%s828 + $0x2c] sm:$0xf]
      %v841 = vld [vmem:[%s828 + $0x30] sm:$0xf]
      %v842 = vld [vmem:[%s828 + $0x34] sm:$0xf]
      %v843 = vld [vmem:[%s828 + $0x38] sm:$0xf]
      %v844 = vld [vmem:[%s828 + $0x3c] sm:$0xf]
      %v861 = vunpack.c.l.b16 %v829
      %v862 = vunpack.c.l.b16 %v830
      %v863 = vunpack.c.l.b16 %v831
      %v864 = vunpack.c.l.b16 %v832
      %v865 = vunpack.c.l.b16 %v833
      %v866 = vunpack.c.l.b16 %v834
      %v867 = vunpack.c.l.b16 %v835
      %v868 = vunpack.c.l.b16 %v836
      %v869 = vunpack.c.l.b16 %v837
      %v870 = vunpack.c.l.b16 %v838
      %v871 = vunpack.c.l.b16 %v839
      %v872 = vunpack.c.l.b16 %v840
      %v873 = vunpack.c.l.b16 %v841
      %v874 = vunpack.c.l.b16 %v842
      %v875 = vunpack.c.l.b16 %v843
      %v876 = vunpack.c.l.b16 %v844
      %v877 = vpack.c.b16 %v862, %v861
      %v878 = vpack.c.b16 %v864, %v863
      %v879 = vpack.c.b16 %v866, %v865
      %v880 = vpack.c.b16 %v868, %v867
      %v881 = vpack.c.b16 %v870, %v869
      %v882 = vpack.c.b16 %v872, %v871
      %v883 = vpack.c.b16 %v874, %v873
      %v884 = vpack.c.b16 %v876, %v875
      %893 = vmatpush.bf16.msra.mxu0 %v884
      %894 = vmatpush.bf16.msra.mxu0 %v883
      %895 = vmatpush.bf16.msra.mxu0 %v882
      %896 = vmatpush.bf16.msra.mxu0 %v881
      %897 = vmatpush.bf16.msra.mxu0 %v880
      %898 = vmatpush.bf16.msra.mxu0 %v879
      %899 = vmatpush.bf16.msra.mxu0 %v878
      %900 = vmatpush.bf16.msra.mxu0 %v877
      %901 = vmatmul.bf16.gmra.mxu0 %v824
      %v902 = vpop.f32.mrf.mxu0
      %v903 = vadd.f32 0.0, %v902
      %v904 = vpop.f32.mrf.mxu0
      %v905 = vadd.f32 0.0, %v904
      %906 = vmatmul.bf16.gmra.mxu0 %v825
      %v907 = vpop.f32.mrf.mxu0
      %v908 = vadd.f32 0.0, %v907
      %v909 = vpop.f32.mrf.mxu0
      %v910 = vadd.f32 0.0, %v909
      %911 = vmatmul.bf16.gmra.mxu0 %v826
      %v912 = vpop.f32.mrf.mxu0
      %v913 = vadd.f32 0.0, %v912
      %v914 = vpop.f32.mrf.mxu0
      %v915 = vadd.f32 0.0, %v914
      %916 = vmatmul.bf16.gmra.mxu0 %v827
      %v917 = vpop.f32.mrf.mxu0
      %v918 = vadd.f32 0.0, %v917
      %v919 = vpop.f32.mrf.mxu0
      %v920 = vadd.f32 0.0, %v919
      %921 = vdwg.mxu0
      %v938 = vunpack.c.l.b16 %v800
      %v939 = vunpack.c.l.b16 %v801
      %v940 = vunpack.c.l.b16 %v802
      %v941 = vunpack.c.l.b16 %v803
      %v942 = vunpack.c.l.b16 %v804
      %v943 = vunpack.c.l.b16 %v805
      %v944 = vunpack.c.l.b16 %v806
      %v945 = vunpack.c.l.b16 %v807
      %v946 = vunpack.c.l.b16 %v808
      %v947 = vunpack.c.l.b16 %v809
      %v948 = vunpack.c.l.b16 %v810
      %v949 = vunpack.c.l.b16 %v811
      %v950 = vunpack.c.l.b16 %v812
      %v951 = vunpack.c.l.b16 %v813
      %v952 = vunpack.c.l.b16 %v814
      %v953 = vunpack.c.l.b16 %v815
      %v954 = vpack.c.b16 %v939, %v938
      %v955 = vpack.c.b16 %v941, %v940
      %v956 = vpack.c.b16 %v943, %v942
      %v957 = vpack.c.b16 %v945, %v944
      %v958 = vpack.c.b16 %v947, %v946
      %v959 = vpack.c.b16 %v949, %v948
      %v960 = vpack.c.b16 %v951, %v950
      %v961 = vpack.c.b16 %v953, %v952
      %970 = vmatpush.bf16.msra.mxu0 %v961
      %971 = vmatpush.bf16.msra.mxu0 %v960
      %972 = vmatpush.bf16.msra.mxu0 %v959
      %973 = vmatpush.bf16.msra.mxu0 %v958
      %974 = vmatpush.bf16.msra.mxu0 %v957
      %975 = vmatpush.bf16.msra.mxu0 %v956
      %976 = vmatpush.bf16.msra.mxu0 %v955
      %977 = vmatpush.bf16.msra.mxu0 %v954
      %978 = vmatmul.bf16.gmra.mxu0 %v796
      %v979 = vpop.f32.mrf.mxu0
      %v980 = vadd.f32 %v903, %v979
      %v981 = vpop.f32.mrf.mxu0
      %v982 = vadd.f32 %v905, %v981
      %983 = vmatmul.bf16.gmra.mxu0 %v797
      %v984 = vpop.f32.mrf.mxu0
      %v985 = vadd.f32 %v908, %v984
      %v986 = vpop.f32.mrf.mxu0
      %v987 = vadd.f32 %v910, %v986
      %988 = vmatmul.bf16.gmra.mxu0 %v798
      %v989 = vpop.f32.mrf.mxu0
      %v990 = vadd.f32 %v913, %v989
      %v991 = vpop.f32.mrf.mxu0
      %v992 = vadd.f32 %v915, %v991
      %993 = vmatmul.bf16.gmra.mxu0 %v799
      %v994 = vpop.f32.mrf.mxu0
      %v995 = vadd.f32 %v918, %v994
      %v996 = vpop.f32.mrf.mxu0
      %v997 = vadd.f32 %v920, %v996
      %998 = vdwg.mxu0
      %v999 = vld [vmem:[#allocation2 + $0x1] sm:$0xff]
      %v1000 = vld [vmem:[#allocation2 + $0x11] sm:$0xff]
      %v1001 = vld [vmem:[#allocation2 + $0x21] sm:$0xff]
      %v1002 = vld [vmem:[#allocation2 + $0x31] sm:$0xff]
      %v1003 = vld [vmem:[#allocation2 + $0x41] sm:$0xff]
      %v1004 = vld [vmem:[#allocation2 + $0x51] sm:$0xff]
      %v1005 = vld [vmem:[#allocation2 + $0x61] sm:$0xff]
      %v1006 = vld [vmem:[#allocation2 + $0x71] sm:$0xff]
      %v1007 = vpack.c.bf16 %v1000, %v999
      %v1008 = vpack.c.bf16 %v1002, %v1001
      %v1009 = vpack.c.bf16 %v1004, %v1003
      %v1010 = vpack.c.bf16 %v1006, %v1005
      %s1011 = scalar_lea.vmem %s3, 128
      %v1012 = vld [vmem:[%s1011] sm:$0xf]
      %v1013 = vld [vmem:[%s1011 + $0x4] sm:$0xf]
      %v1014 = vld [vmem:[%s1011 + $0x8] sm:$0xf]
      %v1015 = vld [vmem:[%s1011 + $0xc] sm:$0xf]
      %v1016 = vld [vmem:[%s1011 + $0x10] sm:$0xf]
      %v1017 = vld [vmem:[%s1011 + $0x14] sm:$0xf]
      %v1018 = vld [vmem:[%s1011 + $0x18] sm:$0xf]
      %v1019 = vld [vmem:[%s1011 + $0x1c] sm:$0xf]
      %v1020 = vld [vmem:[%s1011 + $0x20] sm:$0xf]
      %v1021 = vld [vmem:[%s1011 + $0x24] sm:$0xf]
      %v1022 = vld [vmem:[%s1011 + $0x28] sm:$0xf]
      %v1023 = vld [vmem:[%s1011 + $0x2c] sm:$0xf]
      %v1024 = vld [vmem:[%s1011 + $0x30] sm:$0xf]
      %v1025 = vld [vmem:[%s1011 + $0x34] sm:$0xf]
      %v1026 = vld [vmem:[%s1011 + $0x38] sm:$0xf]
      %v1027 = vld [vmem:[%s1011 + $0x3c] sm:$0xf]
      %v1044 = vunpack.c.l.b16 %v1012
      %v1045 = vunpack.c.l.b16 %v1013
      %v1046 = vunpack.c.l.b16 %v1014
      %v1047 = vunpack.c.l.b16 %v1015
      %v1048 = vunpack.c.l.b16 %v1016
      %v1049 = vunpack.c.l.b16 %v1017
      %v1050 = vunpack.c.l.b16 %v1018
      %v1051 = vunpack.c.l.b16 %v1019
      %v1052 = vunpack.c.l.b16 %v1020
      %v1053 = vunpack.c.l.b16 %v1021
      %v1054 = vunpack.c.l.b16 %v1022
      %v1055 = vunpack.c.l.b16 %v1023
      %v1056 = vunpack.c.l.b16 %v1024
      %v1057 = vunpack.c.l.b16 %v1025
      %v1058 = vunpack.c.l.b16 %v1026
      %v1059 = vunpack.c.l.b16 %v1027
      %v1060 = vpack.c.b16 %v1045, %v1044
      %v1061 = vpack.c.b16 %v1047, %v1046
      %v1062 = vpack.c.b16 %v1049, %v1048
      %v1063 = vpack.c.b16 %v1051, %v1050
      %v1064 = vpack.c.b16 %v1053, %v1052
      %v1065 = vpack.c.b16 %v1055, %v1054
      %v1066 = vpack.c.b16 %v1057, %v1056
      %v1067 = vpack.c.b16 %v1059, %v1058
      %1076 = vmatpush.bf16.msra.mxu0 %v1067
      %1077 = vmatpush.bf16.msra.mxu0 %v1066
      %1078 = vmatpush.bf16.msra.mxu0 %v1065
      %1079 = vmatpush.bf16.msra.mxu0 %v1064
      %1080 = vmatpush.bf16.msra.mxu0 %v1063
      %1081 = vmatpush.bf16.msra.mxu0 %v1062
      %1082 = vmatpush.bf16.msra.mxu0 %v1061
      %1083 = vmatpush.bf16.msra.mxu0 %v1060
      %1084 = vmatmul.bf16.gmra.mxu0 %v1007
      %v1085 = vpop.f32.mrf.mxu0
      %v1086 = vadd.f32 0.0, %v1085
      %v1087 = vpop.f32.mrf.mxu0
      %v1088 = vadd.f32 0.0, %v1087
      %1089 = vmatmul.bf16.gmra.mxu0 %v1008
      %v1090 = vpop.f32.mrf.mxu0
      %v1091 = vadd.f32 0.0, %v1090
      %v1092 = vpop.f32.mrf.mxu0
      %v1093 = vadd.f32 0.0, %v1092
      %1094 = vmatmul.bf16.gmra.mxu0 %v1009
      %v1095 = vpop.f32.mrf.mxu0
      %v1096 = vadd.f32 0.0, %v1095
      %v1097 = vpop.f32.mrf.mxu0
      %v1098 = vadd.f32 0.0, %v1097
      %1099 = vmatmul.bf16.gmra.mxu0 %v1010
      %v1100 = vpop.f32.mrf.mxu0
      %v1101 = vadd.f32 0.0, %v1100
      %v1102 = vpop.f32.mrf.mxu0
      %v1103 = vadd.f32 0.0, %v1102
      %1104 = vdwg.mxu0
      %v1105 = vadd.f32 %v980, %v1086
      %v1106 = vadd.f32 %v982, %v1088
      %v1107 = vadd.f32 %v985, %v1091
      %v1108 = vadd.f32 %v987, %v1093
      %v1109 = vadd.f32 %v990, %v1096
      %v1110 = vadd.f32 %v992, %v1098
      %v1111 = vadd.f32 %v995, %v1101
      %v1112 = vadd.f32 %v997, %v1103
      %v1113 = vld [vmem:[%s659] sm:$0xff]
      %v1114 = vld [vmem:[%s659 + $0x10] sm:$0xff]
      %v1115 = vld [vmem:[%s659 + $0x20] sm:$0xff]
      %v1116 = vld [vmem:[%s659 + $0x30] sm:$0xff]
      %v1117 = vld [vmem:[%s659 + $0x40] sm:$0xff]
      %v1118 = vld [vmem:[%s659 + $0x50] sm:$0xff]
      %v1119 = vld [vmem:[%s659 + $0x60] sm:$0xff]
      %v1120 = vld [vmem:[%s659 + $0x70] sm:$0xff]
      %v1121 = vpack.c.bf16 %v1114, %v1113
      %v1122 = vpack.c.bf16 %v1116, %v1115
      %v1123 = vpack.c.bf16 %v1118, %v1117
      %v1124 = vpack.c.bf16 %v1120, %v1119
      %s1125 = scalar_lea.vmem %s3, 192
      %v1126 = vld [vmem:[%s1125] sm:$0xf]
      %v1127 = vld [vmem:[%s1125 + $0x4] sm:$0xf]
      %v1128 = vld [vmem:[%s1125 + $0x8] sm:$0xf]
      %v1129 = vld [vmem:[%s1125 + $0xc] sm:$0xf]
      %v1130 = vld [vmem:[%s1125 + $0x10] sm:$0xf]
      %v1131 = vld [vmem:[%s1125 + $0x14] sm:$0xf]
      %v1132 = vld [vmem:[%s1125 + $0x18] sm:$0xf]
      %v1133 = vld [vmem:[%s1125 + $0x1c] sm:$0xf]
      %v1134 = vld [vmem:[%s1125 + $0x20] sm:$0xf]
      %v1135 = vld [vmem:[%s1125 + $0x24] sm:$0xf]
      %v1136 = vld [vmem:[%s1125 + $0x28] sm:$0xf]
      %v1137 = vld [vmem:[%s1125 + $0x2c] sm:$0xf]
      %v1138 = vld [vmem:[%s1125 + $0x30] sm:$0xf]
      %v1139 = vld [vmem:[%s1125 + $0x34] sm:$0xf]
      %v1140 = vld [vmem:[%s1125 + $0x38] sm:$0xf]
      %v1141 = vld [vmem:[%s1125 + $0x3c] sm:$0xf]
      %v1158 = vunpack.c.l.b16 %v1126
      %v1159 = vunpack.c.l.b16 %v1127
      %v1160 = vunpack.c.l.b16 %v1128
      %v1161 = vunpack.c.l.b16 %v1129
      %v1162 = vunpack.c.l.b16 %v1130
      %v1163 = vunpack.c.l.b16 %v1131
      %v1164 = vunpack.c.l.b16 %v1132
      %v1165 = vunpack.c.l.b16 %v1133
      %v1166 = vunpack.c.l.b16 %v1134
      %v1167 = vunpack.c.l.b16 %v1135
      %v1168 = vunpack.c.l.b16 %v1136
      %v1169 = vunpack.c.l.b16 %v1137
      %v1170 = vunpack.c.l.b16 %v1138
      %v1171 = vunpack.c.l.b16 %v1139
      %v1172 = vunpack.c.l.b16 %v1140
      %v1173 = vunpack.c.l.b16 %v1141
      %v1174 = vpack.c.b16 %v1159, %v1158
      %v1175 = vpack.c.b16 %v1161, %v1160
      %v1176 = vpack.c.b16 %v1163, %v1162
      %v1177 = vpack.c.b16 %v1165, %v1164
      %v1178 = vpack.c.b16 %v1167, %v1166
      %v1179 = vpack.c.b16 %v1169, %v1168
      %v1180 = vpack.c.b16 %v1171, %v1170
      %v1181 = vpack.c.b16 %v1173, %v1172
      %1190 = vmatpush.bf16.msra.mxu0 %v1181
      %1191 = vmatpush.bf16.msra.mxu0 %v1180
      %1192 = vmatpush.bf16.msra.mxu0 %v1179
      %1193 = vmatpush.bf16.msra.mxu0 %v1178
      %1194 = vmatpush.bf16.msra.mxu0 %v1177
      %1195 = vmatpush.bf16.msra.mxu0 %v1176
      %1196 = vmatpush.bf16.msra.mxu0 %v1175
      %1197 = vmatpush.bf16.msra.mxu0 %v1174
      %1198 = vmatmul.bf16.gmra.mxu0 %v1121
      %v1199 = vpop.f32.mrf.mxu0
      %v1200 = vadd.f32 0.0, %v1199
      %v1201 = vpop.f32.mrf.mxu0
      %v1202 = vadd.f32 0.0, %v1201
      %1203 = vmatmul.bf16.gmra.mxu0 %v1122
      %v1204 = vpop.f32.mrf.mxu0
      %v1205 = vadd.f32 0.0, %v1204
      %v1206 = vpop.f32.mrf.mxu0
      %v1207 = vadd.f32 0.0, %v1206
      %1208 = vmatmul.bf16.gmra.mxu0 %v1123
      %v1209 = vpop.f32.mrf.mxu0
      %v1210 = vadd.f32 0.0, %v1209
      %v1211 = vpop.f32.mrf.mxu0
      %v1212 = vadd.f32 0.0, %v1211
      %1213 = vmatmul.bf16.gmra.mxu0 %v1124
      %v1214 = vpop.f32.mrf.mxu0
      %v1215 = vadd.f32 0.0, %v1214
      %v1216 = vpop.f32.mrf.mxu0
      %v1217 = vadd.f32 0.0, %v1216
      %1218 = vdwg.mxu0
      %v1219 = vadd.f32 %v1105, %v1200
      %v1220 = vadd.f32 %v1106, %v1202
      %v1221 = vadd.f32 %v1107, %v1205
      %v1222 = vadd.f32 %v1108, %v1207
      %v1223 = vadd.f32 %v1109, %v1210
      %v1224 = vadd.f32 %v1110, %v1212
      %v1225 = vadd.f32 %v1111, %v1215
      %v1226 = vadd.f32 %v1112, %v1217
      %v1227 = vld [vmem:[%s769] sm:$0xff]
      %v1228 = vld [vmem:[%s769 + $0x10] sm:$0xff]
      %v1229 = vld [vmem:[%s769 + $0x20] sm:$0xff]
      %v1230 = vld [vmem:[%s769 + $0x30] sm:$0xff]
      %v1231 = vld [vmem:[%s769 + $0x40] sm:$0xff]
      %v1232 = vld [vmem:[%s769 + $0x50] sm:$0xff]
      %v1233 = vld [vmem:[%s769 + $0x60] sm:$0xff]
      %v1234 = vld [vmem:[%s769 + $0x70] sm:$0xff]
      %v1235 = vpack.c.bf16 %v1228, %v1227
      %v1236 = vpack.c.bf16 %v1230, %v1229
      %v1237 = vpack.c.bf16 %v1232, %v1231
      %v1238 = vpack.c.bf16 %v1234, %v1233
      %s1239 = scalar_lea.vmem %s3, 256
      %v1240 = vld [vmem:[%s1239] sm:$0xf]
      %v1241 = vld [vmem:[%s1239 + $0x4] sm:$0xf]
      %v1242 = vld [vmem:[%s1239 + $0x8] sm:$0xf]
      %v1243 = vld [vmem:[%s1239 + $0xc] sm:$0xf]
      %v1244 = vld [vmem:[%s1239 + $0x10] sm:$0xf]
      %v1245 = vld [vmem:[%s1239 + $0x14] sm:$0xf]
      %v1246 = vld [vmem:[%s1239 + $0x18] sm:$0xf]
      %v1247 = vld [vmem:[%s1239 + $0x1c] sm:$0xf]
      %v1248 = vld [vmem:[%s1239 + $0x20] sm:$0xf]
      %v1249 = vld [vmem:[%s1239 + $0x24] sm:$0xf]
      %v1250 = vld [vmem:[%s1239 + $0x28] sm:$0xf]
      %v1251 = vld [vmem:[%s1239 + $0x2c] sm:$0xf]
      %v1252 = vld [vmem:[%s1239 + $0x30] sm:$0xf]
      %v1253 = vld [vmem:[%s1239 + $0x34] sm:$0xf]
      %v1254 = vld [vmem:[%s1239 + $0x38] sm:$0xf]
      %v1255 = vld [vmem:[%s1239 + $0x3c] sm:$0xf]
      %v1272 = vunpack.c.l.b16 %v1240
      %v1273 = vunpack.c.l.b16 %v1241
      %v1274 = vunpack.c.l.b16 %v1242
      %v1275 = vunpack.c.l.b16 %v1243
      %v1276 = vunpack.c.l.b16 %v1244
      %v1277 = vunpack.c.l.b16 %v1245
      %v1278 = vunpack.c.l.b16 %v1246
      %v1279 = vunpack.c.l.b16 %v1247
      %v1280 = vunpack.c.l.b16 %v1248
      %v1281 = vunpack.c.l.b16 %v1249
      %v1282 = vunpack.c.l.b16 %v1250
      %v1283 = vunpack.c.l.b16 %v1251
      %v1284 = vunpack.c.l.b16 %v1252
      %v1285 = vunpack.c.l.b16 %v1253
      %v1286 = vunpack.c.l.b16 %v1254
      %v1287 = vunpack.c.l.b16 %v1255
      %v1288 = vpack.c.b16 %v1273, %v1272
      %v1289 = vpack.c.b16 %v1275, %v1274
      %v1290 = vpack.c.b16 %v1277, %v1276
      %v1291 = vpack.c.b16 %v1279, %v1278
      %v1292 = vpack.c.b16 %v1281, %v1280
      %v1293 = vpack.c.b16 %v1283, %v1282
      %v1294 = vpack.c.b16 %v1285, %v1284
      %v1295 = vpack.c.b16 %v1287, %v1286
      %1304 = vmatpush.bf16.msra.mxu0 %v1295
      %1305 = vmatpush.bf16.msra.mxu0 %v1294
      %1306 = vmatpush.bf16.msra.mxu0 %v1293
      %1307 = vmatpush.bf16.msra.mxu0 %v1292
      %1308 = vmatpush.bf16.msra.mxu0 %v1291
      %1309 = vmatpush.bf16.msra.mxu0 %v1290
      %1310 = vmatpush.bf16.msra.mxu0 %v1289
      %1311 = vmatpush.bf16.msra.mxu0 %v1288
      %1312 = vmatmul.bf16.gmra.mxu0 %v1235
      %v1313 = vpop.f32.mrf.mxu0
      %v1314 = vadd.f32 0.0, %v1313
      %v1315 = vpop.f32.mrf.mxu0
      %v1316 = vadd.f32 0.0, %v1315
      %1317 = vmatmul.bf16.gmra.mxu0 %v1236
      %v1318 = vpop.f32.mrf.mxu0
      %v1319 = vadd.f32 0.0, %v1318
      %v1320 = vpop.f32.mrf.mxu0
      %v1321 = vadd.f32 0.0, %v1320
      %1322 = vmatmul.bf16.gmra.mxu0 %v1237
      %v1323 = vpop.f32.mrf.mxu0
      %v1324 = vadd.f32 0.0, %v1323
      %v1325 = vpop.f32.mrf.mxu0
      %v1326 = vadd.f32 0.0, %v1325
      %1327 = vmatmul.bf16.gmra.mxu0 %v1238
      %v1328 = vpop.f32.mrf.mxu0
      %v1329 = vadd.f32 0.0, %v1328
      %v1330 = vpop.f32.mrf.mxu0
      %v1331 = vadd.f32 0.0, %v1330
      %1332 = vdwg.mxu0
      %v1333 = vadd.f32 %v1219, %v1314
      %v1334 = vadd.f32 %v1220, %v1316
      %v1335 = vadd.f32 %v1221, %v1319
      %v1336 = vadd.f32 %v1222, %v1321
      %v1337 = vadd.f32 %v1223, %v1324
      %v1338 = vadd.f32 %v1224, %v1326
      %v1339 = vadd.f32 %v1225, %v1329
      %v1340 = vadd.f32 %v1226, %v1331
      %v1341 = vld [vmem:[%s659 + $0x1] sm:$0xff]
      %v1342 = vld [vmem:[%s659 + $0x11] sm:$0xff]
      %v1343 = vld [vmem:[%s659 + $0x21] sm:$0xff]
      %v1344 = vld [vmem:[%s659 + $0x31] sm:$0xff]
      %v1345 = vld [vmem:[%s659 + $0x41] sm:$0xff]
      %v1346 = vld [vmem:[%s659 + $0x51] sm:$0xff]
      %v1347 = vld [vmem:[%s659 + $0x61] sm:$0xff]
      %v1348 = vld [vmem:[%s659 + $0x71] sm:$0xff]
      %v1349 = vpack.c.bf16 %v1342, %v1341
      %v1350 = vpack.c.bf16 %v1344, %v1343
      %v1351 = vpack.c.bf16 %v1346, %v1345
      %v1352 = vpack.c.bf16 %v1348, %v1347
      %s1353 = scalar_lea.vmem %s3, 320
      %v1354 = vld [vmem:[%s1353] sm:$0xf]
      %v1355 = vld [vmem:[%s1353 + $0x4] sm:$0xf]
      %v1356 = vld [vmem:[%s1353 + $0x8] sm:$0xf]
      %v1357 = vld [vmem:[%s1353 + $0xc] sm:$0xf]
      %v1358 = vld [vmem:[%s1353 + $0x10] sm:$0xf]
      %v1359 = vld [vmem:[%s1353 + $0x14] sm:$0xf]
      %v1360 = vld [vmem:[%s1353 + $0x18] sm:$0xf]
      %v1361 = vld [vmem:[%s1353 + $0x1c] sm:$0xf]
      %v1362 = vld [vmem:[%s1353 + $0x20] sm:$0xf]
      %v1363 = vld [vmem:[%s1353 + $0x24] sm:$0xf]
      %v1364 = vld [vmem:[%s1353 + $0x28] sm:$0xf]
      %v1365 = vld [vmem:[%s1353 + $0x2c] sm:$0xf]
      %v1366 = vld [vmem:[%s1353 + $0x30] sm:$0xf]
      %v1367 = vld [vmem:[%s1353 + $0x34] sm:$0xf]
      %v1368 = vld [vmem:[%s1353 + $0x38] sm:$0xf]
      %v1369 = vld [vmem:[%s1353 + $0x3c] sm:$0xf]
      %v1386 = vunpack.c.l.b16 %v1354
      %v1387 = vunpack.c.l.b16 %v1355
      %v1388 = vunpack.c.l.b16 %v1356
      %v1389 = vunpack.c.l.b16 %v1357
      %v1390 = vunpack.c.l.b16 %v1358
      %v1391 = vunpack.c.l.b16 %v1359
      %v1392 = vunpack.c.l.b16 %v1360
      %v1393 = vunpack.c.l.b16 %v1361
      %v1394 = vunpack.c.l.b16 %v1362
      %v1395 = vunpack.c.l.b16 %v1363
      %v1396 = vunpack.c.l.b16 %v1364
      %v1397 = vunpack.c.l.b16 %v1365
      %v1398 = vunpack.c.l.b16 %v1366
      %v1399 = vunpack.c.l.b16 %v1367
      %v1400 = vunpack.c.l.b16 %v1368
      %v1401 = vunpack.c.l.b16 %v1369
      %v1402 = vpack.c.b16 %v1387, %v1386
      %v1403 = vpack.c.b16 %v1389, %v1388
      %v1404 = vpack.c.b16 %v1391, %v1390
      %v1405 = vpack.c.b16 %v1393, %v1392
      %v1406 = vpack.c.b16 %v1395, %v1394
      %v1407 = vpack.c.b16 %v1397, %v1396
      %v1408 = vpack.c.b16 %v1399, %v1398
      %v1409 = vpack.c.b16 %v1401, %v1400
      %1418 = vmatpush.bf16.msra.mxu0 %v1409
      %1419 = vmatpush.bf16.msra.mxu0 %v1408
      %1420 = vmatpush.bf16.msra.mxu0 %v1407
      %1421 = vmatpush.bf16.msra.mxu0 %v1406
      %1422 = vmatpush.bf16.msra.mxu0 %v1405
      %1423 = vmatpush.bf16.msra.mxu0 %v1404
      %1424 = vmatpush.bf16.msra.mxu0 %v1403
      %1425 = vmatpush.bf16.msra.mxu0 %v1402
      %1426 = vmatmul.bf16.gmra.mxu0 %v1349
      %v1427 = vpop.f32.mrf.mxu0
      %v1428 = vadd.f32 0.0, %v1427
      %v1429 = vpop.f32.mrf.mxu0
      %v1430 = vadd.f32 0.0, %v1429
      %1431 = vmatmul.bf16.gmra.mxu0 %v1350
      %v1432 = vpop.f32.mrf.mxu0
      %v1433 = vadd.f32 0.0, %v1432
      %v1434 = vpop.f32.mrf.mxu0
      %v1435 = vadd.f32 0.0, %v1434
      %1436 = vmatmul.bf16.gmra.mxu0 %v1351
      %v1437 = vpop.f32.mrf.mxu0
      %v1438 = vadd.f32 0.0, %v1437
      %v1439 = vpop.f32.mrf.mxu0
      %v1440 = vadd.f32 0.0, %v1439
      %1441 = vmatmul.bf16.gmra.mxu0 %v1352
      %v1442 = vpop.f32.mrf.mxu0
      %v1443 = vadd.f32 0.0, %v1442
      %v1444 = vpop.f32.mrf.mxu0
      %v1445 = vadd.f32 0.0, %v1444
      %1446 = vdwg.mxu0
      %v1447 = vadd.f32 %v1333, %v1428
      %v1448 = vadd.f32 %v1334, %v1430
      %v1449 = vadd.f32 %v1335, %v1433
      %v1450 = vadd.f32 %v1336, %v1435
      %v1451 = vadd.f32 %v1337, %v1438
      %v1452 = vadd.f32 %v1338, %v1440
      %v1453 = vadd.f32 %v1339, %v1443
      %v1454 = vadd.f32 %v1340, %v1445
      %s1455 = scalar_lea.vmem [#allocation2], 16
      %v1456 = vld [vmem:[%s1455] sm:$0xff]
      %v1457 = vld [vmem:[%s1455 + $0x10] sm:$0xff]
      %v1458 = vld [vmem:[%s1455 + $0x20] sm:$0xff]
      %v1459 = vld [vmem:[%s1455 + $0x30] sm:$0xff]
      %v1460 = vld [vmem:[%s1455 + $0x40] sm:$0xff]
      %v1461 = vld [vmem:[%s1455 + $0x50] sm:$0xff]
      %v1462 = vld [vmem:[%s1455 + $0x60] sm:$0xff]
      %v1463 = vld [vmem:[%s1455 + $0x70] sm:$0xff]
      %v1464 = vpack.c.bf16 %v1457, %v1456
      %v1465 = vpack.c.bf16 %v1459, %v1458
      %v1466 = vpack.c.bf16 %v1461, %v1460
      %v1467 = vpack.c.bf16 %v1463, %v1462
      %s1468 = scalar_lea.vmem %s3, 384
      %v1469 = vld [vmem:[%s1468] sm:$0xf]
      %v1470 = vld [vmem:[%s1468 + $0x4] sm:$0xf]
      %v1471 = vld [vmem:[%s1468 + $0x8] sm:$0xf]
      %v1472 = vld [vmem:[%s1468 + $0xc] sm:$0xf]
      %v1473 = vld [vmem:[%s1468 + $0x10] sm:$0xf]
      %v1474 = vld [vmem:[%s1468 + $0x14] sm:$0xf]
      %v1475 = vld [vmem:[%s1468 + $0x18] sm:$0xf]
      %v1476 = vld [vmem:[%s1468 + $0x1c] sm:$0xf]
      %v1477 = vld [vmem:[%s1468 + $0x20] sm:$0xf]
      %v1478 = vld [vmem:[%s1468 + $0x24] sm:$0xf]
      %v1479 = vld [vmem:[%s1468 + $0x28] sm:$0xf]
      %v1480 = vld [vmem:[%s1468 + $0x2c] sm:$0xf]
      %v1481 = vld [vmem:[%s1468 + $0x30] sm:$0xf]
      %v1482 = vld [vmem:[%s1468 + $0x34] sm:$0xf]
      %v1483 = vld [vmem:[%s1468 + $0x38] sm:$0xf]
      %v1484 = vld [vmem:[%s1468 + $0x3c] sm:$0xf]
      %v1501 = vunpack.c.l.b16 %v1469
      %v1502 = vunpack.c.l.b16 %v1470
      %v1503 = vunpack.c.l.b16 %v1471
      %v1504 = vunpack.c.l.b16 %v1472
      %v1505 = vunpack.c.l.b16 %v1473
      %v1506 = vunpack.c.l.b16 %v1474
      %v1507 = vunpack.c.l.b16 %v1475
      %v1508 = vunpack.c.l.b16 %v1476
      %v1509 = vunpack.c.l.b16 %v1477
      %v1510 = vunpack.c.l.b16 %v1478
      %v1511 = vunpack.c.l.b16 %v1479
      %v1512 = vunpack.c.l.b16 %v1480
      %v1513 = vunpack.c.l.b16 %v1481
      %v1514 = vunpack.c.l.b16 %v1482
      %v1515 = vunpack.c.l.b16 %v1483
      %v1516 = vunpack.c.l.b16 %v1484
      %v1517 = vpack.c.b16 %v1502, %v1501
      %v1518 = vpack.c.b16 %v1504, %v1503
      %v1519 = vpack.c.b16 %v1506, %v1505
      %v1520 = vpack.c.b16 %v1508, %v1507
      %v1521 = vpack.c.b16 %v1510, %v1509
      %v1522 = vpack.c.b16 %v1512, %v1511
      %v1523 = vpack.c.b16 %v1514, %v1513
      %v1524 = vpack.c.b16 %v1516, %v1515
      %1533 = vmatpush.bf16.msra.mxu0 %v1524
      %1534 = vmatpush.bf16.msra.mxu0 %v1523
      %1535 = vmatpush.bf16.msra.mxu0 %v1522
      %1536 = vmatpush.bf16.msra.mxu0 %v1521
      %1537 = vmatpush.bf16.msra.mxu0 %v1520
      %1538 = vmatpush.bf16.msra.mxu0 %v1519
      %1539 = vmatpush.bf16.msra.mxu0 %v1518
      %1540 = vmatpush.bf16.msra.mxu0 %v1517
      %1541 = vmatmul.bf16.gmra.mxu0 %v1464
      %v1542 = vpop.f32.mrf.mxu0
      %v1543 = vadd.f32 0.0, %v1542
      %v1544 = vpop.f32.mrf.mxu0
      %v1545 = vadd.f32 0.0, %v1544
      %1546 = vmatmul.bf16.gmra.mxu0 %v1465
      %v1547 = vpop.f32.mrf.mxu0
      %v1548 = vadd.f32 0.0, %v1547
      %v1549 = vpop.f32.mrf.mxu0
      %v1550 = vadd.f32 0.0, %v1549
      %1551 = vmatmul.bf16.gmra.mxu0 %v1466
      %v1552 = vpop.f32.mrf.mxu0
      %v1553 = vadd.f32 0.0, %v1552
      %v1554 = vpop.f32.mrf.mxu0
      %v1555 = vadd.f32 0.0, %v1554
      %1556 = vmatmul.bf16.gmra.mxu0 %v1467
      %v1557 = vpop.f32.mrf.mxu0
      %v1558 = vadd.f32 0.0, %v1557
      %v1559 = vpop.f32.mrf.mxu0
      %v1560 = vadd.f32 0.0, %v1559
      %1561 = vdwg.mxu0
      %v1562 = vadd.f32 %v1447, %v1543
      %v1563 = vadd.f32 %v1448, %v1545
      %v1564 = vadd.f32 %v1449, %v1548
      %v1565 = vadd.f32 %v1450, %v1550
      %v1566 = vadd.f32 %v1451, %v1553
      %v1567 = vadd.f32 %v1452, %v1555
      %v1568 = vadd.f32 %v1453, %v1558
      %v1569 = vadd.f32 %v1454, %v1560
      %s1570 = scalar_lea.vmem [#allocation2], 160
      %v1571 = vld [vmem:[%s1570] sm:$0xff]
      %v1572 = vld [vmem:[%s1570 + $0x10] sm:$0xff]
      %v1573 = vld [vmem:[%s1570 + $0x20] sm:$0xff]
      %v1574 = vld [vmem:[%s1570 + $0x30] sm:$0xff]
      %v1575 = vld [vmem:[%s1570 + $0x40] sm:$0xff]
      %v1576 = vld [vmem:[%s1570 + $0x50] sm:$0xff]
      %v1577 = vld [vmem:[%s1570 + $0x60] sm:$0xff]
      %v1578 = vld [vmem:[%s1570 + $0x70] sm:$0xff]
      %v1579 = vpack.c.bf16 %v1572, %v1571
      %v1580 = vpack.c.bf16 %v1574, %v1573
      %v1581 = vpack.c.bf16 %v1576, %v1575
      %v1582 = vpack.c.bf16 %v1578, %v1577
      %s1583 = scalar_lea.vmem %s3, 448
      %v1584 = vld [vmem:[%s1583] sm:$0xf]
      %v1585 = vld [vmem:[%s1583 + $0x4] sm:$0xf]
      %v1586 = vld [vmem:[%s1583 + $0x8] sm:$0xf]
      %v1587 = vld [vmem:[%s1583 + $0xc] sm:$0xf]
      %v1588 = vld [vmem:[%s1583 + $0x10] sm:$0xf]
      %v1589 = vld [vmem:[%s1583 + $0x14] sm:$0xf]
      %v1590 = vld [vmem:[%s1583 + $0x18] sm:$0xf]
      %v1591 = vld [vmem:[%s1583 + $0x1c] sm:$0xf]
      %v1592 = vld [vmem:[%s1583 + $0x20] sm:$0xf]
      %v1593 = vld [vmem:[%s1583 + $0x24] sm:$0xf]
      %v1594 = vld [vmem:[%s1583 + $0x28] sm:$0xf]
      %v1595 = vld [vmem:[%s1583 + $0x2c] sm:$0xf]
      %v1596 = vld [vmem:[%s1583 + $0x30] sm:$0xf]
      %v1597 = vld [vmem:[%s1583 + $0x34] sm:$0xf]
      %v1598 = vld [vmem:[%s1583 + $0x38] sm:$0xf]
      %v1599 = vld [vmem:[%s1583 + $0x3c] sm:$0xf]
      %v1616 = vunpack.c.l.b16 %v1584
      %v1617 = vunpack.c.l.b16 %v1585
      %v1618 = vunpack.c.l.b16 %v1586
      %v1619 = vunpack.c.l.b16 %v1587
      %v1620 = vunpack.c.l.b16 %v1588
      %v1621 = vunpack.c.l.b16 %v1589
      %v1622 = vunpack.c.l.b16 %v1590
      %v1623 = vunpack.c.l.b16 %v1591
      %v1624 = vunpack.c.l.b16 %v1592
      %v1625 = vunpack.c.l.b16 %v1593
      %v1626 = vunpack.c.l.b16 %v1594
      %v1627 = vunpack.c.l.b16 %v1595
      %v1628 = vunpack.c.l.b16 %v1596
      %v1629 = vunpack.c.l.b16 %v1597
      %v1630 = vunpack.c.l.b16 %v1598
      %v1631 = vunpack.c.l.b16 %v1599
      %v1632 = vpack.c.b16 %v1617, %v1616
      %v1633 = vpack.c.b16 %v1619, %v1618
      %v1634 = vpack.c.b16 %v1621, %v1620
      %v1635 = vpack.c.b16 %v1623, %v1622
      %v1636 = vpack.c.b16 %v1625, %v1624
      %v1637 = vpack.c.b16 %v1627, %v1626
      %v1638 = vpack.c.b16 %v1629, %v1628
      %v1639 = vpack.c.b16 %v1631, %v1630
      %1648 = vmatpush.bf16.msra.mxu0 %v1639
      %1649 = vmatpush.bf16.msra.mxu0 %v1638
      %1650 = vmatpush.bf16.msra.mxu0 %v1637
      %1651 = vmatpush.bf16.msra.mxu0 %v1636
      %1652 = vmatpush.bf16.msra.mxu0 %v1635
      %1653 = vmatpush.bf16.msra.mxu0 %v1634
      %1654 = vmatpush.bf16.msra.mxu0 %v1633
      %1655 = vmatpush.bf16.msra.mxu0 %v1632
      %1656 = vmatmul.bf16.gmra.mxu0 %v1579
      %v1657 = vpop.f32.mrf.mxu0
      %v1658 = vadd.f32 0.0, %v1657
      %v1659 = vpop.f32.mrf.mxu0
      %v1660 = vadd.f32 0.0, %v1659
      %1661 = vmatmul.bf16.gmra.mxu0 %v1580
      %v1662 = vpop.f32.mrf.mxu0
      %v1663 = vadd.f32 0.0, %v1662
      %v1664 = vpop.f32.mrf.mxu0
      %v1665 = vadd.f32 0.0, %v1664
      %1666 = vmatmul.bf16.gmra.mxu0 %v1581
      %v1667 = vpop.f32.mrf.mxu0
      %v1668 = vadd.f32 0.0, %v1667
      %v1669 = vpop.f32.mrf.mxu0
      %v1670 = vadd.f32 0.0, %v1669
      %1671 = vmatmul.bf16.gmra.mxu0 %v1582
      %v1672 = vpop.f32.mrf.mxu0
      %v1673 = vadd.f32 0.0, %v1672
      %v1674 = vpop.f32.mrf.mxu0
      %v1675 = vadd.f32 0.0, %v1674
      %1676 = vdwg.mxu0
      %v1677 = vadd.f32 %v1562, %v1658
      %v1678 = vadd.f32 %v1563, %v1660
      %v1679 = vadd.f32 %v1564, %v1663
      %v1680 = vadd.f32 %v1565, %v1665
      %v1681 = vadd.f32 %v1566, %v1668
      %v1682 = vadd.f32 %v1567, %v1670
      %v1683 = vadd.f32 %v1568, %v1673
      %v1684 = vadd.f32 %v1569, %v1675
      %v1685 = vld [vmem:[%s1455 + $0x1] sm:$0xff]
      %v1686 = vld [vmem:[%s1455 + $0x11] sm:$0xff]
      %v1687 = vld [vmem:[%s1455 + $0x21] sm:$0xff]
      %v1688 = vld [vmem:[%s1455 + $0x31] sm:$0xff]
      %v1689 = vld [vmem:[%s1455 + $0x41] sm:$0xff]
      %v1690 = vld [vmem:[%s1455 + $0x51] sm:$0xff]
      %v1691 = vld [vmem:[%s1455 + $0x61] sm:$0xff]
      %v1692 = vld [vmem:[%s1455 + $0x71] sm:$0xff]
      %v1693 = vpack.c.bf16 %v1686, %v1685
      %v1694 = vpack.c.bf16 %v1688, %v1687
      %v1695 = vpack.c.bf16 %v1690, %v1689
      %v1696 = vpack.c.bf16 %v1692, %v1691
      %s1697 = scalar_lea.vmem %s3, 512
      %v1698 = vld [vmem:[%s1697] sm:$0xf]
      %v1699 = vld [vmem:[%s1697 + $0x4] sm:$0xf]
      %v1700 = vld [vmem:[%s1697 + $0x8] sm:$0xf]
      %v1701 = vld [vmem:[%s1697 + $0xc] sm:$0xf]
      %v1702 = vld [vmem:[%s1697 + $0x10] sm:$0xf]
      %v1703 = vld [vmem:[%s1697 + $0x14] sm:$0xf]
      %v1704 = vld [vmem:[%s1697 + $0x18] sm:$0xf]
      %v1705 = vld [vmem:[%s1697 + $0x1c] sm:$0xf]
      %v1706 = vld [vmem:[%s1697 + $0x20] sm:$0xf]
      %v1707 = vld [vmem:[%s1697 + $0x24] sm:$0xf]
      %v1708 = vld [vmem:[%s1697 + $0x28] sm:$0xf]
      %v1709 = vld [vmem:[%s1697 + $0x2c] sm:$0xf]
      %v1710 = vld [vmem:[%s1697 + $0x30] sm:$0xf]
      %v1711 = vld [vmem:[%s1697 + $0x34] sm:$0xf]
      %v1712 = vld [vmem:[%s1697 + $0x38] sm:$0xf]
      %v1713 = vld [vmem:[%s1697 + $0x3c] sm:$0xf]
      %v1730 = vunpack.c.l.b16 %v1698
      %v1731 = vunpack.c.l.b16 %v1699
      %v1732 = vunpack.c.l.b16 %v1700
      %v1733 = vunpack.c.l.b16 %v1701
      %v1734 = vunpack.c.l.b16 %v1702
      %v1735 = vunpack.c.l.b16 %v1703
      %v1736 = vunpack.c.l.b16 %v1704
      %v1737 = vunpack.c.l.b16 %v1705
      %v1738 = vunpack.c.l.b16 %v1706
      %v1739 = vunpack.c.l.b16 %v1707
      %v1740 = vunpack.c.l.b16 %v1708
      %v1741 = vunpack.c.l.b16 %v1709
      %v1742 = vunpack.c.l.b16 %v1710
      %v1743 = vunpack.c.l.b16 %v1711
      %v1744 = vunpack.c.l.b16 %v1712
      %v1745 = vunpack.c.l.b16 %v1713
      %v1746 = vpack.c.b16 %v1731, %v1730
      %v1747 = vpack.c.b16 %v1733, %v1732
      %v1748 = vpack.c.b16 %v1735, %v1734
      %v1749 = vpack.c.b16 %v1737, %v1736
      %v1750 = vpack.c.b16 %v1739, %v1738
      %v1751 = vpack.c.b16 %v1741, %v1740
      %v1752 = vpack.c.b16 %v1743, %v1742
      %v1753 = vpack.c.b16 %v1745, %v1744
      %1762 = vmatpush.bf16.msra.mxu0 %v1753
      %1763 = vmatpush.bf16.msra.mxu0 %v1752
      %1764 = vmatpush.bf16.msra.mxu0 %v1751
      %1765 = vmatpush.bf16.msra.mxu0 %v1750
      %1766 = vmatpush.bf16.msra.mxu0 %v1749
      %1767 = vmatpush.bf16.msra.mxu0 %v1748
      %1768 = vmatpush.bf16.msra.mxu0 %v1747
      %1769 = vmatpush.bf16.msra.mxu0 %v1746
      %1770 = vmatmul.bf16.gmra.mxu0 %v1693
      %v1771 = vpop.f32.mrf.mxu0
      %v1772 = vadd.f32 0.0, %v1771
      %v1773 = vpop.f32.mrf.mxu0
      %v1774 = vadd.f32 0.0, %v1773
      %1775 = vmatmul.bf16.gmra.mxu0 %v1694
      %v1776 = vpop.f32.mrf.mxu0
      %v1777 = vadd.f32 0.0, %v1776
      %v1778 = vpop.f32.mrf.mxu0
      %v1779 = vadd.f32 0.0, %v1778
      %1780 = vmatmul.bf16.gmra.mxu0 %v1695
      %v1781 = vpop.f32.mrf.mxu0
      %v1782 = vadd.f32 0.0, %v1781
      %v1783 = vpop.f32.mrf.mxu0
      %v1784 = vadd.f32 0.0, %v1783
      %1785 = vmatmul.bf16.gmra.mxu0 %v1696
      %v1786 = vpop.f32.mrf.mxu0
      %v1787 = vadd.f32 0.0, %v1786
      %v1788 = vpop.f32.mrf.mxu0
      %v1789 = vadd.f32 0.0, %v1788
      %1790 = vdwg.mxu0
      %v1791 = vadd.f32 %v1677, %v1772
      %v1792 = vadd.f32 %v1678, %v1774
      %v1793 = vadd.f32 %v1679, %v1777
      %v1794 = vadd.f32 %v1680, %v1779
      %v1795 = vadd.f32 %v1681, %v1782
      %v1796 = vadd.f32 %v1682, %v1784
      %v1797 = vadd.f32 %v1683, %v1787
      %v1798 = vadd.f32 %v1684, %v1789
      %v1799 = vld [vmem:[%s4] sm:$0x1]
      %v1801 = vperm.slane %v1799, 0
      %v1803 = vmul.f32 %v1791, %v1801
      %v1804 = vmul.f32 %v1792, %v1801
      %v1805 = vmul.f32 %v1793, %v1801
      %v1806 = vmul.f32 %v1794, %v1801
      %v1807 = vmul.f32 %v1795, %v1801
      %v1808 = vmul.f32 %v1796, %v1801
      %v1809 = vmul.f32 %v1797, %v1801
      %v1810 = vmul.f32 %v1798, %v1801
      %v1811 = vld [vmem:[%s5] sm:$0x1]
      %v1813 = vperm.slane %v1811, 0
      %v1815 = vadd.f32 %v1803, %v1813
      %v1816 = vadd.f32 %v1804, %v1813
      %v1817 = vadd.f32 %v1805, %v1813
      %v1818 = vadd.f32 %v1806, %v1813
      %v1819 = vadd.f32 %v1807, %v1813
      %v1820 = vadd.f32 %v1808, %v1813
      %v1821 = vadd.f32 %v1809, %v1813
      %v1822 = vadd.f32 %v1810, %v1813
      %v1823 = vmax.f32 %v1815, 0.0
      %v1824 = vmax.f32 %v1816, 0.0
      %v1825 = vmax.f32 %v1817, 0.0
      %v1826 = vmax.f32 %v1818, 0.0
      %v1827 = vmax.f32 %v1819, 0.0
      %v1828 = vmax.f32 %v1820, 0.0
      %v1829 = vmax.f32 %v1821, 0.0
      %v1830 = vmax.f32 %v1822, 0.0
      %1831 = vst [vmem:[#allocation3] sm:$0xff] 0.0
      %1832 = vst [vmem:[#allocation3 + $0x8] sm:$0x3] 0.0
      %1833 = vst [vmem:[#allocation3 + $0x10] sm:$0xff] 0.0
      %1834 = vst [vmem:[#allocation3 + $0x18] sm:$0x3] 0.0
      %1835 = vst [vmem:[#allocation3 + $0x20] sm:$0xff] 0.0
      %1836 = vst [vmem:[#allocation3 + $0x28] sm:$0x3] 0.0
      %1837 = vst [vmem:[#allocation3 + $0x30] sm:$0xff] 0.0
      %1838 = vst [vmem:[#allocation3 + $0x38] sm:$0x3] 0.0
      %1839 = vst [vmem:[#allocation3 + $0x40] sm:$0xff] 0.0
      %1840 = vst [vmem:[#allocation3 + $0x48] sm:$0x3] 0.0
      %1841 = vst [vmem:[#allocation3 + $0x50] sm:$0xff] 0.0
      %1842 = vst [vmem:[#allocation3 + $0x58] sm:$0x3] 0.0
      %1843 = vst [vmem:[#allocation3 + $0x60] sm:$0xff] 0.0
      %1844 = vst [vmem:[#allocation3 + $0x68] sm:$0x3] 0.0
      %1845 = vst [vmem:[#allocation3 + $0x70] sm:$0xff] 0.0
      %1846 = vst [vmem:[#allocation3 + $0x78] sm:$0x3] 0.0
      %1847 = vst [vmem:[#allocation3 + $0x80] sm:$0xff] 0.0
      %1848 = vst [vmem:[#allocation3 + $0x88] sm:$0x3] 0.0
      %1849 = vst [vmem:[#allocation3 + $0x90] sm:$0xff] 0.0
      %1850 = vst [vmem:[#allocation3 + $0x98] sm:$0x3] 0.0
      %s1851 = scalar_lea.vmem [#allocation3], 16
      %1852 = vst [vmem:[%s1851 + $0x1] sm:$0xff] %v1823
      %1853 = vst [vmem:[%s1851 + $0x11] sm:$0xff] %v1824
      %1854 = vst [vmem:[%s1851 + $0x21] sm:$0xff] %v1825
      %1855 = vst [vmem:[%s1851 + $0x31] sm:$0xff] %v1826
      %1856 = vst [vmem:[%s1851 + $0x41] sm:$0xff] %v1827
      %1857 = vst [vmem:[%s1851 + $0x51] sm:$0xff] %v1828
      %1858 = vst [vmem:[%s1851 + $0x61] sm:$0xff] %v1829
      %1859 = vst [vmem:[%s1851 + $0x71] sm:$0xff] %v1830
      %v1860 = vld [vmem:[#allocation3] sm:$0xff]
      %v1861 = vld [vmem:[#allocation3 + $0x10] sm:$0xff]
      %v1862 = vld [vmem:[#allocation3 + $0x20] sm:$0xff]
      %v1863 = vld [vmem:[#allocation3 + $0x30] sm:$0xff]
      %v1864 = vld [vmem:[#allocation3 + $0x40] sm:$0xff]
      %v1865 = vld [vmem:[#allocation3 + $0x50] sm:$0xff]
      %v1866 = vld [vmem:[#allocation3 + $0x60] sm:$0xff]
      %v1867 = vld [vmem:[#allocation3 + $0x70] sm:$0xff]
      %v1868 = vpack.c.bf16 %v1861, %v1860
      %v1869 = vpack.c.bf16 %v1863, %v1862
      %v1870 = vpack.c.bf16 %v1865, %v1864
      %v1871 = vpack.c.bf16 %v1867, %v1866
      %v1872 = vld [vmem:[%s6] sm:$0xf]
      %v1873 = vld [vmem:[%s6 + $0x4] sm:$0xf]
      %v1874 = vld [vmem:[%s6 + $0x8] sm:$0xf]
      %v1875 = vld [vmem:[%s6 + $0xc] sm:$0xf]
      %v1876 = vld [vmem:[%s6 + $0x10] sm:$0xf]
      %v1877 = vld [vmem:[%s6 + $0x14] sm:$0xf]
      %v1878 = vld [vmem:[%s6 + $0x18] sm:$0xf]
      %v1879 = vld [vmem:[%s6 + $0x1c] sm:$0xf]
      %v1880 = vld [vmem:[%s6 + $0x20] sm:$0xf]
      %v1881 = vld [vmem:[%s6 + $0x24] sm:$0xf]
      %v1882 = vld [vmem:[%s6 + $0x28] sm:$0xf]
      %v1883 = vld [vmem:[%s6 + $0x2c] sm:$0xf]
      %v1884 = vld [vmem:[%s6 + $0x30] sm:$0xf]
      %v1885 = vld [vmem:[%s6 + $0x34] sm:$0xf]
      %v1886 = vld [vmem:[%s6 + $0x38] sm:$0xf]
      %v1887 = vld [vmem:[%s6 + $0x3c] sm:$0xf]
      %v1888 = vld [vmem:[#allocation3 + $0x1] sm:$0xff]
      %v1889 = vld [vmem:[#allocation3 + $0x11] sm:$0xff]
      %v1890 = vld [vmem:[#allocation3 + $0x21] sm:$0xff]
      %v1891 = vld [vmem:[#allocation3 + $0x31] sm:$0xff]
      %v1892 = vld [vmem:[#allocation3 + $0x41] sm:$0xff]
      %v1893 = vld [vmem:[#allocation3 + $0x51] sm:$0xff]
      %v1894 = vld [vmem:[#allocation3 + $0x61] sm:$0xff]
      %v1895 = vld [vmem:[#allocation3 + $0x71] sm:$0xff]
      %v1896 = vpack.c.bf16 %v1889, %v1888
      %v1897 = vpack.c.bf16 %v1891, %v1890
      %v1898 = vpack.c.bf16 %v1893, %v1892
      %v1899 = vpack.c.bf16 %v1895, %v1894
      %s1900 = scalar_lea.vmem %s6, 64
      %v1901 = vld [vmem:[%s1900] sm:$0xf]
      %v1902 = vld [vmem:[%s1900 + $0x4] sm:$0xf]
      %v1903 = vld [vmem:[%s1900 + $0x8] sm:$0xf]
      %v1904 = vld [vmem:[%s1900 + $0xc] sm:$0xf]
      %v1905 = vld [vmem:[%s1900 + $0x10] sm:$0xf]
      %v1906 = vld [vmem:[%s1900 + $0x14] sm:$0xf]
      %v1907 = vld [vmem:[%s1900 + $0x18] sm:$0xf]
      %v1908 = vld [vmem:[%s1900 + $0x1c] sm:$0xf]
      %v1909 = vld [vmem:[%s1900 + $0x20] sm:$0xf]
      %v1910 = vld [vmem:[%s1900 + $0x24] sm:$0xf]
      %v1911 = vld [vmem:[%s1900 + $0x28] sm:$0xf]
      %v1912 = vld [vmem:[%s1900 + $0x2c] sm:$0xf]
      %v1913 = vld [vmem:[%s1900 + $0x30] sm:$0xf]
      %v1914 = vld [vmem:[%s1900 + $0x34] sm:$0xf]
      %v1915 = vld [vmem:[%s1900 + $0x38] sm:$0xf]
      %v1916 = vld [vmem:[%s1900 + $0x3c] sm:$0xf]
      %v1933 = vunpack.c.l.b16 %v1901
      %v1934 = vunpack.c.l.b16 %v1902
      %v1935 = vunpack.c.l.b16 %v1903
      %v1936 = vunpack.c.l.b16 %v1904
      %v1937 = vunpack.c.l.b16 %v1905
      %v1938 = vunpack.c.l.b16 %v1906
      %v1939 = vunpack.c.l.b16 %v1907
      %v1940 = vunpack.c.l.b16 %v1908
      %v1941 = vunpack.c.l.b16 %v1909
      %v1942 = vunpack.c.l.b16 %v1910
      %v1943 = vunpack.c.l.b16 %v1911
      %v1944 = vunpack.c.l.b16 %v1912
      %v1945 = vunpack.c.l.b16 %v1913
      %v1946 = vunpack.c.l.b16 %v1914
      %v1947 = vunpack.c.l.b16 %v1915
      %v1948 = vunpack.c.l.b16 %v1916
      %v1949 = vpack.c.b16 %v1934, %v1933
      %v1950 = vpack.c.b16 %v1936, %v1935
      %v1951 = vpack.c.b16 %v1938, %v1937
      %v1952 = vpack.c.b16 %v1940, %v1939
      %v1953 = vpack.c.b16 %v1942, %v1941
      %v1954 = vpack.c.b16 %v1944, %v1943
      %v1955 = vpack.c.b16 %v1946, %v1945
      %v1956 = vpack.c.b16 %v1948, %v1947
      %1965 = vmatpush.bf16.msra.mxu0 %v1956
      %1966 = vmatpush.bf16.msra.mxu0 %v1955
      %1967 = vmatpush.bf16.msra.mxu0 %v1954
      %1968 = vmatpush.bf16.msra.mxu0 %v1953
      %1969 = vmatpush.bf16.msra.mxu0 %v1952
      %1970 = vmatpush.bf16.msra.mxu0 %v1951
      %1971 = vmatpush.bf16.msra.mxu0 %v1950
      %1972 = vmatpush.bf16.msra.mxu0 %v1949
      %1973 = vmatmul.bf16.gmra.mxu0 %v1896
      %v1974 = vpop.f32.mrf.mxu0
      %v1975 = vadd.f32 0.0, %v1974
      %v1976 = vpop.f32.mrf.mxu0
      %v1977 = vadd.f32 0.0, %v1976
      %1978 = vmatmul.bf16.gmra.mxu0 %v1897
      %v1979 = vpop.f32.mrf.mxu0
      %v1980 = vadd.f32 0.0, %v1979
      %v1981 = vpop.f32.mrf.mxu0
      %v1982 = vadd.f32 0.0, %v1981
      %1983 = vmatmul.bf16.gmra.mxu0 %v1898
      %v1984 = vpop.f32.mrf.mxu0
      %v1985 = vadd.f32 0.0, %v1984
      %v1986 = vpop.f32.mrf.mxu0
      %v1987 = vadd.f32 0.0, %v1986
      %1988 = vmatmul.bf16.gmra.mxu0 %v1899
      %v1989 = vpop.f32.mrf.mxu0
      %v1990 = vadd.f32 0.0, %v1989
      %v1991 = vpop.f32.mrf.mxu0
      %v1992 = vadd.f32 0.0, %v1991
      %1993 = vdwg.mxu0
      %v2010 = vunpack.c.l.b16 %v1872
      %v2011 = vunpack.c.l.b16 %v1873
      %v2012 = vunpack.c.l.b16 %v1874
      %v2013 = vunpack.c.l.b16 %v1875
      %v2014 = vunpack.c.l.b16 %v1876
      %v2015 = vunpack.c.l.b16 %v1877
      %v2016 = vunpack.c.l.b16 %v1878
      %v2017 = vunpack.c.l.b16 %v1879
      %v2018 = vunpack.c.l.b16 %v1880
      %v2019 = vunpack.c.l.b16 %v1881
      %v2020 = vunpack.c.l.b16 %v1882
      %v2021 = vunpack.c.l.b16 %v1883
      %v2022 = vunpack.c.l.b16 %v1884
      %v2023 = vunpack.c.l.b16 %v1885
      %v2024 = vunpack.c.l.b16 %v1886
      %v2025 = vunpack.c.l.b16 %v1887
      %v2026 = vpack.c.b16 %v2011, %v2010
      %v2027 = vpack.c.b16 %v2013, %v2012
      %v2028 = vpack.c.b16 %v2015, %v2014
      %v2029 = vpack.c.b16 %v2017, %v2016
      %v2030 = vpack.c.b16 %v2019, %v2018
      %v2031 = vpack.c.b16 %v2021, %v2020
      %v2032 = vpack.c.b16 %v2023, %v2022
      %v2033 = vpack.c.b16 %v2025, %v2024
      %2042 = vmatpush.bf16.msra.mxu0 %v2033
      %2043 = vmatpush.bf16.msra.mxu0 %v2032
      %2044 = vmatpush.bf16.msra.mxu0 %v2031
      %2045 = vmatpush.bf16.msra.mxu0 %v2030
      %2046 = vmatpush.bf16.msra.mxu0 %v2029
      %2047 = vmatpush.bf16.msra.mxu0 %v2028
      %2048 = vmatpush.bf16.msra.mxu0 %v2027
      %2049 = vmatpush.bf16.msra.mxu0 %v2026
      %2050 = vmatmul.bf16.gmra.mxu0 %v1868
      %v2051 = vpop.f32.mrf.mxu0
      %v2052 = vadd.f32 %v1975, %v2051
      %v2053 = vpop.f32.mrf.mxu0
      %v2054 = vadd.f32 %v1977, %v2053
      %2055 = vmatmul.bf16.gmra.mxu0 %v1869
      %v2056 = vpop.f32.mrf.mxu0
      %v2057 = vadd.f32 %v1980, %v2056
      %v2058 = vpop.f32.mrf.mxu0
      %v2059 = vadd.f32 %v1982, %v2058
      %2060 = vmatmul.bf16.gmra.mxu0 %v1870
      %v2061 = vpop.f32.mrf.mxu0
      %v2062 = vadd.f32 %v1985, %v2061
      %v2063 = vpop.f32.mrf.mxu0
      %v2064 = vadd.f32 %v1987, %v2063
      %2065 = vmatmul.bf16.gmra.mxu0 %v1871
      %v2066 = vpop.f32.mrf.mxu0
      %v2067 = vadd.f32 %v1990, %v2066
      %v2068 = vpop.f32.mrf.mxu0
      %v2069 = vadd.f32 %v1992, %v2068
      %2070 = vdwg.mxu0
      %v2071 = vld [vmem:[#allocation3 + $0x2] sm:$0xff]
      %v2072 = vld [vmem:[#allocation3 + $0x12] sm:$0xff]
      %v2073 = vld [vmem:[#allocation3 + $0x22] sm:$0xff]
      %v2074 = vld [vmem:[#allocation3 + $0x32] sm:$0xff]
      %v2075 = vld [vmem:[#allocation3 + $0x42] sm:$0xff]
      %v2076 = vld [vmem:[#allocation3 + $0x52] sm:$0xff]
      %v2077 = vld [vmem:[#allocation3 + $0x62] sm:$0xff]
      %v2078 = vld [vmem:[#allocation3 + $0x72] sm:$0xff]
      %v2079 = vpack.c.bf16 %v2072, %v2071
      %v2080 = vpack.c.bf16 %v2074, %v2073
      %v2081 = vpack.c.bf16 %v2076, %v2075
      %v2082 = vpack.c.bf16 %v2078, %v2077
      %s2083 = scalar_lea.vmem %s6, 128
      %v2084 = vld [vmem:[%s2083] sm:$0xf]
      %v2085 = vld [vmem:[%s2083 + $0x4] sm:$0xf]
      %v2086 = vld [vmem:[%s2083 + $0x8] sm:$0xf]
      %v2087 = vld [vmem:[%s2083 + $0xc] sm:$0xf]
      %v2088 = vld [vmem:[%s2083 + $0x10] sm:$0xf]
      %v2089 = vld [vmem:[%s2083 + $0x14] sm:$0xf]
      %v2090 = vld [vmem:[%s2083 + $0x18] sm:$0xf]
      %v2091 = vld [vmem:[%s2083 + $0x1c] sm:$0xf]
      %v2092 = vld [vmem:[%s2083 + $0x20] sm:$0xf]
      %v2093 = vld [vmem:[%s2083 + $0x24] sm:$0xf]
      %v2094 = vld [vmem:[%s2083 + $0x28] sm:$0xf]
      %v2095 = vld [vmem:[%s2083 + $0x2c] sm:$0xf]
      %v2096 = vld [vmem:[%s2083 + $0x30] sm:$0xf]
      %v2097 = vld [vmem:[%s2083 + $0x34] sm:$0xf]
      %v2098 = vld [vmem:[%s2083 + $0x38] sm:$0xf]
      %v2099 = vld [vmem:[%s2083 + $0x3c] sm:$0xf]
      %v2116 = vunpack.c.l.b16 %v2084
      %v2117 = vunpack.c.l.b16 %v2085
      %v2118 = vunpack.c.l.b16 %v2086
      %v2119 = vunpack.c.l.b16 %v2087
      %v2120 = vunpack.c.l.b16 %v2088
      %v2121 = vunpack.c.l.b16 %v2089
      %v2122 = vunpack.c.l.b16 %v2090
      %v2123 = vunpack.c.l.b16 %v2091
      %v2124 = vunpack.c.l.b16 %v2092
      %v2125 = vunpack.c.l.b16 %v2093
      %v2126 = vunpack.c.l.b16 %v2094
      %v2127 = vunpack.c.l.b16 %v2095
      %v2128 = vunpack.c.l.b16 %v2096
      %v2129 = vunpack.c.l.b16 %v2097
      %v2130 = vunpack.c.l.b16 %v2098
      %v2131 = vunpack.c.l.b16 %v2099
      %v2132 = vpack.c.b16 %v2117, %v2116
      %v2133 = vpack.c.b16 %v2119, %v2118
      %v2134 = vpack.c.b16 %v2121, %v2120
      %v2135 = vpack.c.b16 %v2123, %v2122
      %v2136 = vpack.c.b16 %v2125, %v2124
      %v2137 = vpack.c.b16 %v2127, %v2126
      %v2138 = vpack.c.b16 %v2129, %v2128
      %v2139 = vpack.c.b16 %v2131, %v2130
      %2148 = vmatpush.bf16.msra.mxu0 %v2139
      %2149 = vmatpush.bf16.msra.mxu0 %v2138
      %2150 = vmatpush.bf16.msra.mxu0 %v2137
      %2151 = vmatpush.bf16.msra.mxu0 %v2136
      %2152 = vmatpush.bf16.msra.mxu0 %v2135
      %2153 = vmatpush.bf16.msra.mxu0 %v2134
      %2154 = vmatpush.bf16.msra.mxu0 %v2133
      %2155 = vmatpush.bf16.msra.mxu0 %v2132
      %2156 = vmatmul.bf16.gmra.mxu0 %v2079
      %v2157 = vpop.f32.mrf.mxu0
      %v2158 = vadd.f32 0.0, %v2157
      %v2159 = vpop.f32.mrf.mxu0
      %v2160 = vadd.f32 0.0, %v2159
      %2161 = vmatmul.bf16.gmra.mxu0 %v2080
      %v2162 = vpop.f32.mrf.mxu0
      %v2163 = vadd.f32 0.0, %v2162
      %v2164 = vpop.f32.mrf.mxu0
      %v2165 = vadd.f32 0.0, %v2164
      %2166 = vmatmul.bf16.gmra.mxu0 %v2081
      %v2167 = vpop.f32.mrf.mxu0
      %v2168 = vadd.f32 0.0, %v2167
      %v2169 = vpop.f32.mrf.mxu0
      %v2170 = vadd.f32 0.0, %v2169
      %2171 = vmatmul.bf16.gmra.mxu0 %v2082
      %v2172 = vpop.f32.mrf.mxu0
      %v2173 = vadd.f32 0.0, %v2172
      %v2174 = vpop.f32.mrf.mxu0
      %v2175 = vadd.f32 0.0, %v2174
      %2176 = vdwg.mxu0
      %v2177 = vadd.f32 %v2052, %v2158
      %v2178 = vadd.f32 %v2054, %v2160
      %v2179 = vadd.f32 %v2057, %v2163
      %v2180 = vadd.f32 %v2059, %v2165
      %v2181 = vadd.f32 %v2062, %v2168
      %v2182 = vadd.f32 %v2064, %v2170
      %v2183 = vadd.f32 %v2067, %v2173
      %v2184 = vadd.f32 %v2069, %v2175
      %v2185 = vld [vmem:[%s1851] sm:$0xff]
      %v2186 = vld [vmem:[%s1851 + $0x10] sm:$0xff]
      %v2187 = vld [vmem:[%s1851 + $0x20] sm:$0xff]
      %v2188 = vld [vmem:[%s1851 + $0x30] sm:$0xff]
      %v2189 = vld [vmem:[%s1851 + $0x40] sm:$0xff]
      %v2190 = vld [vmem:[%s1851 + $0x50] sm:$0xff]
      %v2191 = vld [vmem:[%s1851 + $0x60] sm:$0xff]
      %v2192 = vld [vmem:[%s1851 + $0x70] sm:$0xff]
      %v2193 = vpack.c.bf16 %v2186, %v2185
      %v2194 = vpack.c.bf16 %v2188, %v2187
      %v2195 = vpack.c.bf16 %v2190, %v2189
      %v2196 = vpack.c.bf16 %v2192, %v2191
      %s2197 = scalar_lea.vmem %s6, 192
      %v2198 = vld [vmem:[%s2197] sm:$0xf]
      %v2199 = vld [vmem:[%s2197 + $0x4] sm:$0xf]
      %v2200 = vld [vmem:[%s2197 + $0x8] sm:$0xf]
      %v2201 = vld [vmem:[%s2197 + $0xc] sm:$0xf]
      %v2202 = vld [vmem:[%s2197 + $0x10] sm:$0xf]
      %v2203 = vld [vmem:[%s2197 + $0x14] sm:$0xf]
      %v2204 = vld [vmem:[%s2197 + $0x18] sm:$0xf]
      %v2205 = vld [vmem:[%s2197 + $0x1c] sm:$0xf]
      %v2206 = vld [vmem:[%s2197 + $0x20] sm:$0xf]
      %v2207 = vld [vmem:[%s2197 + $0x24] sm:$0xf]
      %v2208 = vld [vmem:[%s2197 + $0x28] sm:$0xf]
      %v2209 = vld [vmem:[%s2197 + $0x2c] sm:$0xf]
      %v2210 = vld [vmem:[%s2197 + $0x30] sm:$0xf]
      %v2211 = vld [vmem:[%s2197 + $0x34] sm:$0xf]
      %v2212 = vld [vmem:[%s2197 + $0x38] sm:$0xf]
      %v2213 = vld [vmem:[%s2197 + $0x3c] sm:$0xf]
      %v2230 = vunpack.c.l.b16 %v2198
      %v2231 = vunpack.c.l.b16 %v2199
      %v2232 = vunpack.c.l.b16 %v2200
      %v2233 = vunpack.c.l.b16 %v2201
      %v2234 = vunpack.c.l.b16 %v2202
      %v2235 = vunpack.c.l.b16 %v2203
      %v2236 = vunpack.c.l.b16 %v2204
      %v2237 = vunpack.c.l.b16 %v2205
      %v2238 = vunpack.c.l.b16 %v2206
      %v2239 = vunpack.c.l.b16 %v2207
      %v2240 = vunpack.c.l.b16 %v2208
      %v2241 = vunpack.c.l.b16 %v2209
      %v2242 = vunpack.c.l.b16 %v2210
      %v2243 = vunpack.c.l.b16 %v2211
      %v2244 = vunpack.c.l.b16 %v2212
      %v2245 = vunpack.c.l.b16 %v2213
      %v2246 = vpack.c.b16 %v2231, %v2230
      %v2247 = vpack.c.b16 %v2233, %v2232
      %v2248 = vpack.c.b16 %v2235, %v2234
      %v2249 = vpack.c.b16 %v2237, %v2236
      %v2250 = vpack.c.b16 %v2239, %v2238
      %v2251 = vpack.c.b16 %v2241, %v2240
      %v2252 = vpack.c.b16 %v2243, %v2242
      %v2253 = vpack.c.b16 %v2245, %v2244
      %2262 = vmatpush.bf16.msra.mxu0 %v2253
      %2263 = vmatpush.bf16.msra.mxu0 %v2252
      %2264 = vmatpush.bf16.msra.mxu0 %v2251
      %2265 = vmatpush.bf16.msra.mxu0 %v2250
      %2266 = vmatpush.bf16.msra.mxu0 %v2249
      %2267 = vmatpush.bf16.msra.mxu0 %v2248
      %2268 = vmatpush.bf16.msra.mxu0 %v2247
      %2269 = vmatpush.bf16.msra.mxu0 %v2246
      %2270 = vmatmul.bf16.gmra.mxu0 %v2193
      %v2271 = vpop.f32.mrf.mxu0
      %v2272 = vadd.f32 0.0, %v2271
      %v2273 = vpop.f32.mrf.mxu0
      %v2274 = vadd.f32 0.0, %v2273
      %2275 = vmatmul.bf16.gmra.mxu0 %v2194
      %v2276 = vpop.f32.mrf.mxu0
      %v2277 = vadd.f32 0.0, %v2276
      %v2278 = vpop.f32.mrf.mxu0
      %v2279 = vadd.f32 0.0, %v2278
      %2280 = vmatmul.bf16.gmra.mxu0 %v2195
      %v2281 = vpop.f32.mrf.mxu0
      %v2282 = vadd.f32 0.0, %v2281
      %v2283 = vpop.f32.mrf.mxu0
      %v2284 = vadd.f32 0.0, %v2283
      %2285 = vmatmul.bf16.gmra.mxu0 %v2196
      %v2286 = vpop.f32.mrf.mxu0
      %v2287 = vadd.f32 0.0, %v2286
      %v2288 = vpop.f32.mrf.mxu0
      %v2289 = vadd.f32 0.0, %v2288
      %2290 = vdwg.mxu0
      %v2291 = vadd.f32 %v2177, %v2272
      %v2292 = vadd.f32 %v2178, %v2274
      %v2293 = vadd.f32 %v2179, %v2277
      %v2294 = vadd.f32 %v2180, %v2279
      %v2295 = vadd.f32 %v2181, %v2282
      %v2296 = vadd.f32 %v2182, %v2284
      %v2297 = vadd.f32 %v2183, %v2287
      %v2298 = vadd.f32 %v2184, %v2289
      %v2299 = vld [vmem:[%s1851 + $0x1] sm:$0xff]
      %v2300 = vld [vmem:[%s1851 + $0x11] sm:$0xff]
      %v2301 = vld [vmem:[%s1851 + $0x21] sm:$0xff]
      %v2302 = vld [vmem:[%s1851 + $0x31] sm:$0xff]
      %v2303 = vld [vmem:[%s1851 + $0x41] sm:$0xff]
      %v2304 = vld [vmem:[%s1851 + $0x51] sm:$0xff]
      %v2305 = vld [vmem:[%s1851 + $0x61] sm:$0xff]
      %v2306 = vld [vmem:[%s1851 + $0x71] sm:$0xff]
      %v2307 = vpack.c.bf16 %v2300, %v2299
      %v2308 = vpack.c.bf16 %v2302, %v2301
      %v2309 = vpack.c.bf16 %v2304, %v2303
      %v2310 = vpack.c.bf16 %v2306, %v2305
      %s2311 = scalar_lea.vmem %s6, 256
      %v2312 = vld [vmem:[%s2311] sm:$0xf]
      %v2313 = vld [vmem:[%s2311 + $0x4] sm:$0xf]
      %v2314 = vld [vmem:[%s2311 + $0x8] sm:$0xf]
      %v2315 = vld [vmem:[%s2311 + $0xc] sm:$0xf]
      %v2316 = vld [vmem:[%s2311 + $0x10] sm:$0xf]
      %v2317 = vld [vmem:[%s2311 + $0x14] sm:$0xf]
      %v2318 = vld [vmem:[%s2311 + $0x18] sm:$0xf]
      %v2319 = vld [vmem:[%s2311 + $0x1c] sm:$0xf]
      %v2320 = vld [vmem:[%s2311 + $0x20] sm:$0xf]
      %v2321 = vld [vmem:[%s2311 + $0x24] sm:$0xf]
      %v2322 = vld [vmem:[%s2311 + $0x28] sm:$0xf]
      %v2323 = vld [vmem:[%s2311 + $0x2c] sm:$0xf]
      %v2324 = vld [vmem:[%s2311 + $0x30] sm:$0xf]
      %v2325 = vld [vmem:[%s2311 + $0x34] sm:$0xf]
      %v2326 = vld [vmem:[%s2311 + $0x38] sm:$0xf]
      %v2327 = vld [vmem:[%s2311 + $0x3c] sm:$0xf]
      %v2344 = vunpack.c.l.b16 %v2312
      %v2345 = vunpack.c.l.b16 %v2313
      %v2346 = vunpack.c.l.b16 %v2314
      %v2347 = vunpack.c.l.b16 %v2315
      %v2348 = vunpack.c.l.b16 %v2316
      %v2349 = vunpack.c.l.b16 %v2317
      %v2350 = vunpack.c.l.b16 %v2318
      %v2351 = vunpack.c.l.b16 %v2319
      %v2352 = vunpack.c.l.b16 %v2320
      %v2353 = vunpack.c.l.b16 %v2321
      %v2354 = vunpack.c.l.b16 %v2322
      %v2355 = vunpack.c.l.b16 %v2323
      %v2356 = vunpack.c.l.b16 %v2324
      %v2357 = vunpack.c.l.b16 %v2325
      %v2358 = vunpack.c.l.b16 %v2326
      %v2359 = vunpack.c.l.b16 %v2327
      %v2360 = vpack.c.b16 %v2345, %v2344
      %v2361 = vpack.c.b16 %v2347, %v2346
      %v2362 = vpack.c.b16 %v2349, %v2348
      %v2363 = vpack.c.b16 %v2351, %v2350
      %v2364 = vpack.c.b16 %v2353, %v2352
      %v2365 = vpack.c.b16 %v2355, %v2354
      %v2366 = vpack.c.b16 %v2357, %v2356
      %v2367 = vpack.c.b16 %v2359, %v2358
      %2376 = vmatpush.bf16.msra.mxu0 %v2367
      %2377 = vmatpush.bf16.msra.mxu0 %v2366
      %2378 = vmatpush.bf16.msra.mxu0 %v2365
      %2379 = vmatpush.bf16.msra.mxu0 %v2364
      %2380 = vmatpush.bf16.msra.mxu0 %v2363
      %2381 = vmatpush.bf16.msra.mxu0 %v2362
      %2382 = vmatpush.bf16.msra.mxu0 %v2361
      %2383 = vmatpush.bf16.msra.mxu0 %v2360
      %2384 = vmatmul.bf16.gmra.mxu0 %v2307
      %v2385 = vpop.f32.mrf.mxu0
      %v2386 = vadd.f32 0.0, %v2385
      %v2387 = vpop.f32.mrf.mxu0
      %v2388 = vadd.f32 0.0, %v2387
      %2389 = vmatmul.bf16.gmra.mxu0 %v2308
      %v2390 = vpop.f32.mrf.mxu0
      %v2391 = vadd.f32 0.0, %v2390
      %v2392 = vpop.f32.mrf.mxu0
      %v2393 = vadd.f32 0.0, %v2392
      %2394 = vmatmul.bf16.gmra.mxu0 %v2309
      %v2395 = vpop.f32.mrf.mxu0
      %v2396 = vadd.f32 0.0, %v2395
      %v2397 = vpop.f32.mrf.mxu0
      %v2398 = vadd.f32 0.0, %v2397
      %2399 = vmatmul.bf16.gmra.mxu0 %v2310
      %v2400 = vpop.f32.mrf.mxu0
      %v2401 = vadd.f32 0.0, %v2400
      %v2402 = vpop.f32.mrf.mxu0
      %v2403 = vadd.f32 0.0, %v2402
      %2404 = vdwg.mxu0
      %v2405 = vadd.f32 %v2291, %v2386
      %v2406 = vadd.f32 %v2292, %v2388
      %v2407 = vadd.f32 %v2293, %v2391
      %v2408 = vadd.f32 %v2294, %v2393
      %v2409 = vadd.f32 %v2295, %v2396
      %v2410 = vadd.f32 %v2296, %v2398
      %v2411 = vadd.f32 %v2297, %v2401
      %v2412 = vadd.f32 %v2298, %v2403
      %v2413 = vld [vmem:[%s1851 + $0x2] sm:$0xff]
      %v2414 = vld [vmem:[%s1851 + $0x12] sm:$0xff]
      %v2415 = vld [vmem:[%s1851 + $0x22] sm:$0xff]
      %v2416 = vld [vmem:[%s1851 + $0x32] sm:$0xff]
      %v2417 = vld [vmem:[%s1851 + $0x42] sm:$0xff]
      %v2418 = vld [vmem:[%s1851 + $0x52] sm:$0xff]
      %v2419 = vld [vmem:[%s1851 + $0x62] sm:$0xff]
      %v2420 = vld [vmem:[%s1851 + $0x72] sm:$0xff]
      %v2421 = vpack.c.bf16 %v2414, %v2413
      %v2422 = vpack.c.bf16 %v2416, %v2415
      %v2423 = vpack.c.bf16 %v2418, %v2417
      %v2424 = vpack.c.bf16 %v2420, %v2419
      %s2425 = scalar_lea.vmem %s6, 320
      %v2426 = vld [vmem:[%s2425] sm:$0xf]
      %v2427 = vld [vmem:[%s2425 + $0x4] sm:$0xf]
      %v2428 = vld [vmem:[%s2425 + $0x8] sm:$0xf]
      %v2429 = vld [vmem:[%s2425 + $0xc] sm:$0xf]
      %v2430 = vld [vmem:[%s2425 + $0x10] sm:$0xf]
      %v2431 = vld [vmem:[%s2425 + $0x14] sm:$0xf]
      %v2432 = vld [vmem:[%s2425 + $0x18] sm:$0xf]
      %v2433 = vld [vmem:[%s2425 + $0x1c] sm:$0xf]
      %v2434 = vld [vmem:[%s2425 + $0x20] sm:$0xf]
      %v2435 = vld [vmem:[%s2425 + $0x24] sm:$0xf]
      %v2436 = vld [vmem:[%s2425 + $0x28] sm:$0xf]
      %v2437 = vld [vmem:[%s2425 + $0x2c] sm:$0xf]
      %v2438 = vld [vmem:[%s2425 + $0x30] sm:$0xf]
      %v2439 = vld [vmem:[%s2425 + $0x34] sm:$0xf]
      %v2440 = vld [vmem:[%s2425 + $0x38] sm:$0xf]
      %v2441 = vld [vmem:[%s2425 + $0x3c] sm:$0xf]
      %v2458 = vunpack.c.l.b16 %v2426
      %v2459 = vunpack.c.l.b16 %v2427
      %v2460 = vunpack.c.l.b16 %v2428
      %v2461 = vunpack.c.l.b16 %v2429
      %v2462 = vunpack.c.l.b16 %v2430
      %v2463 = vunpack.c.l.b16 %v2431
      %v2464 = vunpack.c.l.b16 %v2432
      %v2465 = vunpack.c.l.b16 %v2433
      %v2466 = vunpack.c.l.b16 %v2434
      %v2467 = vunpack.c.l.b16 %v2435
      %v2468 = vunpack.c.l.b16 %v2436
      %v2469 = vunpack.c.l.b16 %v2437
      %v2470 = vunpack.c.l.b16 %v2438
      %v2471 = vunpack.c.l.b16 %v2439
      %v2472 = vunpack.c.l.b16 %v2440
      %v2473 = vunpack.c.l.b16 %v2441
      %v2474 = vpack.c.b16 %v2459, %v2458
      %v2475 = vpack.c.b16 %v2461, %v2460
      %v2476 = vpack.c.b16 %v2463, %v2462
      %v2477 = vpack.c.b16 %v2465, %v2464
      %v2478 = vpack.c.b16 %v2467, %v2466
      %v2479 = vpack.c.b16 %v2469, %v2468
      %v2480 = vpack.c.b16 %v2471, %v2470
      %v2481 = vpack.c.b16 %v2473, %v2472
      %2490 = vmatpush.bf16.msra.mxu0 %v2481
      %2491 = vmatpush.bf16.msra.mxu0 %v2480
      %2492 = vmatpush.bf16.msra.mxu0 %v2479
      %2493 = vmatpush.bf16.msra.mxu0 %v2478
      %2494 = vmatpush.bf16.msra.mxu0 %v2477
      %2495 = vmatpush.bf16.msra.mxu0 %v2476
      %2496 = vmatpush.bf16.msra.mxu0 %v2475
      %2497 = vmatpush.bf16.msra.mxu0 %v2474
      %2498 = vmatmul.bf16.gmra.mxu0 %v2421
      %v2499 = vpop.f32.mrf.mxu0
      %v2500 = vadd.f32 0.0, %v2499
      %v2501 = vpop.f32.mrf.mxu0
      %v2502 = vadd.f32 0.0, %v2501
      %2503 = vmatmul.bf16.gmra.mxu0 %v2422
      %v2504 = vpop.f32.mrf.mxu0
      %v2505 = vadd.f32 0.0, %v2504
      %v2506 = vpop.f32.mrf.mxu0
      %v2507 = vadd.f32 0.0, %v2506
      %2508 = vmatmul.bf16.gmra.mxu0 %v2423
      %v2509 = vpop.f32.mrf.mxu0
      %v2510 = vadd.f32 0.0, %v2509
      %v2511 = vpop.f32.mrf.mxu0
      %v2512 = vadd.f32 0.0, %v2511
      %2513 = vmatmul.bf16.gmra.mxu0 %v2424
      %v2514 = vpop.f32.mrf.mxu0
      %v2515 = vadd.f32 0.0, %v2514
      %v2516 = vpop.f32.mrf.mxu0
      %v2517 = vadd.f32 0.0, %v2516
      %2518 = vdwg.mxu0
      %v2519 = vadd.f32 %v2405, %v2500
      %v2520 = vadd.f32 %v2406, %v2502
      %v2521 = vadd.f32 %v2407, %v2505
      %v2522 = vadd.f32 %v2408, %v2507
      %v2523 = vadd.f32 %v2409, %v2510
      %v2524 = vadd.f32 %v2410, %v2512
      %v2525 = vadd.f32 %v2411, %v2515
      %v2526 = vadd.f32 %v2412, %v2517
      %s2527 = scalar_lea.vmem [#allocation3], 32
      %v2528 = vld [vmem:[%s2527] sm:$0xff]
      %v2529 = vld [vmem:[%s2527 + $0x10] sm:$0xff]
      %v2530 = vld [vmem:[%s2527 + $0x20] sm:$0xff]
      %v2531 = vld [vmem:[%s2527 + $0x30] sm:$0xff]
      %v2532 = vld [vmem:[%s2527 + $0x40] sm:$0xff]
      %v2533 = vld [vmem:[%s2527 + $0x50] sm:$0xff]
      %v2534 = vld [vmem:[%s2527 + $0x60] sm:$0xff]
      %v2535 = vld [vmem:[%s2527 + $0x70] sm:$0xff]
      %v2536 = vpack.c.bf16 %v2529, %v2528
      %v2537 = vpack.c.bf16 %v2531, %v2530
      %v2538 = vpack.c.bf16 %v2533, %v2532
      %v2539 = vpack.c.bf16 %v2535, %v2534
      %s2540 = scalar_lea.vmem %s6, 384
      %v2541 = vld [vmem:[%s2540] sm:$0xf]
      %v2542 = vld [vmem:[%s2540 + $0x4] sm:$0xf]
      %v2543 = vld [vmem:[%s2540 + $0x8] sm:$0xf]
      %v2544 = vld [vmem:[%s2540 + $0xc] sm:$0xf]
      %v2545 = vld [vmem:[%s2540 + $0x10] sm:$0xf]
      %v2546 = vld [vmem:[%s2540 + $0x14] sm:$0xf]
      %v2547 = vld [vmem:[%s2540 + $0x18] sm:$0xf]
      %v2548 = vld [vmem:[%s2540 + $0x1c] sm:$0xf]
      %v2549 = vld [vmem:[%s2540 + $0x20] sm:$0xf]
      %v2550 = vld [vmem:[%s2540 + $0x24] sm:$0xf]
      %v2551 = vld [vmem:[%s2540 + $0x28] sm:$0xf]
      %v2552 = vld [vmem:[%s2540 + $0x2c] sm:$0xf]
      %v2553 = vld [vmem:[%s2540 + $0x30] sm:$0xf]
      %v2554 = vld [vmem:[%s2540 + $0x34] sm:$0xf]
      %v2555 = vld [vmem:[%s2540 + $0x38] sm:$0xf]
      %v2556 = vld [vmem:[%s2540 + $0x3c] sm:$0xf]
      %v2573 = vunpack.c.l.b16 %v2541
      %v2574 = vunpack.c.l.b16 %v2542
      %v2575 = vunpack.c.l.b16 %v2543
      %v2576 = vunpack.c.l.b16 %v2544
      %v2577 = vunpack.c.l.b16 %v2545
      %v2578 = vunpack.c.l.b16 %v2546
      %v2579 = vunpack.c.l.b16 %v2547
      %v2580 = vunpack.c.l.b16 %v2548
      %v2581 = vunpack.c.l.b16 %v2549
      %v2582 = vunpack.c.l.b16 %v2550
      %v2583 = vunpack.c.l.b16 %v2551
      %v2584 = vunpack.c.l.b16 %v2552
      %v2585 = vunpack.c.l.b16 %v2553
      %v2586 = vunpack.c.l.b16 %v2554
      %v2587 = vunpack.c.l.b16 %v2555
      %v2588 = vunpack.c.l.b16 %v2556
      %v2589 = vpack.c.b16 %v2574, %v2573
      %v2590 = vpack.c.b16 %v2576, %v2575
      %v2591 = vpack.c.b16 %v2578, %v2577
      %v2592 = vpack.c.b16 %v2580, %v2579
      %v2593 = vpack.c.b16 %v2582, %v2581
      %v2594 = vpack.c.b16 %v2584, %v2583
      %v2595 = vpack.c.b16 %v2586, %v2585
      %v2596 = vpack.c.b16 %v2588, %v2587
      %2605 = vmatpush.bf16.msra.mxu0 %v2596
      %2606 = vmatpush.bf16.msra.mxu0 %v2595
      %2607 = vmatpush.bf16.msra.mxu0 %v2594
      %2608 = vmatpush.bf16.msra.mxu0 %v2593
      %2609 = vmatpush.bf16.msra.mxu0 %v2592
      %2610 = vmatpush.bf16.msra.mxu0 %v2591
      %2611 = vmatpush.bf16.msra.mxu0 %v2590
      %2612 = vmatpush.bf16.msra.mxu0 %v2589
      %2613 = vmatmul.bf16.gmra.mxu0 %v2536
      %v2614 = vpop.f32.mrf.mxu0
      %v2615 = vadd.f32 0.0, %v2614
      %v2616 = vpop.f32.mrf.mxu0
      %v2617 = vadd.f32 0.0, %v2616
      %2618 = vmatmul.bf16.gmra.mxu0 %v2537
      %v2619 = vpop.f32.mrf.mxu0
      %v2620 = vadd.f32 0.0, %v2619
      %v2621 = vpop.f32.mrf.mxu0
      %v2622 = vadd.f32 0.0, %v2621
      %2623 = vmatmul.bf16.gmra.mxu0 %v2538
      %v2624 = vpop.f32.mrf.mxu0
      %v2625 = vadd.f32 0.0, %v2624
      %v2626 = vpop.f32.mrf.mxu0
      %v2627 = vadd.f32 0.0, %v2626
      %2628 = vmatmul.bf16.gmra.mxu0 %v2539
      %v2629 = vpop.f32.mrf.mxu0
      %v2630 = vadd.f32 0.0, %v2629
      %v2631 = vpop.f32.mrf.mxu0
      %v2632 = vadd.f32 0.0, %v2631
      %2633 = vdwg.mxu0
      %v2634 = vadd.f32 %v2519, %v2615
      %v2635 = vadd.f32 %v2520, %v2617
      %v2636 = vadd.f32 %v2521, %v2620
      %v2637 = vadd.f32 %v2522, %v2622
      %v2638 = vadd.f32 %v2523, %v2625
      %v2639 = vadd.f32 %v2524, %v2627
      %v2640 = vadd.f32 %v2525, %v2630
      %v2641 = vadd.f32 %v2526, %v2632
      %v2642 = vld [vmem:[%s2527 + $0x1] sm:$0xff]
      %v2643 = vld [vmem:[%s2527 + $0x11] sm:$0xff]
      %v2644 = vld [vmem:[%s2527 + $0x21] sm:$0xff]
      %v2645 = vld [vmem:[%s2527 + $0x31] sm:$0xff]
      %v2646 = vld [vmem:[%s2527 + $0x41] sm:$0xff]
      %v2647 = vld [vmem:[%s2527 + $0x51] sm:$0xff]
      %v2648 = vld [vmem:[%s2527 + $0x61] sm:$0xff]
      %v2649 = vld [vmem:[%s2527 + $0x71] sm:$0xff]
      %v2650 = vpack.c.bf16 %v2643, %v2642
      %v2651 = vpack.c.bf16 %v2645, %v2644
      %v2652 = vpack.c.bf16 %v2647, %v2646
      %v2653 = vpack.c.bf16 %v2649, %v2648
      %s2654 = scalar_lea.vmem %s6, 448
      %v2655 = vld [vmem:[%s2654] sm:$0xf]
      %v2656 = vld [vmem:[%s2654 + $0x4] sm:$0xf]
      %v2657 = vld [vmem:[%s2654 + $0x8] sm:$0xf]
      %v2658 = vld [vmem:[%s2654 + $0xc] sm:$0xf]
      %v2659 = vld [vmem:[%s2654 + $0x10] sm:$0xf]
      %v2660 = vld [vmem:[%s2654 + $0x14] sm:$0xf]
      %v2661 = vld [vmem:[%s2654 + $0x18] sm:$0xf]
      %v2662 = vld [vmem:[%s2654 + $0x1c] sm:$0xf]
      %v2663 = vld [vmem:[%s2654 + $0x20] sm:$0xf]
      %v2664 = vld [vmem:[%s2654 + $0x24] sm:$0xf]
      %v2665 = vld [vmem:[%s2654 + $0x28] sm:$0xf]
      %v2666 = vld [vmem:[%s2654 + $0x2c] sm:$0xf]
      %v2667 = vld [vmem:[%s2654 + $0x30] sm:$0xf]
      %v2668 = vld [vmem:[%s2654 + $0x34] sm:$0xf]
      %v2669 = vld [vmem:[%s2654 + $0x38] sm:$0xf]
      %v2670 = vld [vmem:[%s2654 + $0x3c] sm:$0xf]
      %v2687 = vunpack.c.l.b16 %v2655
      %v2688 = vunpack.c.l.b16 %v2656
      %v2689 = vunpack.c.l.b16 %v2657
      %v2690 = vunpack.c.l.b16 %v2658
      %v2691 = vunpack.c.l.b16 %v2659
      %v2692 = vunpack.c.l.b16 %v2660
      %v2693 = vunpack.c.l.b16 %v2661
      %v2694 = vunpack.c.l.b16 %v2662
      %v2695 = vunpack.c.l.b16 %v2663
      %v2696 = vunpack.c.l.b16 %v2664
      %v2697 = vunpack.c.l.b16 %v2665
      %v2698 = vunpack.c.l.b16 %v2666
      %v2699 = vunpack.c.l.b16 %v2667
      %v2700 = vunpack.c.l.b16 %v2668
      %v2701 = vunpack.c.l.b16 %v2669
      %v2702 = vunpack.c.l.b16 %v2670
      %v2703 = vpack.c.b16 %v2688, %v2687
      %v2704 = vpack.c.b16 %v2690, %v2689
      %v2705 = vpack.c.b16 %v2692, %v2691
      %v2706 = vpack.c.b16 %v2694, %v2693
      %v2707 = vpack.c.b16 %v2696, %v2695
      %v2708 = vpack.c.b16 %v2698, %v2697
      %v2709 = vpack.c.b16 %v2700, %v2699
      %v2710 = vpack.c.b16 %v2702, %v2701
      %2719 = vmatpush.bf16.msra.mxu0 %v2710
      %2720 = vmatpush.bf16.msra.mxu0 %v2709
      %2721 = vmatpush.bf16.msra.mxu0 %v2708
      %2722 = vmatpush.bf16.msra.mxu0 %v2707
      %2723 = vmatpush.bf16.msra.mxu0 %v2706
      %2724 = vmatpush.bf16.msra.mxu0 %v2705
      %2725 = vmatpush.bf16.msra.mxu0 %v2704
      %2726 = vmatpush.bf16.msra.mxu0 %v2703
      %2727 = vmatmul.bf16.gmra.mxu0 %v2650
      %v2728 = vpop.f32.mrf.mxu0
      %v2729 = vadd.f32 0.0, %v2728
      %v2730 = vpop.f32.mrf.mxu0
      %v2731 = vadd.f32 0.0, %v2730
      %2732 = vmatmul.bf16.gmra.mxu0 %v2651
      %v2733 = vpop.f32.mrf.mxu0
      %v2734 = vadd.f32 0.0, %v2733
      %v2735 = vpop.f32.mrf.mxu0
      %v2736 = vadd.f32 0.0, %v2735
      %2737 = vmatmul.bf16.gmra.mxu0 %v2652
      %v2738 = vpop.f32.mrf.mxu0
      %v2739 = vadd.f32 0.0, %v2738
      %v2740 = vpop.f32.mrf.mxu0
      %v2741 = vadd.f32 0.0, %v2740
      %2742 = vmatmul.bf16.gmra.mxu0 %v2653
      %v2743 = vpop.f32.mrf.mxu0
      %v2744 = vadd.f32 0.0, %v2743
      %v2745 = vpop.f32.mrf.mxu0
      %v2746 = vadd.f32 0.0, %v2745
      %2747 = vdwg.mxu0
      %v2748 = vadd.f32 %v2634, %v2729
      %v2749 = vadd.f32 %v2635, %v2731
      %v2750 = vadd.f32 %v2636, %v2734
      %v2751 = vadd.f32 %v2637, %v2736
      %v2752 = vadd.f32 %v2638, %v2739
      %v2753 = vadd.f32 %v2639, %v2741
      %v2754 = vadd.f32 %v2640, %v2744
      %v2755 = vadd.f32 %v2641, %v2746
      %v2756 = vld [vmem:[%s2527 + $0x2] sm:$0xff]
      %v2757 = vld [vmem:[%s2527 + $0x12] sm:$0xff]
      %v2758 = vld [vmem:[%s2527 + $0x22] sm:$0xff]
      %v2759 = vld [vmem:[%s2527 + $0x32] sm:$0xff]
      %v2760 = vld [vmem:[%s2527 + $0x42] sm:$0xff]
      %v2761 = vld [vmem:[%s2527 + $0x52] sm:$0xff]
      %v2762 = vld [vmem:[%s2527 + $0x62] sm:$0xff]
      %v2763 = vld [vmem:[%s2527 + $0x72] sm:$0xff]
      %v2764 = vpack.c.bf16 %v2757, %v2756
      %v2765 = vpack.c.bf16 %v2759, %v2758
      %v2766 = vpack.c.bf16 %v2761, %v2760
      %v2767 = vpack.c.bf16 %v2763, %v2762
      %s2768 = scalar_lea.vmem %s6, 512
      %v2769 = vld [vmem:[%s2768] sm:$0xf]
      %v2770 = vld [vmem:[%s2768 + $0x4] sm:$0xf]
      %v2771 = vld [vmem:[%s2768 + $0x8] sm:$0xf]
      %v2772 = vld [vmem:[%s2768 + $0xc] sm:$0xf]
      %v2773 = vld [vmem:[%s2768 + $0x10] sm:$0xf]
      %v2774 = vld [vmem:[%s2768 + $0x14] sm:$0xf]
      %v2775 = vld [vmem:[%s2768 + $0x18] sm:$0xf]
      %v2776 = vld [vmem:[%s2768 + $0x1c] sm:$0xf]
      %v2777 = vld [vmem:[%s2768 + $0x20] sm:$0xf]
      %v2778 = vld [vmem:[%s2768 + $0x24] sm:$0xf]
      %v2779 = vld [vmem:[%s2768 + $0x28] sm:$0xf]
      %v2780 = vld [vmem:[%s2768 + $0x2c] sm:$0xf]
      %v2781 = vld [vmem:[%s2768 + $0x30] sm:$0xf]
      %v2782 = vld [vmem:[%s2768 + $0x34] sm:$0xf]
      %v2783 = vld [vmem:[%s2768 + $0x38] sm:$0xf]
      %v2784 = vld [vmem:[%s2768 + $0x3c] sm:$0xf]
      %v2801 = vunpack.c.l.b16 %v2769
      %v2802 = vunpack.c.l.b16 %v2770
      %v2803 = vunpack.c.l.b16 %v2771
      %v2804 = vunpack.c.l.b16 %v2772
      %v2805 = vunpack.c.l.b16 %v2773
      %v2806 = vunpack.c.l.b16 %v2774
      %v2807 = vunpack.c.l.b16 %v2775
      %v2808 = vunpack.c.l.b16 %v2776
      %v2809 = vunpack.c.l.b16 %v2777
      %v2810 = vunpack.c.l.b16 %v2778
      %v2811 = vunpack.c.l.b16 %v2779
      %v2812 = vunpack.c.l.b16 %v2780
      %v2813 = vunpack.c.l.b16 %v2781
      %v2814 = vunpack.c.l.b16 %v2782
      %v2815 = vunpack.c.l.b16 %v2783
      %v2816 = vunpack.c.l.b16 %v2784
      %v2817 = vpack.c.b16 %v2802, %v2801
      %v2818 = vpack.c.b16 %v2804, %v2803
      %v2819 = vpack.c.b16 %v2806, %v2805
      %v2820 = vpack.c.b16 %v2808, %v2807
      %v2821 = vpack.c.b16 %v2810, %v2809
      %v2822 = vpack.c.b16 %v2812, %v2811
      %v2823 = vpack.c.b16 %v2814, %v2813
      %v2824 = vpack.c.b16 %v2816, %v2815
      %2833 = vmatpush.bf16.msra.mxu0 %v2824
      %2834 = vmatpush.bf16.msra.mxu0 %v2823
      %2835 = vmatpush.bf16.msra.mxu0 %v2822
      %2836 = vmatpush.bf16.msra.mxu0 %v2821
      %2837 = vmatpush.bf16.msra.mxu0 %v2820
      %2838 = vmatpush.bf16.msra.mxu0 %v2819
      %2839 = vmatpush.bf16.msra.mxu0 %v2818
      %2840 = vmatpush.bf16.msra.mxu0 %v2817
      %2841 = vmatmul.bf16.gmra.mxu0 %v2764
      %v2842 = vpop.f32.mrf.mxu0
      %v2843 = vadd.f32 0.0, %v2842
      %v2844 = vpop.f32.mrf.mxu0
      %v2845 = vadd.f32 0.0, %v2844
      %2846 = vmatmul.bf16.gmra.mxu0 %v2765
      %v2847 = vpop.f32.mrf.mxu0
      %v2848 = vadd.f32 0.0, %v2847
      %v2849 = vpop.f32.mrf.mxu0
      %v2850 = vadd.f32 0.0, %v2849
      %2851 = vmatmul.bf16.gmra.mxu0 %v2766
      %v2852 = vpop.f32.mrf.mxu0
      %v2853 = vadd.f32 0.0, %v2852
      %v2854 = vpop.f32.mrf.mxu0
      %v2855 = vadd.f32 0.0, %v2854
      %2856 = vmatmul.bf16.gmra.mxu0 %v2767
      %v2857 = vpop.f32.mrf.mxu0
      %v2858 = vadd.f32 0.0, %v2857
      %v2859 = vpop.f32.mrf.mxu0
      %v2860 = vadd.f32 0.0, %v2859
      %2861 = vdwg.mxu0
      %v2862 = vadd.f32 %v2748, %v2843
      %v2863 = vadd.f32 %v2749, %v2845
      %v2864 = vadd.f32 %v2750, %v2848
      %v2865 = vadd.f32 %v2751, %v2850
      %v2866 = vadd.f32 %v2752, %v2853
      %v2867 = vadd.f32 %v2753, %v2855
      %v2868 = vadd.f32 %v2754, %v2858
      %v2869 = vadd.f32 %v2755, %v2860
      %v2870 = vld [vmem:[%s769] sm:$0xff]
      %v2871 = vld [vmem:[%s769 + $0x10] sm:$0xff]
      %v2872 = vld [vmem:[%s769 + $0x20] sm:$0xff]
      %v2873 = vld [vmem:[%s769 + $0x30] sm:$0xff]
      %v2874 = vld [vmem:[%s769 + $0x40] sm:$0xff]
      %v2875 = vld [vmem:[%s769 + $0x50] sm:$0xff]
      %v2876 = vld [vmem:[%s769 + $0x60] sm:$0xff]
      %v2877 = vld [vmem:[%s769 + $0x70] sm:$0xff]
      %v2878 = vpack.c.bf16 %v2871, %v2870
      %v2879 = vpack.c.bf16 %v2873, %v2872
      %v2880 = vpack.c.bf16 %v2875, %v2874
      %v2881 = vpack.c.bf16 %v2877, %v2876
      %v2882 = vld [vmem:[%s7] sm:$0xf]
      %v2883 = vld [vmem:[%s7 + $0x4] sm:$0xf]
      %v2884 = vld [vmem:[%s7 + $0x8] sm:$0xf]
      %v2885 = vld [vmem:[%s7 + $0xc] sm:$0xf]
      %v2886 = vld [vmem:[%s7 + $0x10] sm:$0xf]
      %v2887 = vld [vmem:[%s7 + $0x14] sm:$0xf]
      %v2888 = vld [vmem:[%s7 + $0x18] sm:$0xf]
      %v2889 = vld [vmem:[%s7 + $0x1c] sm:$0xf]
      %v2890 = vld [vmem:[%s7 + $0x20] sm:$0xf]
      %v2891 = vld [vmem:[%s7 + $0x24] sm:$0xf]
      %v2892 = vld [vmem:[%s7 + $0x28] sm:$0xf]
      %v2893 = vld [vmem:[%s7 + $0x2c] sm:$0xf]
      %v2894 = vld [vmem:[%s7 + $0x30] sm:$0xf]
      %v2895 = vld [vmem:[%s7 + $0x34] sm:$0xf]
      %v2896 = vld [vmem:[%s7 + $0x38] sm:$0xf]
      %v2897 = vld [vmem:[%s7 + $0x3c] sm:$0xf]
      %v2914 = vunpack.c.l.b16 %v2882
      %v2915 = vunpack.c.l.b16 %v2883
      %v2916 = vunpack.c.l.b16 %v2884
      %v2917 = vunpack.c.l.b16 %v2885
      %v2918 = vunpack.c.l.b16 %v2886
      %v2919 = vunpack.c.l.b16 %v2887
      %v2920 = vunpack.c.l.b16 %v2888
      %v2921 = vunpack.c.l.b16 %v2889
      %v2922 = vunpack.c.l.b16 %v2890
      %v2923 = vunpack.c.l.b16 %v2891
      %v2924 = vunpack.c.l.b16 %v2892
      %v2925 = vunpack.c.l.b16 %v2893
      %v2926 = vunpack.c.l.b16 %v2894
      %v2927 = vunpack.c.l.b16 %v2895
      %v2928 = vunpack.c.l.b16 %v2896
      %v2929 = vunpack.c.l.b16 %v2897
      %v2930 = vpack.c.b16 %v2915, %v2914
      %v2931 = vpack.c.b16 %v2917, %v2916
      %v2932 = vpack.c.b16 %v2919, %v2918
      %v2933 = vpack.c.b16 %v2921, %v2920
      %v2934 = vpack.c.b16 %v2923, %v2922
      %v2935 = vpack.c.b16 %v2925, %v2924
      %v2936 = vpack.c.b16 %v2927, %v2926
      %v2937 = vpack.c.b16 %v2929, %v2928
      %2946 = vmatpush.bf16.msra.mxu0 %v2937
      %2947 = vmatpush.bf16.msra.mxu0 %v2936
      %2948 = vmatpush.bf16.msra.mxu0 %v2935
      %2949 = vmatpush.bf16.msra.mxu0 %v2934
      %2950 = vmatpush.bf16.msra.mxu0 %v2933
      %2951 = vmatpush.bf16.msra.mxu0 %v2932
      %2952 = vmatpush.bf16.msra.mxu0 %v2931
      %2953 = vmatpush.bf16.msra.mxu0 %v2930
      %2954 = vmatmul.bf16.gmra.mxu0 %v2878
      %v2955 = vpop.f32.mrf.mxu0
      %v2956 = vadd.f32 0.0, %v2955
      %v2957 = vpop.f32.mrf.mxu0
      %v2958 = vadd.f32 0.0, %v2957
      %2959 = vmatmul.bf16.gmra.mxu0 %v2879
      %v2960 = vpop.f32.mrf.mxu0
      %v2961 = vadd.f32 0.0, %v2960
      %v2962 = vpop.f32.mrf.mxu0
      %v2963 = vadd.f32 0.0, %v2962
      %2964 = vmatmul.bf16.gmra.mxu0 %v2880
      %v2965 = vpop.f32.mrf.mxu0
      %v2966 = vadd.f32 0.0, %v2965
      %v2967 = vpop.f32.mrf.mxu0
      %v2968 = vadd.f32 0.0, %v2967
      %2969 = vmatmul.bf16.gmra.mxu0 %v2881
      %v2970 = vpop.f32.mrf.mxu0
      %v2971 = vadd.f32 0.0, %v2970
      %v2972 = vpop.f32.mrf.mxu0
      %v2973 = vadd.f32 0.0, %v2972
      %2974 = vdwg.mxu0
      %v2975 = vadd.f32 %v2862, %v2956
      %v2976 = vadd.f32 %v2863, %v2958
      %v2977 = vadd.f32 %v2864, %v2961
      %v2978 = vadd.f32 %v2865, %v2963
      %v2979 = vadd.f32 %v2866, %v2966
      %v2980 = vadd.f32 %v2867, %v2968
      %v2981 = vadd.f32 %v2868, %v2971
      %v2982 = vadd.f32 %v2869, %v2973
      %2983 = vst [vmem:[%s310] sm:$0xff] 0.0
      %2984 = vst [vmem:[%s310 + $0x8] sm:$0x3] 0.0
      %2985 = vst [vmem:[%s310 + $0x10] sm:$0xff] 0.0
      %2986 = vst [vmem:[%s310 + $0x18] sm:$0x3] 0.0
      %2987 = vst [vmem:[%s310 + $0x20] sm:$0xff] 0.0
      %2988 = vst [vmem:[%s310 + $0x28] sm:$0x3] 0.0
      %2989 = vst [vmem:[%s310 + $0x30] sm:$0xff] 0.0
      %2990 = vst [vmem:[%s310 + $0x38] sm:$0x3] 0.0
      %2991 = vst [vmem:[%s310 + $0x40] sm:$0xff] 0.0
      %2992 = vst [vmem:[%s310 + $0x48] sm:$0x3] 0.0
      %2993 = vst [vmem:[%s310 + $0x50] sm:$0xff] 0.0
      %2994 = vst [vmem:[%s310 + $0x58] sm:$0x3] 0.0
      %2995 = vst [vmem:[%s310 + $0x60] sm:$0xff] 0.0
      %2996 = vst [vmem:[%s310 + $0x68] sm:$0x3] 0.0
      %2997 = vst [vmem:[%s310 + $0x70] sm:$0xff] 0.0
      %2998 = vst [vmem:[%s310 + $0x78] sm:$0x3] 0.0
      %2999 = vst [vmem:[%s310 + $0x80] sm:$0xff] 0.0
      %3000 = vst [vmem:[%s310 + $0x88] sm:$0x3] 0.0
      %3001 = vst [vmem:[%s310 + $0x90] sm:$0xff] 0.0
      %3002 = vst [vmem:[%s310 + $0x98] sm:$0x3] 0.0
      %s3003 = scalar_lea.vmem %s310, 16
      %3004 = vst [vmem:[%s3003 + $0x1] sm:$0xff] %v2975
      %3005 = vst [vmem:[%s3003 + $0x11] sm:$0xff] %v2976
      %3006 = vst [vmem:[%s3003 + $0x21] sm:$0xff] %v2977
      %3007 = vst [vmem:[%s3003 + $0x31] sm:$0xff] %v2978
      %3008 = vst [vmem:[%s3003 + $0x41] sm:$0xff] %v2979
      %3009 = vst [vmem:[%s3003 + $0x51] sm:$0xff] %v2980
      %3010 = vst [vmem:[%s3003 + $0x61] sm:$0xff] %v2981
      %3011 = vst [vmem:[%s3003 + $0x71] sm:$0xff] %v2982
      %p3012 = scmp.lt.s32.totalorder %s19, 1
      %s3013 = scalar_select %p3012, %s19, 1
      %s3014 = smul.addr %s3013, 20
      %s3015 = smul.addr %s3014, 8
      %s3016 = scalar_lea.vmem %s8, %s3015
      // Predicated region
      $region53: #{tpu_custom_call.1} parent=51 // pred_check
        %p3017 = pneg %p210
      $region54: #{tpu_custom_call.1} parent=51 // pred_check_branch
        %3019 = sbr.rel (%p3017) target = $region56
      $region55: #{tpu_custom_call.1} parent=51 // pred_region
        _
      $region56: #{tpu_custom_call.1} parent=51 // pred_fallthru
        _
    $region52: #{tpu_custom_call.1} parent=5 // pred_fallthru
      _
    %p3020 = scmp.le.s32.totalorder 2, %s14
    // Predicated region
    $region57: #{tpu_custom_call.1} parent=5 // pred_check
      %p3021 = pneg %p3020
    $region58: #{tpu_custom_call.1} parent=5 // pred_check_branch
      %3023 = sbr.rel (%p3021) target = $region60
    $region59: #{tpu_custom_call.1} parent=5 // pred_region
      %s3024 = ssub.s32 %s14, 2
      // Predicated region
      $region61: #{tpu_custom_call.1} parent=59 // pred_check
        %p3025 = pneg %p216
      $region62: #{tpu_custom_call.1} parent=59 // pred_check_branch
        %3027 = sbr.rel (%p3025) target = $region64
      $region63: #{tpu_custom_call.1} parent=59 // pred_region
        %p3028 = scmp.lt.s32.totalorder %s20, 1
        %s3029 = scalar_select %p3028, %s20, 1
        %s3030 = smul.addr %s3029, 20
        %s3031 = smul.addr %s3030, 8
        %s3032 = scalar_lea.vmem %s8, %s3031
      $region64: #{tpu_custom_call.1} parent=59 // pred_fallthru
        _
    $region60: #{tpu_custom_call.1} parent=5 // pred_fallthru
      _
  $region6: #{tpu_custom_call.1} parent=0 // loop_footer
    %s18 = sadd.s32 1, %s14
  $region7: #{tpu_custom_call.1} parent=0 // loop_footer_branch
    %13 = sbr.rel target = $region3
  $region8: #{tpu_custom_call.1} parent=0 // loop_exit
    _

</llo_original>
